<compile_context>
chip_gen: v5e
topology: v5e:2x2
jax: 0.10.0
libtpu: 0.0.40
codegen_flags: <defaults>
</compile_context>

<pallas_src>
import functools
import math

import jax
import jax.numpy as jnp
from jax import lax
from jax.experimental import pallas as pl
from jax.experimental.pallas import tpu as pltpu


def _round_up(x, m):
    return (x + m - 1) // m * m


def encoder_layer_kernel(
    xq_ref, xk_ref, kmask_ref, npm_ref,
    wq_ref, bq_ref, wkv_ref, bkv_ref, wo_ref, bo_ref,
    ln1_g_ref, ln1_b_ref, w1_ref, b1_ref, w2_ref, b2_ref,
    ln2_g_ref, ln2_b_ref,
    *outs_and_scratch,
    n_head, d_k, d_v, eps, mm_dtype, has_attn, exact_softmax):
    if has_attn:
        out_ref, attn_ref, kv_ref, ctx_ref = outs_and_scratch
    else:
        out_ref, kv_ref, ctx_ref = outs_and_scratch
        attn_ref = None

    f32 = jnp.float32

    # ---- K/V projection: computed once per batch element (q axis iterates
    # sequentially because it is marked "arbitrary"); reused by all q tiles. ----
    @pl.when(pl.program_id(1) == 0)
    def _():
        kv = jnp.dot(xk_ref[0], wkv_ref[...],
                     preferred_element_type=f32) + bkv_ref[...]     # (L, H*(dk+dv))
        kv_ref[...] = kv.astype(kv_ref.dtype)

    xq = xq_ref[0]                                                   # (TQ, D) bf16

    # ---- fused Q projection (bf16 operands, f32 accumulation) ----------------
    q = jnp.dot(xq, wq_ref[...], preferred_element_type=f32) + bq_ref[...]
    # fold softmax temperature into q once (instead of scaling (TQ,L) per head)
    q = q * jnp.float32(1.0 / math.sqrt(d_k))
    q_mm = q.astype(mm_dtype)

    hk = n_head * d_k
    # additive key-padding bias, computed once (not per head); -1e9 avoids NaN
    bias = jnp.where(kmask_ref[0] > 0, jnp.float32(-1e9), jnp.float32(0.0))  # (1, L)

    # ---- per-head attention; ctx written into a VMEM scratch ----------------
    for h in range(n_head):
        qh = q_mm[:, h * d_k:(h + 1) * d_k]
        kh = kv_ref[:, h * d_k:(h + 1) * d_k]                        # (L, dk) bf16
        vh = kv_ref[:, hk + h * d_v: hk + (h + 1) * d_v]             # (L, dv) bf16
        logits = lax.dot_general(qh, kh, (((1,), (1,)), ((), ())),
                                 preferred_element_type=f32)          # (TQ, L)
        logits = logits + bias
        m = jnp.max(logits, axis=-1, keepdims=True)
        e = jnp.exp(logits - m)
        s = jnp.sum(e, axis=-1, keepdims=True)
        if exact_softmax:
            p = e / s
        else:
            p = e * pl.reciprocal(s, approx=True)
        if attn_ref is not None:
            attn_ref[h, 0] = p.astype(attn_ref.dtype)                # head-major
        ctx_ref[:, h * d_v:(h + 1) * d_v] = jnp.dot(
            p.astype(mm_dtype), vh, preferred_element_type=f32)      # (TQ, dv)

    # ---- fused output projection over all heads ------------------------------
    attn_out = jnp.dot(ctx_ref[...].astype(mm_dtype), wo_ref[...],
                       preferred_element_type=f32) + bo_ref[...]     # (TQ, D)

    # ---- residual + LayerNorm 1 + non-pad mask (f32) -------------------------
    y = attn_out + xq.astype(f32)
    mu = jnp.mean(y, axis=-1, keepdims=True)
    var = jnp.mean((y - mu) ** 2, axis=-1, keepdims=True)
    y = (y - mu) * lax.rsqrt(var + eps) * ln1_g_ref[...] + ln1_b_ref[...]
    npm = npm_ref[0]                                                 # (TQ, 1)
    y = y * npm

    # ---- position-wise FFN (Conv1d k=1 == Linear) + residual + LN2 -----------
    h1 = jnp.dot(y.astype(mm_dtype), w1_ref[...],
                 preferred_element_type=f32) + b1_ref[...]
    h1 = jnp.maximum(h1, 0.0)
    h2 = jnp.dot(h1.astype(mm_dtype), w2_ref[...],
                 preferred_element_type=f32) + b2_ref[...]
    z = h2 + y
    mu2 = jnp.mean(z, axis=-1, keepdims=True)
    var2 = jnp.mean((z - mu2) ** 2, axis=-1, keepdims=True)
    z = (z - mu2) * lax.rsqrt(var2 + eps) * ln2_g_ref[...] + ln2_b_ref[...]
    z = z * npm
    out_ref[0] = z.astype(out_ref.dtype)


def encoder_layer(x, key_pad_mask, non_pad_mask, params, *, n_head, d_k, d_v,
                  q_tile=None, return_attn=False, mm_dtype=jnp.bfloat16,
                  out_dtype=jnp.float32, attn_dtype=jnp.bfloat16):
    """x: (B, L, D); key_pad_mask: (B, L) with 1.0 => masked key;
    non_pad_mask: (B, L, 1). Returns (enc_output, enc_slf_attn or None)."""
    B, L, D = x.shape
    f32 = jnp.float32
    d_inner = params["w1"].shape[1]

    # --- fuse / cast weights once on the host side (bf16 halves weight DMA) ---
    wq = params["wq"].astype(mm_dtype)                                 # (D, H*dk)
    bq = params["bq"].reshape(1, -1).astype(f32)
    wkv = jnp.concatenate([params["wk"], params["wv"]], axis=1).astype(mm_dtype)
    bkv = jnp.concatenate([params["bk"], params["bv"]]).reshape(1, -1).astype(f32)
    wo = params["wo"].astype(mm_dtype)                                 # (H*dv, D)
    bo = params["bo"].reshape(1, -1).astype(f32)
    ln1_g = params["ln1_g"].reshape(1, -1).astype(f32)
    ln1_b = params["ln1_b"].reshape(1, -1).astype(f32)
    w1 = params["w1"].astype(mm_dtype)
    b1 = params["b1"].reshape(1, -1).astype(f32)
    w2 = params["w2"].astype(mm_dtype)
    b2 = params["b2"].reshape(1, -1).astype(f32)
    ln2_g = params["ln2_g"].reshape(1, -1).astype(f32)
    ln2_b = params["ln2_b"].reshape(1, -1).astype(f32)
    weight_args = [wq, bq, wkv, bkv, wo, bo, ln1_g, ln1_b,
                   w1, b1, w2, b2, ln2_g, ln2_b]
    w_bytes = sum(int(a.size) * a.dtype.itemsize for a in weight_args)

    # --- generation-aware tiling / VMEM budget ---------------------------------
    kind = jax.devices()[0].device_kind.lower()
    if "v7" in kind:
        vmem_cap = 52 * 1024 * 1024          # 64 MiB physical per TC
    elif "v5" in kind or "v6" in kind:
        vmem_cap = 100 * 1024 * 1024         # 128 MiB physical
    else:
        vmem_cap = 64 * 1024 * 1024

    mm_b = jnp.dtype(mm_dtype).itemsize
    out_b = jnp.dtype(out_dtype).itemsize
    attn_b = jnp.dtype(attn_dtype).itemsize

    def est_bytes(tq, lpad):
        b = 2 * tq * D * mm_b                      # xq tile (double-buffered)
        b += 2 * lpad * D * mm_b                   # xk full sequence
        b += 2 * (lpad + tq) * 4                   # masks
        b += 2 * w_bytes                           # weights (worst case 2 buffers)
        b += 2 * tq * D * out_b                    # output block
        if return_attn:
            b += 2 * n_head * tq * lpad * attn_b   # attention-map block
        b += lpad * n_head * (d_k + d_v) * mm_b    # K|V scratch
        b += tq * n_head * d_v * 4                 # ctx scratch
        b += 6 * tq * max(lpad, d_inner, D) * 4    # f32 intermediates headroom
        return b

    Lr = _round_up(L, 8)
    if q_tile is None:
        base = 256 if ("v6" in kind and Lr >= 256) else 128   # v6e: 256-row MXU
        q_tile = base if Lr >= base else Lr
        while q_tile > 8 and est_bytes(q_tile, _round_up(L, q_tile)) > vmem_cap:
            q_tile = max(8, _round_up(q_tile // 2, 8))
    else:
        q_tile = min(_round_up(q_tile, 8), Lr)
    L_pad = _round_up(L, q_tile)
    nq = L_pad // q_tile
    vmem_limit = int(min(vmem_cap,
                         max(32 * 1024 * 1024, 2 * est_bytes(q_tile, L_pad))))

    # --- pad L to a multiple of the tile (masks extended) instead of one giant
    #     block; padded rows are zeroed by non_pad_mask and sliced off below. ---
    pad = L_pad - L
    if pad:
        x = jnp.pad(x, ((0, 0), (0, pad), (0, 0)))
        key_pad_mask = jnp.pad(key_pad_mask, ((0, 0), (0, pad)), constant_values=1.0)
        non_pad_mask = jnp.pad(non_pad_mask, ((0, 0), (0, pad), (0, 0)),
                               constant_values=0.0)

    x_mm = x.astype(mm_dtype)                      # bf16 activations (halve DMA)
    kmask = key_pad_mask.reshape(B, 1, L_pad).astype(f32)
    npm = non_pad_mask.astype(f32)

    kernel = functools.partial(
        encoder_layer_kernel, n_head=n_head, d_k=d_k, d_v=d_v, eps=1e-5,
        mm_dtype=mm_dtype, has_attn=return_attn, exact_softmax=return_attn)

    out_shape = [jax.ShapeDtypeStruct((B, L_pad, D), out_dtype)]
    out_specs = [pl.BlockSpec((1, q_tile, D), lambda b, q: (b, q, 0))]
    if return_attn:
        # head-major layout written directly by the kernel (no post-transpose)
        out_shape.append(jax.ShapeDtypeStruct((n_head, B, L_pad, L_pad), attn_dtype))
        out_specs.append(pl.BlockSpec((n_head, 1, q_tile, L_pad),
                                      lambda b, q: (0, b, q, 0)))

    scratch_shapes = [
        pltpu.VMEM((L_pad, n_head * (d_k + d_v)), mm_dtype),   # K|V, once per batch
        pltpu.VMEM((q_tile, n_head * d_v), jnp.float32),       # per-head context
    ]

    def run(single_buffer_weights):
        def wspec(arr):
            nd = arr.ndim
            idx = lambda b, q, _nd=nd: (0,) * _nd
            if single_buffer_weights:
                # grid-invariant weights: one resident VMEM buffer instead of two
                return pl.BlockSpec(arr.shape, idx, pipeline_mode=pl.Buffered(1))
            return pl.BlockSpec(arr.shape, idx)

        in_specs = [
            pl.BlockSpec((1, q_tile, D), lambda b, q: (b, q, 0)),   # x: query tile
            pl.BlockSpec((1, L_pad, D), lambda b, q: (b, 0, 0)),    # x: full seq (K/V)
            pl.BlockSpec((1, 1, L_pad), lambda b, q: (b, 0, 0)),    # key-pad mask
            pl.BlockSpec((1, q_tile, 1), lambda b, q: (b, q, 0)),   # non-pad mask
        ] + [wspec(w) for w in weight_args]

        return pl.pallas_call(
            kernel,
            grid=(B, nq),
            in_specs=in_specs,
            out_specs=tuple(out_specs),
            out_shape=tuple(out_shape),
            scratch_shapes=scratch_shapes,
            compiler_params=pltpu.CompilerParams(
                # q axis must be sequential ("arbitrary"): the K/V scratch is
                # filled at q == 0 and reused by the remaining query tiles.
                dimension_semantics=("parallel", "arbitrary"),
                vmem_limit_bytes=vmem_limit),
        )(x_mm, x_mm, kmask, npm, *weight_args)

    try:
        results = run(single_buffer_weights=True)
    except Exception:   # pl.Buffered(1) unsupported -> default double buffering
        results = run(single_buffer_weights=False)

    if not isinstance(results, (tuple, list)):
        results = (results,)
    enc_output = results[0][:, :L, :]
    if return_attn:
        # kernel already produced head-major (H, B, L_pad, L_pad); just crop+merge
        enc_slf_attn = results[1][:, :, :L, :L].reshape(n_head * B, L, L)
        return enc_output, enc_slf_attn
    return enc_output, None


def reference(x, key_pad_mask, non_pad_mask, params, *, n_head, d_k, d_v, eps=1e-5):
    """Pure-JAX f32 reference mirroring the PyTorch forward (eval mode)."""
    B, L, D = x.shape

    def ln(v, g, b):
        mu = jnp.mean(v, -1, keepdims=True)
        var = jnp.mean((v - mu) ** 2, -1, keepdims=True)
        return (v - mu) / jnp.sqrt(var + eps) * g + b

    q = (x @ params["wq"] + params["bq"]).reshape(B, L, n_head, d_k)
    k = (x @ params["wk"] + params["bk"]).reshape(B, L, n_head, d_k)
    v = (x @ params["wv"] + params["bv"]).reshape(B, L, n_head, d_v)
    logits = jnp.einsum("bqhd,bkhd->bhqk", q, k) / math.sqrt(d_k)
    bias = jnp.where(key_pad_mask[:, None, None, :] > 0, -1e9, 0.0)
    p = jax.nn.softmax(logits + bias, axis=-1)                        # (B, H, L, L)
    ctx = jnp.einsum("bhqk,bkhd->bqhd", p, v).reshape(B, L, n_head * d_v)
    attn_out = ctx @ params["wo"] + params["bo"]
    y = ln(attn_out + x, params["ln1_g"], params["ln1_b"]) * non_pad_mask
    h1 = jnp.maximum(y @ params["w1"] + params["b1"], 0.0)
    z = ln(h1 @ params["w2"] + params["b2"] + y,
           params["ln2_g"], params["ln2_b"]) * non_pad_mask
    attn = jnp.transpose(p, (1, 0, 2, 3)).reshape(n_head * B, L, L)
    return z, attn


def make_params(key, d_model, d_inner, n_head, d_k, d_v):
    ks = jax.random.split(key, 8)
    s = 0.1
    return {
        "wq": jax.random.normal(ks[0], (d_model, n_head * d_k), jnp.float32) * s,
        "bq": jax.random.normal(ks[1], (n_head * d_k,), jnp.float32) * s,
        "wk": jax.random.normal(ks[2], (d_model, n_head * d_k), jnp.float32) * s,
        "bk": jax.random.normal(ks[3], (n_head * d_k,), jnp.float32) * s,
        "wv": jax.random.normal(ks[4], (d_model, n_head * d_v), jnp.float32) * s,
        "bv": jax.random.normal(ks[5], (n_head * d_v,), jnp.float32) * s,
        "wo": jax.random.normal(ks[6], (n_head * d_v, d_model), jnp.float32) * s,
        "bo": jnp.zeros((d_model,), jnp.float32),
        "ln1_g": jnp.ones((d_model,), jnp.float32),
        "ln1_b": jnp.zeros((d_model,), jnp.float32),
        "w1": jax.random.normal(ks[7], (d_model, d_inner), jnp.float32) * s,
        "b1": jnp.zeros((d_inner,), jnp.float32),
        "w2": jax.random.normal(jax.random.fold_in(key, 99),
                                (d_inner, d_model), jnp.float32) * s,
        "b2": jnp.zeros((d_model,), jnp.float32),
        "ln2_g": jnp.ones((d_model,), jnp.float32),
        "ln2_b": jnp.zeros((d_model,), jnp.float32),
    }


if __name__ == "__main__":
    B, L = 2, 8
    d_model, d_inner, n_head, d_k, d_v = 32, 64, 4, 8, 8

    key = jax.random.PRNGKey(0)
    kx, kp = jax.random.split(key)
    x = jax.random.normal(kx, (B, L, d_model), jnp.float32)
    params = make_params(kp, d_model, d_inner, n_head, d_k, d_v)

    # sequence lengths [8, 6]: key-padding mask (1.0 = masked) + non-pad mask
    lens = jnp.array([L, L - 2])
    pos = jnp.arange(L)
    key_pad_mask = (pos[None, :] >= lens[:, None]).astype(jnp.float32)      # (B, L)
    non_pad_mask = (pos[None, :] < lens[:, None]).astype(jnp.float32)[:, :, None]

    # default perf path: no attention-map writeback
    enc_fast, _ = encoder_layer(x, key_pad_mask, non_pad_mask, params,
                                n_head=n_head, d_k=d_k, d_v=d_v)
    # validation path: attention map requested (bf16, head-major, exact softmax)
    enc_out, enc_attn = encoder_layer(x, key_pad_mask, non_pad_mask, params,
                                      n_head=n_head, d_k=d_k, d_v=d_v,
                                      return_attn=True)
    jax.block_until_ready((enc_fast, enc_out, enc_attn))

    ref_out, ref_attn = reference(x, key_pad_mask, non_pad_mask, params,
                                  n_head=n_head, d_k=d_k, d_v=d_v)
    # bf16 activations + bf16 matmul operands (f32 accumulation) -> loose tolerance
    assert jnp.allclose(enc_out, ref_out, atol=4e-2, rtol=4e-2), "output mismatch"
    assert jnp.allclose(enc_fast, ref_out, atol=4e-2, rtol=4e-2), \
        "output mismatch (no-attn path)"
    assert jnp.allclose(enc_attn.astype(jnp.float32), ref_attn,
                        atol=2e-2, rtol=2e-2), "attn mismatch"

    print("KERNEL_OK")
</pallas_src>

<mosaic_0001>
module attributes {stable_mosaic.version = 11 : i64} {
  func.func @encoder_layer_kernel(%arg0: i32, %arg1: i32, %arg2: memref<1x8x32xbf16, #tpu.memory_space<vmem>>, %arg3: memref<1x8x32xbf16, #tpu.memory_space<vmem>>, %arg4: memref<1x1x8xf32, #tpu.memory_space<vmem>>, %arg5: memref<1x8x1xf32, #tpu.memory_space<vmem>>, %arg6: memref<32x32xbf16, #tpu.memory_space<vmem>>, %arg7: memref<1x32xf32, #tpu.memory_space<vmem>>, %arg8: memref<32x64xbf16, #tpu.memory_space<vmem>>, %arg9: memref<1x64xf32, #tpu.memory_space<vmem>>, %arg10: memref<32x32xbf16, #tpu.memory_space<vmem>>, %arg11: memref<1x32xf32, #tpu.memory_space<vmem>>, %arg12: memref<1x32xf32, #tpu.memory_space<vmem>>, %arg13: memref<1x32xf32, #tpu.memory_space<vmem>>, %arg14: memref<32x64xbf16, #tpu.memory_space<vmem>>, %arg15: memref<1x64xf32, #tpu.memory_space<vmem>>, %arg16: memref<64x32xbf16, #tpu.memory_space<vmem>>, %arg17: memref<1x32xf32, #tpu.memory_space<vmem>>, %arg18: memref<1x32xf32, #tpu.memory_space<vmem>>, %arg19: memref<1x32xf32, #tpu.memory_space<vmem>>, %arg20: memref<1x8x32xf32, #tpu.memory_space<vmem>>, %arg21: memref<8x64xbf16, #tpu.memory_space<vmem>>, %arg22: memref<8x32xf32, #tpu.memory_space<vmem>>) attributes {dimension_semantics = [#tpu.dimension_semantics<parallel>, #tpu.dimension_semantics<arbitrary>], iteration_bounds = array<i64: 2, 1>, scalar_prefetch = 0 : i64, scratch_operands = 2 : i64, tpu.core_type = #tpu.core_type<tc>, window_params = [{transform_indices = @transform_0, window_bounds = array<i64: 1, 8, 32>}, {transform_indices = @transform_1, window_bounds = array<i64: 1, 8, 32>}, {transform_indices = @transform_2, window_bounds = array<i64: 1, 1, 8>}, {transform_indices = @transform_3, window_bounds = array<i64: 1, 8, 1>}, {pipeline_mode = #tpu.pipeline_mode<synchronous>, transform_indices = @transform_4, window_bounds = array<i64: 32, 32>}, {pipeline_mode = #tpu.pipeline_mode<synchronous>, transform_indices = @transform_5, window_bounds = array<i64: 1, 32>}, {pipeline_mode = #tpu.pipeline_mode<synchronous>, transform_indices = @transform_6, window_bounds = array<i64: 32, 64>}, {pipeline_mode = #tpu.pipeline_mode<synchronous>, transform_indices = @transform_7, window_bounds = array<i64: 1, 64>}, {pipeline_mode = #tpu.pipeline_mode<synchronous>, transform_indices = @transform_8, window_bounds = array<i64: 32, 32>}, {pipeline_mode = #tpu.pipeline_mode<synchronous>, transform_indices = @transform_9, window_bounds = array<i64: 1, 32>}, {pipeline_mode = #tpu.pipeline_mode<synchronous>, transform_indices = @transform_10, window_bounds = array<i64: 1, 32>}, {pipeline_mode = #tpu.pipeline_mode<synchronous>, transform_indices = @transform_11, window_bounds = array<i64: 1, 32>}, {pipeline_mode = #tpu.pipeline_mode<synchronous>, transform_indices = @transform_12, window_bounds = array<i64: 32, 64>}, {pipeline_mode = #tpu.pipeline_mode<synchronous>, transform_indices = @transform_13, window_bounds = array<i64: 1, 64>}, {pipeline_mode = #tpu.pipeline_mode<synchronous>, transform_indices = @transform_14, window_bounds = array<i64: 64, 32>}, {pipeline_mode = #tpu.pipeline_mode<synchronous>, transform_indices = @transform_15, window_bounds = array<i64: 1, 32>}, {pipeline_mode = #tpu.pipeline_mode<synchronous>, transform_indices = @transform_16, window_bounds = array<i64: 1, 32>}, {pipeline_mode = #tpu.pipeline_mode<synchronous>, transform_indices = @transform_17, window_bounds = array<i64: 1, 32>}, {transform_indices = @transform_18, window_bounds = array<i64: 1, 8, 32>}]} {
    %c0_i32 = arith.constant 0 : i32
    %0 = arith.cmpi eq, %arg1, %c0_i32 : i32
    %1 = arith.extui %0 : i1 to i32
    %c0_i32_0 = arith.constant 0 : i32
    %2 = arith.cmpi ne, %1, %c0_i32_0 : i32
    scf.if %2 {
      %c0_89 = arith.constant 0 : index
      %c0_90 = arith.constant 0 : index
      %c0_91 = arith.constant 0 : index
      %177 = vector.load %arg3[%c0_89, %c0_90, %c0_91] : memref<1x8x32xbf16, #tpu.memory_space<vmem>>, vector<1x8x32xbf16>
      %178 = vector.shape_cast %177 : vector<1x8x32xbf16> to vector<8x32xbf16>
      %c0_92 = arith.constant 0 : index
      %c0_93 = arith.constant 0 : index
      %179 = vector.load %arg8[%c0_92, %c0_93] : memref<32x64xbf16, #tpu.memory_space<vmem>>, vector<32x64xbf16>
      %cst_94 = arith.constant dense<0.000000e+00> : vector<8x64xf32>
      %180 = tpu.matmul %178, %179, %cst_94 {dimension_numbers = #tpu.dot_dimension_numbers<[1], [0], [0], [1], [0, 0, 1, 1], [], []>} : vector<8x32xbf16>, vector<32x64xbf16>, vector<8x64xf32> -> vector<8x64xf32>
      %c0_95 = arith.constant 0 : index
      %c0_96 = arith.constant 0 : index
      %181 = vector.load %arg9[%c0_95, %c0_96] : memref<1x64xf32, #tpu.memory_space<vmem>>, vector<1x64xf32>
      %182 = vector.broadcast %181 : vector<1x64xf32> to vector<8x64xf32>
      %183 = arith.addf %180, %182 : vector<8x64xf32>
      %184 = arith.truncf %183 : vector<8x64xf32> to vector<8x64xbf16>
      %c0_97 = arith.constant 0 : index
      %c0_98 = arith.constant 0 : index
      %185 = vector.load %arg21[%c0_97, %c0_98] : memref<8x64xbf16, #tpu.memory_space<vmem>>, vector<8x64xbf16>
      tpu.vector_store %arg21[%c0_97, %c0_98], %184 {strides = array<i32>} : memref<8x64xbf16, #tpu.memory_space<vmem>>, vector<8x64xbf16>,
    } else {
    }
    %c0 = arith.constant 0 : index
    %c0_1 = arith.constant 0 : index
    %c0_2 = arith.constant 0 : index
    %3 = vector.load %arg2[%c0, %c0_1, %c0_2] : memref<1x8x32xbf16, #tpu.memory_space<vmem>>, vector<1x8x32xbf16>
    %4 = vector.shape_cast %3 : vector<1x8x32xbf16> to vector<8x32xbf16>
    %c0_3 = arith.constant 0 : index
    %c0_4 = arith.constant 0 : index
    %5 = vector.load %arg6[%c0_3, %c0_4] : memref<32x32xbf16, #tpu.memory_space<vmem>>, vector<32x32xbf16>
    %cst = arith.constant dense<0.000000e+00> : vector<8x32xf32>
    %6 = tpu.matmul %4, %5, %cst {dimension_numbers = #tpu.dot_dimension_numbers<[1], [0], [0], [1], [0, 0, 1, 1], [], []>} : vector<8x32xbf16>, vector<32x32xbf16>, vector<8x32xf32> -> vector<8x32xf32>
    %c0_5 = arith.constant 0 : index
    %c0_6 = arith.constant 0 : index
    %7 = vector.load %arg7[%c0_5, %c0_6] : memref<1x32xf32, #tpu.memory_space<vmem>>, vector<1x32xf32>
    %8 = vector.broadcast %7 : vector<1x32xf32> to vector<8x32xf32>
    %9 = arith.addf %6, %8 : vector<8x32xf32>
    %cst_7 = arith.constant 0.353553385 : f32
    %10 = vector.broadcast %cst_7 : f32 to vector<8x32xf32>
    %11 = arith.mulf %9, %10 : vector<8x32xf32>
    %12 = arith.truncf %11 : vector<8x32xf32> to vector<8x32xbf16>
    %c0_8 = arith.constant 0 : index
    %c0_9 = arith.constant 0 : index
    %c0_10 = arith.constant 0 : index
    %13 = vector.load %arg4[%c0_8, %c0_9, %c0_10] : memref<1x1x8xf32, #tpu.memory_space<vmem>>, vector<1x1x8xf32>
    %14 = vector.shape_cast %13 : vector<1x1x8xf32> to vector<1x8xf32>
    %cst_11 = arith.constant 0.000000e+00 : f32
    %15 = vector.broadcast %cst_11 : f32 to vector<1x8xf32>
    %16 = arith.cmpf ogt, %14, %15 : vector<1x8xf32>
    %cst_12 = arith.constant -1.000000e+09 : f32
    %cst_13 = arith.constant 0.000000e+00 : f32
    %17 = vector.broadcast %cst_12 : f32 to vector<1x8xf32>
    %18 = vector.broadcast %cst_13 : f32 to vector<1x8xf32>
    %19 = arith.select %16, %17, %18 : vector<1x8xi1>, vector<1x8xf32>
    %20 = vector.extract_strided_slice %12 {offsets = [0, 0], sizes = [8, 8], strides = [1, 1]} : vector<8x32xbf16> to vector<8x8xbf16>
    %c0_14 = arith.constant 0 : index
    %c0_15 = arith.constant 0 : index
    %21 = vector.load %arg21[%c0_14, %c0_15] : memref<8x64xbf16, #tpu.memory_space<vmem>>, vector<8x8xbf16>
    %c0_16 = arith.constant 0 : index
    %c32 = arith.constant 32 : index
    %22 = vector.load %arg21[%c0_16, %c32] : memref<8x64xbf16, #tpu.memory_space<vmem>>, vector<8x8xbf16>
    %cst_17 = arith.constant dense<0.000000e+00> : vector<8x8xf32>
    %23 = tpu.matmul %20, %21, %cst_17 {dimension_numbers = #tpu.dot_dimension_numbers<[1], [1], [0], [0], [0, 0, 1, 0], [], []>} : vector<8x8xbf16>, vector<8x8xbf16>, vector<8x8xf32> -> vector<8x8xf32>
    %24 = vector.broadcast %19 : vector<1x8xf32> to vector<8x8xf32>
    %25 = arith.addf %23, %24 : vector<8x8xf32>
    %cst_18 = arith.constant dense<0xFF800000> : vector<8xf32>
    %26 = vector.multi_reduction <maximumf>, %25, %cst_18 [1] : vector<8x8xf32> to vector<8xf32>
    %27 = vector.shape_cast %26 : vector<8xf32> to vector<8x1xf32>
    %28 = vector.broadcast %27 : vector<8x1xf32> to vector<8x8xf32>
    %29 = arith.subf %25, %28 : vector<8x8xf32>
    %30 = math.exp %29 : vector<8x8xf32>
    %cst_19 = arith.constant dense<0.000000e+00> : vector<8xf32>
    %31 = vector.multi_reduction <add>, %30, %cst_19 [1] : vector<8x8xf32> to vector<8xf32>
    %32 = vector.shape_cast %31 : vector<8xf32> to vector<8x1xf32>
    %33 = tpu.reciprocal %32 {approx = true} : vector<8x1xf32> -> vector<8x1xf32>
    %34 = vector.broadcast %33 : vector<8x1xf32> to vector<8x8xf32>
    %35 = arith.mulf %30, %34 : vector<8x8xf32>
    %36 = arith.truncf %35 : vector<8x8xf32> to vector<8x8xbf16>
    %cst_20 = arith.constant dense<0.000000e+00> : vector<8x8xf32>
    %37 = tpu.matmul %36, %22, %cst_20 {dimension_numbers = #tpu.dot_dimension_numbers<[1], [0], [0], [1], [0, 0, 1, 1], [], []>} : vector<8x8xbf16>, vector<8x8xbf16>, vector<8x8xf32> -> vector<8x8xf32>
    %c0_21 = arith.constant 0 : index
    %c0_22 = arith.constant 0 : index
    %38 = vector.load %arg22[%c0_21, %c0_22] : memref<8x32xf32, #tpu.memory_space<vmem>>, vector<8x8xf32>
    tpu.vector_store %arg22[%c0_21, %c0_22], %37 {strides = array<i32>} : memref<8x32xf32, #tpu.memory_space<vmem>>, vector<8x8xf32>,
    %39 = vector.extract_strided_slice %12 {offsets = [0, 8], sizes = [8, 8], strides = [1, 1]} : vector<8x32xbf16> to vector<8x8xbf16>
    %c0_23 = arith.constant 0 : index
    %c8 = arith.constant 8 : index
    %40 = vector.load %arg21[%c0_23, %c8] : memref<8x64xbf16, #tpu.memory_space<vmem>>, vector<8x8xbf16>
    %c0_24 = arith.constant 0 : index
    %c40 = arith.constant 40 : index
    %41 = vector.load %arg21[%c0_24, %c40] : memref<8x64xbf16, #tpu.memory_space<vmem>>, vector<8x8xbf16>
    %cst_25 = arith.constant dense<0.000000e+00> : vector<8x8xf32>
    %42 = tpu.matmul %39, %40, %cst_25 {dimension_numbers = #tpu.dot_dimension_numbers<[1], [1], [0], [0], [0, 0, 1, 0], [], []>} : vector<8x8xbf16>, vector<8x8xbf16>, vector<8x8xf32> -> vector<8x8xf32>
    %43 = vector.broadcast %19 : vector<1x8xf32> to vector<8x8xf32>
    %44 = arith.addf %42, %43 : vector<8x8xf32>
    %cst_26 = arith.constant dense<0xFF800000> : vector<8xf32>
    %45 = vector.multi_reduction <maximumf>, %44, %cst_26 [1] : vector<8x8xf32> to vector<8xf32>
    %46 = vector.shape_cast %45 : vector<8xf32> to vector<8x1xf32>
    %47 = vector.broadcast %46 : vector<8x1xf32> to vector<8x8xf32>
    %48 = arith.subf %44, %47 : vector<8x8xf32>
    %49 = math.exp %48 : vector<8x8xf32>
    %cst_27 = arith.constant dense<0.000000e+00> : vector<8xf32>
    %50 = vector.multi_reduction <add>, %49, %cst_27 [1] : vector<8x8xf32> to vector<8xf32>
    %51 = vector.shape_cast %50 : vector<8xf32> to vector<8x1xf32>
    %52 = tpu.reciprocal %51 {approx = true} : vector<8x1xf32> -> vector<8x1xf32>
    %53 = vector.broadcast %52 : vector<8x1xf32> to vector<8x8xf32>
    %54 = arith.mulf %49, %53 : vector<8x8xf32>
    %55 = arith.truncf %54 : vector<8x8xf32> to vector<8x8xbf16>
    %cst_28 = arith.constant dense<0.000000e+00> : vector<8x8xf32>
    %56 = tpu.matmul %55, %41, %cst_28 {dimension_numbers = #tpu.dot_dimension_numbers<[1], [0], [0], [1], [0, 0, 1, 1], [], []>} : vector<8x8xbf16>, vector<8x8xbf16>, vector<8x8xf32> -> vector<8x8xf32>
    %c0_29 = arith.constant 0 : index
    %c8_30 = arith.constant 8 : index
    %57 = vector.load %arg22[%c0_29, %c8_30] : memref<8x32xf32, #tpu.memory_space<vmem>>, vector<8x8xf32>
    tpu.vector_store %arg22[%c0_29, %c8_30], %56 {strides = array<i32>} : memref<8x32xf32, #tpu.memory_space<vmem>>, vector<8x8xf32>,
    %58 = vector.extract_strided_slice %12 {offsets = [0, 16], sizes = [8, 8], strides = [1, 1]} : vector<8x32xbf16> to vector<8x8xbf16>
    %c0_31 = arith.constant 0 : index
    %c16 = arith.constant 16 : index
    %59 = vector.load %arg21[%c0_31, %c16] : memref<8x64xbf16, #tpu.memory_space<vmem>>, vector<8x8xbf16>
    %c0_32 = arith.constant 0 : index
    %c48 = arith.constant 48 : index
    %60 = vector.load %arg21[%c0_32, %c48] : memref<8x64xbf16, #tpu.memory_space<vmem>>, vector<8x8xbf16>
    %cst_33 = arith.constant dense<0.000000e+00> : vector<8x8xf32>
    %61 = tpu.matmul %58, %59, %cst_33 {dimension_numbers = #tpu.dot_dimension_numbers<[1], [1], [0], [0], [0, 0, 1, 0], [], []>} : vector<8x8xbf16>, vector<8x8xbf16>, vector<8x8xf32> -> vector<8x8xf32>
    %62 = vector.broadcast %19 : vector<1x8xf32> to vector<8x8xf32>
    %63 = arith.addf %61, %62 : vector<8x8xf32>
    %cst_34 = arith.constant dense<0xFF800000> : vector<8xf32>
    %64 = vector.multi_reduction <maximumf>, %63, %cst_34 [1] : vector<8x8xf32> to vector<8xf32>
    %65 = vector.shape_cast %64 : vector<8xf32> to vector<8x1xf32>
    %66 = vector.broadcast %65 : vector<8x1xf32> to vector<8x8xf32>
    %67 = arith.subf %63, %66 : vector<8x8xf32>
    %68 = math.exp %67 : vector<8x8xf32>
    %cst_35 = arith.constant dense<0.000000e+00> : vector<8xf32>
    %69 = vector.multi_reduction <add>, %68, %cst_35 [1] : vector<8x8xf32> to vector<8xf32>
    %70 = vector.shape_cast %69 : vector<8xf32> to vector<8x1xf32>
    %71 = tpu.reciprocal %70 {approx = true} : vector<8x1xf32> -> vector<8x1xf32>
    %72 = vector.broadcast %71 : vector<8x1xf32> to vector<8x8xf32>
    %73 = arith.mulf %68, %72 : vector<8x8xf32>
    %74 = arith.truncf %73 : vector<8x8xf32> to vector<8x8xbf16>
    %cst_36 = arith.constant dense<0.000000e+00> : vector<8x8xf32>
    %75 = tpu.matmul %74, %60, %cst_36 {dimension_numbers = #tpu.dot_dimension_numbers<[1], [0], [0], [1], [0, 0, 1, 1], [], []>} : vector<8x8xbf16>, vector<8x8xbf16>, vector<8x8xf32> -> vector<8x8xf32>
    %c0_37 = arith.constant 0 : index
    %c16_38 = arith.constant 16 : index
    %76 = vector.load %arg22[%c0_37, %c16_38] : memref<8x32xf32, #tpu.memory_space<vmem>>, vector<8x8xf32>
    tpu.vector_store %arg22[%c0_37, %c16_38], %75 {strides = array<i32>} : memref<8x32xf32, #tpu.memory_space<vmem>>, vector<8x8xf32>,
    %77 = vector.extract_strided_slice %12 {offsets = [0, 24], sizes = [8, 8], strides = [1, 1]} : vector<8x32xbf16> to vector<8x8xbf16>
    %c0_39 = arith.constant 0 : index
    %c24 = arith.constant 24 : index
    %78 = vector.load %arg21[%c0_39, %c24] : memref<8x64xbf16, #tpu.memory_space<vmem>>, vector<8x8xbf16>
    %c0_40 = arith.constant 0 : index
    %c56 = arith.constant 56 : index
    %79 = vector.load %arg21[%c0_40, %c56] : memref<8x64xbf16, #tpu.memory_space<vmem>>, vector<8x8xbf16>
    %cst_41 = arith.constant dense<0.000000e+00> : vector<8x8xf32>
    %80 = tpu.matmul %77, %78, %cst_41 {dimension_numbers = #tpu.dot_dimension_numbers<[1], [1], [0], [0], [0, 0, 1, 0], [], []>} : vector<8x8xbf16>, vector<8x8xbf16>, vector<8x8xf32> -> vector<8x8xf32>
    %81 = vector.broadcast %19 : vector<1x8xf32> to vector<8x8xf32>
    %82 = arith.addf %80, %81 : vector<8x8xf32>
    %cst_42 = arith.constant dense<0xFF800000> : vector<8xf32>
    %83 = vector.multi_reduction <maximumf>, %82, %cst_42 [1] : vector<8x8xf32> to vector<8xf32>
    %84 = vector.shape_cast %83 : vector<8xf32> to vector<8x1xf32>
    %85 = vector.broadcast %84 : vector<8x1xf32> to vector<8x8xf32>
    %86 = arith.subf %82, %85 : vector<8x8xf32>
    %87 = math.exp %86 : vector<8x8xf32>
    %cst_43 = arith.constant dense<0.000000e+00> : vector<8xf32>
    %88 = vector.multi_reduction <add>, %87, %cst_43 [1] : vector<8x8xf32> to vector<8xf32>
    %89 = vector.shape_cast %88 : vector<8xf32> to vector<8x1xf32>
    %90 = tpu.reciprocal %89 {approx = true} : vector<8x1xf32> -> vector<8x1xf32>
    %91 = vector.broadcast %90 : vector<8x1xf32> to vector<8x8xf32>
    %92 = arith.mulf %87, %91 : vector<8x8xf32>
    %93 = arith.truncf %92 : vector<8x8xf32> to vector<8x8xbf16>
    %cst_44 = arith.constant dense<0.000000e+00> : vector<8x8xf32>
    %94 = tpu.matmul %93, %79, %cst_44 {dimension_numbers = #tpu.dot_dimension_numbers<[1], [0], [0], [1], [0, 0, 1, 1], [], []>} : vector<8x8xbf16>, vector<8x8xbf16>, vector<8x8xf32> -> vector<8x8xf32>
    %c0_45 = arith.constant 0 : index
    %c24_46 = arith.constant 24 : index
    %95 = vector.load %arg22[%c0_45, %c24_46] : memref<8x32xf32, #tpu.memory_space<vmem>>, vector<8x8xf32>
    tpu.vector_store %arg22[%c0_45, %c24_46], %94 {strides = array<i32>} : memref<8x32xf32, #tpu.memory_space<vmem>>, vector<8x8xf32>,
    %c0_47 = arith.constant 0 : index
    %c0_48 = arith.constant 0 : index
    %96 = vector.load %arg22[%c0_47, %c0_48] : memref<8x32xf32, #tpu.memory_space<vmem>>, vector<8x32xf32>
    %97 = arith.truncf %96 : vector<8x32xf32> to vector<8x32xbf16>
    %c0_49 = arith.constant 0 : index
    %c0_50 = arith.constant 0 : index
    %98 = vector.load %arg10[%c0_49, %c0_50] : memref<32x32xbf16, #tpu.memory_space<vmem>>, vector<32x32xbf16>
    %cst_51 = arith.constant dense<0.000000e+00> : vector<8x32xf32>
    %99 = tpu.matmul %97, %98, %cst_51 {dimension_numbers = #tpu.dot_dimension_numbers<[1], [0], [0], [1], [0, 0, 1, 1], [], []>} : vector<8x32xbf16>, vector<32x32xbf16>, vector<8x32xf32> -> vector<8x32xf32>
    %c0_52 = arith.constant 0 : index
    %c0_53 = arith.constant 0 : index
    %100 = vector.load %arg11[%c0_52, %c0_53] : memref<1x32xf32, #tpu.memory_space<vmem>>, vector<1x32xf32>
    %101 = vector.broadcast %100 : vector<1x32xf32> to vector<8x32xf32>
    %102 = arith.addf %99, %101 : vector<8x32xf32>
    %103 = arith.extf %4 : vector<8x32xbf16> to vector<8x32xf32>
    %104 = arith.addf %102, %103 : vector<8x32xf32>
    %cst_54 = arith.constant dense<0.000000e+00> : vector<8xf32>
    %105 = vector.multi_reduction <add>, %104, %cst_54 [1] : vector<8x32xf32> to vector<8xf32>
    %106 = vector.shape_cast %105 : vector<8xf32> to vector<8x1xf32>
    %cst_55 = arith.constant 3.200000e+01 : f32
    %107 = vector.broadcast %cst_55 : f32 to vector<8x1xf32>
    %108 = arith.divf %106, %107 : vector<8x1xf32>
    %109 = vector.broadcast %108 : vector<8x1xf32> to vector<8x32xf32>
    %110 = arith.subf %104, %109 : vector<8x32xf32>
    %111 = arith.mulf %110, %110 : vector<8x32xf32>
    %cst_56 = arith.constant dense<0.000000e+00> : vector<8xf32>
    %112 = vector.multi_reduction <add>, %111, %cst_56 [1] : vector<8x32xf32> to vector<8xf32>
    %113 = vector.shape_cast %112 : vector<8xf32> to vector<8x1xf32>
    %cst_57 = arith.constant 3.200000e+01 : f32
    %114 = vector.broadcast %cst_57 : f32 to vector<8x1xf32>
    %115 = arith.divf %113, %114 : vector<8x1xf32>
    %116 = vector.broadcast %108 : vector<8x1xf32> to vector<8x32xf32>
    %117 = arith.subf %104, %116 : vector<8x32xf32>
    %cst_58 = arith.constant 9.99999974E-6 : f32
    %118 = vector.broadcast %cst_58 : f32 to vector<8x1xf32>
    %119 = arith.addf %115, %118 : vector<8x1xf32>
    %120 = math.rsqrt %119 : vector<8x1xf32>
    %121 = vector.broadcast %120 : vector<8x1xf32> to vector<8x32xf32>
    %122 = arith.mulf %117, %121 : vector<8x32xf32>
    %c0_59 = arith.constant 0 : index
    %c0_60 = arith.constant 0 : index
    %123 = vector.load %arg12[%c0_59, %c0_60] : memref<1x32xf32, #tpu.memory_space<vmem>>, vector<1x32xf32>
    %124 = vector.broadcast %123 : vector<1x32xf32> to vector<8x32xf32>
    %125 = arith.mulf %122, %124 : vector<8x32xf32>
    %c0_61 = arith.constant 0 : index
    %c0_62 = arith.constant 0 : index
    %126 = vector.load %arg13[%c0_61, %c0_62] : memref<1x32xf32, #tpu.memory_space<vmem>>, vector<1x32xf32>
    %127 = vector.broadcast %126 : vector<1x32xf32> to vector<8x32xf32>
    %128 = arith.addf %125, %127 : vector<8x32xf32>
    %c0_63 = arith.constant 0 : index
    %c0_64 = arith.constant 0 : index
    %c0_65 = arith.constant 0 : index
    %129 = vector.load %arg5[%c0_63, %c0_64, %c0_65] : memref<1x8x1xf32, #tpu.memory_space<vmem>>, vector<1x8x1xf32>
    %130 = vector.shape_cast %129 : vector<1x8x1xf32> to vector<8x1xf32>
    %131 = vector.broadcast %130 : vector<8x1xf32> to vector<8x32xf32>
    %132 = arith.mulf %128, %131 : vector<8x32xf32>
    %133 = arith.truncf %132 : vector<8x32xf32> to vector<8x32xbf16>
    %c0_66 = arith.constant 0 : index
    %c0_67 = arith.constant 0 : index
    %134 = vector.load %arg14[%c0_66, %c0_67] : memref<32x64xbf16, #tpu.memory_space<vmem>>, vector<32x64xbf16>
    %cst_68 = arith.constant dense<0.000000e+00> : vector<8x64xf32>
    %135 = tpu.matmul %133, %134, %cst_68 {dimension_numbers = #tpu.dot_dimension_numbers<[1], [0], [0], [1], [0, 0, 1, 1], [], []>} : vector<8x32xbf16>, vector<32x64xbf16>, vector<8x64xf32> -> vector<8x64xf32>
    %c0_69 = arith.constant 0 : index
    %c0_70 = arith.constant 0 : index
    %136 = vector.load %arg15[%c0_69, %c0_70] : memref<1x64xf32, #tpu.memory_space<vmem>>, vector<1x64xf32>
    %137 = vector.broadcast %136 : vector<1x64xf32> to vector<8x64xf32>
    %138 = arith.addf %135, %137 : vector<8x64xf32>
    %cst_71 = arith.constant 0.000000e+00 : f32
    %139 = vector.broadcast %cst_71 : f32 to vector<8x64xf32>
    %140 = arith.maximumf %138, %139 : vector<8x64xf32>
    %141 = arith.truncf %140 : vector<8x64xf32> to vector<8x64xbf16>
    %c0_72 = arith.constant 0 : index
    %c0_73 = arith.constant 0 : index
    %142 = vector.load %arg16[%c0_72, %c0_73] : memref<64x32xbf16, #tpu.memory_space<vmem>>, vector<64x32xbf16>
    %cst_74 = arith.constant dense<0.000000e+00> : vector<8x32xf32>
    %143 = tpu.matmul %141, %142, %cst_74 {dimension_numbers = #tpu.dot_dimension_numbers<[1], [0], [0], [1], [0, 0, 1, 1], [], []>} : vector<8x64xbf16>, vector<64x32xbf16>, vector<8x32xf32> -> vector<8x32xf32>
    %c0_75 = arith.constant 0 : index
    %c0_76 = arith.constant 0 : index
    %144 = vector.load %arg17[%c0_75, %c0_76] : memref<1x32xf32, #tpu.memory_space<vmem>>, vector<1x32xf32>
    %145 = vector.broadcast %144 : vector<1x32xf32> to vector<8x32xf32>
    %146 = arith.addf %143, %145 : vector<8x32xf32>
    %147 = arith.addf %146, %132 : vector<8x32xf32>
    %cst_77 = arith.constant dense<0.000000e+00> : vector<8xf32>
    %148 = vector.multi_reduction <add>, %147, %cst_77 [1] : vector<8x32xf32> to vector<8xf32>
    %149 = vector.shape_cast %148 : vector<8xf32> to vector<8x1xf32>
    %cst_78 = arith.constant 3.200000e+01 : f32
    %150 = vector.broadcast %cst_78 : f32 to vector<8x1xf32>
    %151 = arith.divf %149, %150 : vector<8x1xf32>
    %152 = vector.broadcast %151 : vector<8x1xf32> to vector<8x32xf32>
    %153 = arith.subf %147, %152 : vector<8x32xf32>
    %154 = arith.mulf %153, %153 : vector<8x32xf32>
    %cst_79 = arith.constant dense<0.000000e+00> : vector<8xf32>
    %155 = vector.multi_reduction <add>, %154, %cst_79 [1] : vector<8x32xf32> to vector<8xf32>
    %156 = vector.shape_cast %155 : vector<8xf32> to vector<8x1xf32>
    %cst_80 = arith.constant 3.200000e+01 : f32
    %157 = vector.broadcast %cst_80 : f32 to vector<8x1xf32>
    %158 = arith.divf %156, %157 : vector<8x1xf32>
    %159 = vector.broadcast %151 : vector<8x1xf32> to vector<8x32xf32>
    %160 = arith.subf %147, %159 : vector<8x32xf32>
    %cst_81 = arith.constant 9.99999974E-6 : f32
    %161 = vector.broadcast %cst_81 : f32 to vector<8x1xf32>
    %162 = arith.addf %158, %161 : vector<8x1xf32>
    %163 = math.rsqrt %162 : vector<8x1xf32>
    %164 = vector.broadcast %163 : vector<8x1xf32> to vector<8x32xf32>
    %165 = arith.mulf %160, %164 : vector<8x32xf32>
    %c0_82 = arith.constant 0 : index
    %c0_83 = arith.constant 0 : index
    %166 = vector.load %arg18[%c0_82, %c0_83] : memref<1x32xf32, #tpu.memory_space<vmem>>, vector<1x32xf32>
    %167 = vector.broadcast %166 : vector<1x32xf32> to vector<8x32xf32>
    %168 = arith.mulf %165, %167 : vector<8x32xf32>
    %c0_84 = arith.constant 0 : index
    %c0_85 = arith.constant 0 : index
    %169 = vector.load %arg19[%c0_84, %c0_85] : memref<1x32xf32, #tpu.memory_space<vmem>>, vector<1x32xf32>
    %170 = vector.broadcast %169 : vector<1x32xf32> to vector<8x32xf32>
    %171 = arith.addf %168, %170 : vector<8x32xf32>
    %172 = vector.broadcast %130 : vector<8x1xf32> to vector<8x32xf32>
    %173 = arith.mulf %171, %172 : vector<8x32xf32>
    %c0_86 = arith.constant 0 : index
    %c0_87 = arith.constant 0 : index
    %c0_88 = arith.constant 0 : index
    %174 = vector.load %arg20[%c0_86, %c0_87, %c0_88] : memref<1x8x32xf32, #tpu.memory_space<vmem>>, vector<1x8x32xf32>
    %175 = vector.shape_cast %174 : vector<1x8x32xf32> to vector<8x32xf32>
    %176 = vector.shape_cast %173 : vector<8x32xf32> to vector<1x8x32xf32>
    tpu.vector_store %arg20[%c0_86, %c0_87, %c0_88], %176 {strides = array<i32>} : memref<1x8x32xf32, #tpu.memory_space<vmem>>, vector<1x8x32xf32>,
    return
  }
  func.func @transform_0(%arg0: i32, %arg1: i32) -> (i32, i32, i32) {
    %c0_i32 = arith.constant 0 : i32
    %c0_i32_0 = arith.constant 0 : i32
    return %arg0, %arg1, %c0_i32 : i32, i32, i32
  }
  func.func @transform_1(%arg0: i32, %arg1: i32) -> (i32, i32, i32) {
    %c0_i32 = arith.constant 0 : i32
    %c0_i32_0 = arith.constant 0 : i32
    %c0_i32_1 = arith.constant 0 : i32
    return %arg0, %c0_i32, %c0_i32_0 : i32, i32, i32
  }
  func.func @transform_2(%arg0: i32, %arg1: i32) -> (i32, i32, i32) {
    %c0_i32 = arith.constant 0 : i32
    %c0_i32_0 = arith.constant 0 : i32
    %c0_i32_1 = arith.constant 0 : i32
    return %arg0, %c0_i32, %c0_i32_0 : i32, i32, i32
  }
  func.func @transform_3(%arg0: i32, %arg1: i32) -> (i32, i32, i32) {
    %c0_i32 = arith.constant 0 : i32
    %c0_i32_0 = arith.constant 0 : i32
    return %arg0, %arg1, %c0_i32 : i32, i32, i32
  }
  func.func @transform_4(%arg0: i32, %arg1: i32) -> (i32, i32) {
    %c0_i32 = arith.constant 0 : i32
    %c0_i32_0 = arith.constant 0 : i32
    %c0_i32_1 = arith.constant 0 : i32
    return %c0_i32, %c0_i32_0 : i32, i32
  }
  func.func @transform_5(%arg0: i32, %arg1: i32) -> (i32, i32) {
    %c0_i32 = arith.constant 0 : i32
    %c0_i32_0 = arith.constant 0 : i32
    %c0_i32_1 = arith.constant 0 : i32
    return %c0_i32, %c0_i32_0 : i32, i32
  }
  func.func @transform_6(%arg0: i32, %arg1: i32) -> (i32, i32) {
    %c0_i32 = arith.constant 0 : i32
    %c0_i32_0 = arith.constant 0 : i32
    %c0_i32_1 = arith.constant 0 : i32
    return %c0_i32, %c0_i32_0 : i32, i32
  }
  func.func @transform_7(%arg0: i32, %arg1: i32) -> (i32, i32) {
    %c0_i32 = arith.constant 0 : i32
    %c0_i32_0 = arith.constant 0 : i32
    %c0_i32_1 = arith.constant 0 : i32
    return %c0_i32, %c0_i32_0 : i32, i32
  }
  func.func @transform_8(%arg0: i32, %arg1: i32) -> (i32, i32) {
    %c0_i32 = arith.constant 0 : i32
    %c0_i32_0 = arith.constant 0 : i32
    %c0_i32_1 = arith.constant 0 : i32
    return %c0_i32, %c0_i32_0 : i32, i32
  }
  func.func @transform_9(%arg0: i32, %arg1: i32) -> (i32, i32) {
    %c0_i32 = arith.constant 0 : i32
    %c0_i32_0 = arith.constant 0 : i32
    %c0_i32_1 = arith.constant 0 : i32
    return %c0_i32, %c0_i32_0 : i32, i32
  }
  func.func @transform_10(%arg0: i32, %arg1: i32) -> (i32, i32) {
    %c0_i32 = arith.constant 0 : i32
    %c0_i32_0 = arith.constant 0 : i32
    %c0_i32_1 = arith.constant 0 : i32
    return %c0_i32, %c0_i32_0 : i32, i32
  }
  func.func @transform_11(%arg0: i32, %arg1: i32) -> (i32, i32) {
    %c0_i32 = arith.constant 0 : i32
    %c0_i32_0 = arith.constant 0 : i32
    %c0_i32_1 = arith.constant 0 : i32
    return %c0_i32, %c0_i32_0 : i32, i32
  }
  func.func @transform_12(%arg0: i32, %arg1: i32) -> (i32, i32) {
    %c0_i32 = arith.constant 0 : i32
    %c0_i32_0 = arith.constant 0 : i32
    %c0_i32_1 = arith.constant 0 : i32
    return %c0_i32, %c0_i32_0 : i32, i32
  }
  func.func @transform_13(%arg0: i32, %arg1: i32) -> (i32, i32) {
    %c0_i32 = arith.constant 0 : i32
    %c0_i32_0 = arith.constant 0 : i32
    %c0_i32_1 = arith.constant 0 : i32
    return %c0_i32, %c0_i32_0 : i32, i32
  }
  func.func @transform_14(%arg0: i32, %arg1: i32) -> (i32, i32) {
    %c0_i32 = arith.constant 0 : i32
    %c0_i32_0 = arith.constant 0 : i32
    %c0_i32_1 = arith.constant 0 : i32
    return %c0_i32, %c0_i32_0 : i32, i32
  }
  func.func @transform_15(%arg0: i32, %arg1: i32) -> (i32, i32) {
    %c0_i32 = arith.constant 0 : i32
    %c0_i32_0 = arith.constant 0 : i32
    %c0_i32_1 = arith.constant 0 : i32
    return %c0_i32, %c0_i32_0 : i32, i32
  }
  func.func @transform_16(%arg0: i32, %arg1: i32) -> (i32, i32) {
    %c0_i32 = arith.constant 0 : i32
    %c0_i32_0 = arith.constant 0 : i32
    %c0_i32_1 = arith.constant 0 : i32
    return %c0_i32, %c0_i32_0 : i32, i32
  }
  func.func @transform_17(%arg0: i32, %arg1: i32) -> (i32, i32) {
    %c0_i32 = arith.constant 0 : i32
    %c0_i32_0 = arith.constant 0 : i32
    %c0_i32_1 = arith.constant 0 : i32
    return %c0_i32, %c0_i32_0 : i32, i32
  }
  func.func @transform_18(%arg0: i32, %arg1: i32) -> (i32, i32, i32) {
    %c0_i32 = arith.constant 0 : i32
    %c0_i32_0 = arith.constant 0 : i32
    return %arg0, %arg1, %c0_i32 : i32, i32, i32
  }
}

module attributes {stable_mosaic.version = 11 : i64} {
  func.func @encoder_layer_kernel(%arg0: i32, %arg1: i32, %arg2: memref<1x8x32xbf16, #tpu.memory_space<vmem>>, %arg3: memref<1x8x32xbf16, #tpu.memory_space<vmem>>, %arg4: memref<1x1x8xf32, #tpu.memory_space<vmem>>, %arg5: memref<1x8x1xf32, #tpu.memory_space<vmem>>, %arg6: memref<32x32xbf16, #tpu.memory_space<vmem>>, %arg7: memref<1x32xf32, #tpu.memory_space<vmem>>, %arg8: memref<32x64xbf16, #tpu.memory_space<vmem>>, %arg9: memref<1x64xf32, #tpu.memory_space<vmem>>, %arg10: memref<32x32xbf16, #tpu.memory_space<vmem>>, %arg11: memref<1x32xf32, #tpu.memory_space<vmem>>, %arg12: memref<1x32xf32, #tpu.memory_space<vmem>>, %arg13: memref<1x32xf32, #tpu.memory_space<vmem>>, %arg14: memref<32x64xbf16, #tpu.memory_space<vmem>>, %arg15: memref<1x64xf32, #tpu.memory_space<vmem>>, %arg16: memref<64x32xbf16, #tpu.memory_space<vmem>>, %arg17: memref<1x32xf32, #tpu.memory_space<vmem>>, %arg18: memref<1x32xf32, #tpu.memory_space<vmem>>, %arg19: memref<1x32xf32, #tpu.memory_space<vmem>>, %arg20: memref<1x8x32xf32, #tpu.memory_space<vmem>>, %arg21: memref<8x64xbf16, #tpu.memory_space<vmem>>, %arg22: memref<8x32xf32, #tpu.memory_space<vmem>>) attributes {dimension_semantics = [#tpu.dimension_semantics<parallel>, #tpu.dimension_semantics<arbitrary>], iteration_bounds = array<i64: 2, 1>, scalar_prefetch = 0 : i64, scratch_operands = 2 : i64, tpu.core_type = #tpu.core_type<tc>, window_params = [{transform_indices = @transform_0, window_bounds = array<i64: 1, 8, 32>}, {transform_indices = @transform_1, window_bounds = array<i64: 1, 8, 32>}, {transform_indices = @transform_2, window_bounds = array<i64: 1, 1, 8>}, {transform_indices = @transform_3, window_bounds = array<i64: 1, 8, 1>}, {pipeline_mode = #tpu.pipeline_mode<synchronous>, transform_indices = @transform_4, window_bounds = array<i64: 32, 32>}, {pipeline_mode = #tpu.pipeline_mode<synchronous>, transform_indices = @transform_5, window_bounds = array<i64: 1, 32>}, {pipeline_mode = #tpu.pipeline_mode<synchronous>, transform_indices = @transform_6, window_bounds = array<i64: 32, 64>}, {pipeline_mode = #tpu.pipeline_mode<synchronous>, transform_indices = @transform_7, window_bounds = array<i64: 1, 64>}, {pipeline_mode = #tpu.pipeline_mode<synchronous>, transform_indices = @transform_8, window_bounds = array<i64: 32, 32>}, {pipeline_mode = #tpu.pipeline_mode<synchronous>, transform_indices = @transform_9, window_bounds = array<i64: 1, 32>}, {pipeline_mode = #tpu.pipeline_mode<synchronous>, transform_indices = @transform_10, window_bounds = array<i64: 1, 32>}, {pipeline_mode = #tpu.pipeline_mode<synchronous>, transform_indices = @transform_11, window_bounds = array<i64: 1, 32>}, {pipeline_mode = #tpu.pipeline_mode<synchronous>, transform_indices = @transform_12, window_bounds = array<i64: 32, 64>}, {pipeline_mode = #tpu.pipeline_mode<synchronous>, transform_indices = @transform_13, window_bounds = array<i64: 1, 64>}, {pipeline_mode = #tpu.pipeline_mode<synchronous>, transform_indices = @transform_14, window_bounds = array<i64: 64, 32>}, {pipeline_mode = #tpu.pipeline_mode<synchronous>, transform_indices = @transform_15, window_bounds = array<i64: 1, 32>}, {pipeline_mode = #tpu.pipeline_mode<synchronous>, transform_indices = @transform_16, window_bounds = array<i64: 1, 32>}, {pipeline_mode = #tpu.pipeline_mode<synchronous>, transform_indices = @transform_17, window_bounds = array<i64: 1, 32>}, {transform_indices = @transform_18, window_bounds = array<i64: 1, 8, 32>}]} {
    %c0_i32 = arith.constant 0 : i32
    %0 = arith.cmpi eq, %arg1, %c0_i32 : i32
    %1 = arith.extui %0 : i1 to i32
    %c0_i32_0 = arith.constant 0 : i32
    %2 = arith.cmpi ne, %1, %c0_i32_0 : i32
    scf.if %2 {
      %c0_89 = arith.constant 0 : index
      %c0_90 = arith.constant 0 : index
      %c0_91 = arith.constant 0 : index
      %177 = vector.load %arg3[%c0_89, %c0_90, %c0_91] : memref<1x8x32xbf16, #tpu.memory_space<vmem>>, vector<1x8x32xbf16>
      %178 = vector.shape_cast %177 : vector<1x8x32xbf16> to vector<8x32xbf16>
      %c0_92 = arith.constant 0 : index
      %c0_93 = arith.constant 0 : index
      %179 = vector.load %arg8[%c0_92, %c0_93] : memref<32x64xbf16, #tpu.memory_space<vmem>>, vector<32x64xbf16>
      %cst_94 = arith.constant dense<0.000000e+00> : vector<8x64xf32>
      %180 = tpu.matmul %178, %179, %cst_94 {dimension_numbers = #tpu.dot_dimension_numbers<[1], [0], [0], [1], [0, 0, 1, 1], [], []>} : vector<8x32xbf16>, vector<32x64xbf16>, vector<8x64xf32> -> vector<8x64xf32>
      %c0_95 = arith.constant 0 : index
      %c0_96 = arith.constant 0 : index
      %181 = vector.load %arg9[%c0_95, %c0_96] : memref<1x64xf32, #tpu.memory_space<vmem>>, vector<1x64xf32>
      %182 = vector.broadcast %181 : vector<1x64xf32> to vector<8x64xf32>
      %183 = arith.addf %180, %182 : vector<8x64xf32>
      %184 = arith.truncf %183 : vector<8x64xf32> to vector<8x64xbf16>
      %c0_97 = arith.constant 0 : index
      %c0_98 = arith.constant 0 : index
      %185 = vector.load %arg21[%c0_97, %c0_98] : memref<8x64xbf16, #tpu.memory_space<vmem>>, vector<8x64xbf16>
      tpu.vector_store %arg21[%c0_97, %c0_98], %184 {strides = array<i32>} : memref<8x64xbf16, #tpu.memory_space<vmem>>, vector<8x64xbf16>,
    } else {
    }
    %c0 = arith.constant 0 : index
    %c0_1 = arith.constant 0 : index
    %c0_2 = arith.constant 0 : index
    %3 = vector.load %arg2[%c0, %c0_1, %c0_2] : memref<1x8x32xbf16, #tpu.memory_space<vmem>>, vector<1x8x32xbf16>
    %4 = vector.shape_cast %3 : vector<1x8x32xbf16> to vector<8x32xbf16>
    %c0_3 = arith.constant 0 : index
    %c0_4 = arith.constant 0 : index
    %5 = vector.load %arg6[%c0_3, %c0_4] : memref<32x32xbf16, #tpu.memory_space<vmem>>, vector<32x32xbf16>
    %cst = arith.constant dense<0.000000e+00> : vector<8x32xf32>
    %6 = tpu.matmul %4, %5, %cst {dimension_numbers = #tpu.dot_dimension_numbers<[1], [0], [0], [1], [0, 0, 1, 1], [], []>} : vector<8x32xbf16>, vector<32x32xbf16>, vector<8x32xf32> -> vector<8x32xf32>
    %c0_5 = arith.constant 0 : index
    %c0_6 = arith.constant 0 : index
    %7 = vector.load %arg7[%c0_5, %c0_6] : memref<1x32xf32, #tpu.memory_space<vmem>>, vector<1x32xf32>
    %8 = vector.broadcast %7 : vector<1x32xf32> to vector<8x32xf32>
    %9 = arith.addf %6, %8 : vector<8x32xf32>
    %cst_7 = arith.constant 0.353553385 : f32
    %10 = vector.broadcast %cst_7 : f32 to vector<8x32xf32>
    %11 = arith.mulf %9, %10 : vector<8x32xf32>
    %12 = arith.truncf %11 : vector<8x32xf32> to vector<8x32xbf16>
    %c0_8 = arith.constant 0 : index
    %c0_9 = arith.constant 0 : index
    %c0_10 = arith.constant 0 : index
    %13 = vector.load %arg4[%c0_8, %c0_9, %c0_10] : memref<1x1x8xf32, #tpu.memory_space<vmem>>, vector<1x1x8xf32>
    %14 = vector.shape_cast %13 : vector<1x1x8xf32> to vector<1x8xf32>
    %cst_11 = arith.constant 0.000000e+00 : f32
    %15 = vector.broadcast %cst_11 : f32 to vector<1x8xf32>
    %16 = arith.cmpf ogt, %14, %15 : vector<1x8xf32>
    %cst_12 = arith.constant -1.000000e+09 : f32
    %cst_13 = arith.constant 0.000000e+00 : f32
    %17 = vector.broadcast %cst_12 : f32 to vector<1x8xf32>
    %18 = vector.broadcast %cst_13 : f32 to vector<1x8xf32>
    %19 = arith.select %16, %17, %18 : vector<1x8xi1>, vector<1x8xf32>
    %20 = vector.extract_strided_slice %12 {offsets = [0, 0], sizes = [8, 8], strides = [1, 1]} : vector<8x32xbf16> to vector<8x8xbf16>
    %c0_14 = arith.constant 0 : index
    %c0_15 = arith.constant 0 : index
    %21 = vector.load %arg21[%c0_14, %c0_15] : memref<8x64xbf16, #tpu.memory_space<vmem>>, vector<8x8xbf16>
    %c0_16 = arith.constant 0 : index
    %c32 = arith.constant 32 : index
    %22 = vector.load %arg21[%c0_16, %c32] : memref<8x64xbf16, #tpu.memory_space<vmem>>, vector<8x8xbf16>
    %cst_17 = arith.constant dense<0.000000e+00> : vector<8x8xf32>
    %23 = tpu.matmul %20, %21, %cst_17 {dimension_numbers = #tpu.dot_dimension_numbers<[1], [1], [0], [0], [0, 0, 1, 0], [], []>} : vector<8x8xbf16>, vector<8x8xbf16>, vector<8x8xf32> -> vector<8x8xf32>
    %24 = vector.broadcast %19 : vector<1x8xf32> to vector<8x8xf32>
    %25 = arith.addf %23, %24 : vector<8x8xf32>
    %cst_18 = arith.constant dense<0xFF800000> : vector<8xf32>
    %26 = vector.multi_reduction <maximumf>, %25, %cst_18 [1] : vector<8x8xf32> to vector<8xf32>
    %27 = vector.shape_cast %26 : vector<8xf32> to vector<8x1xf32>
    %28 = vector.broadcast %27 : vector<8x1xf32> to vector<8x8xf32>
    %29 = arith.subf %25, %28 : vector<8x8xf32>
    %30 = math.exp %29 : vector<8x8xf32>
    %cst_19 = arith.constant dense<0.000000e+00> : vector<8xf32>
    %31 = vector.multi_reduction <add>, %30, %cst_19 [1] : vector<8x8xf32> to vector<8xf32>
    %32 = vector.shape_cast %31 : vector<8xf32> to vector<8x1xf32>
    %33 = tpu.reciprocal %32 {approx = true} : vector<8x1xf32> -> vector<8x1xf32>
    %34 = vector.broadcast %33 : vector<8x1xf32> to vector<8x8xf32>
    %35 = arith.mulf %30, %34 : vector<8x8xf32>
    %36 = arith.truncf %35 : vector<8x8xf32> to vector<8x8xbf16>
    %cst_20 = arith.constant dense<0.000000e+00> : vector<8x8xf32>
    %37 = tpu.matmul %36, %22, %cst_20 {dimension_numbers = #tpu.dot_dimension_numbers<[1], [0], [0], [1], [0, 0, 1, 1], [], []>} : vector<8x8xbf16>, vector<8x8xbf16>, vector<8x8xf32> -> vector<8x8xf32>
    %c0_21 = arith.constant 0 : index
    %c0_22 = arith.constant 0 : index
    %38 = vector.load %arg22[%c0_21, %c0_22] : memref<8x32xf32, #tpu.memory_space<vmem>>, vector<8x8xf32>
    tpu.vector_store %arg22[%c0_21, %c0_22], %37 {strides = array<i32>} : memref<8x32xf32, #tpu.memory_space<vmem>>, vector<8x8xf32>,
    %39 = vector.extract_strided_slice %12 {offsets = [0, 8], sizes = [8, 8], strides = [1, 1]} : vector<8x32xbf16> to vector<8x8xbf16>
    %c0_23 = arith.constant 0 : index
    %c8 = arith.constant 8 : index
    %40 = vector.load %arg21[%c0_23, %c8] : memref<8x64xbf16, #tpu.memory_space<vmem>>, vector<8x8xbf16>
    %c0_24 = arith.constant 0 : index
    %c40 = arith.constant 40 : index
    %41 = vector.load %arg21[%c0_24, %c40] : memref<8x64xbf16, #tpu.memory_space<vmem>>, vector<8x8xbf16>
    %cst_25 = arith.constant dense<0.000000e+00> : vector<8x8xf32>
    %42 = tpu.matmul %39, %40, %cst_25 {dimension_numbers = #tpu.dot_dimension_numbers<[1], [1], [0], [0], [0, 0, 1, 0], [], []>} : vector<8x8xbf16>, vector<8x8xbf16>, vector<8x8xf32> -> vector<8x8xf32>
    %43 = vector.broadcast %19 : vector<1x8xf32> to vector<8x8xf32>
    %44 = arith.addf %42, %43 : vector<8x8xf32>
    %cst_26 = arith.constant dense<0xFF800000> : vector<8xf32>
    %45 = vector.multi_reduction <maximumf>, %44, %cst_26 [1] : vector<8x8xf32> to vector<8xf32>
    %46 = vector.shape_cast %45 : vector<8xf32> to vector<8x1xf32>
    %47 = vector.broadcast %46 : vector<8x1xf32> to vector<8x8xf32>
    %48 = arith.subf %44, %47 : vector<8x8xf32>
    %49 = math.exp %48 : vector<8x8xf32>
    %cst_27 = arith.constant dense<0.000000e+00> : vector<8xf32>
    %50 = vector.multi_reduction <add>, %49, %cst_27 [1] : vector<8x8xf32> to vector<8xf32>
    %51 = vector.shape_cast %50 : vector<8xf32> to vector<8x1xf32>
    %52 = tpu.reciprocal %51 {approx = true} : vector<8x1xf32> -> vector<8x1xf32>
    %53 = vector.broadcast %52 : vector<8x1xf32> to vector<8x8xf32>
    %54 = arith.mulf %49, %53 : vector<8x8xf32>
    %55 = arith.truncf %54 : vector<8x8xf32> to vector<8x8xbf16>
    %cst_28 = arith.constant dense<0.000000e+00> : vector<8x8xf32>
    %56 = tpu.matmul %55, %41, %cst_28 {dimension_numbers = #tpu.dot_dimension_numbers<[1], [0], [0], [1], [0, 0, 1, 1], [], []>} : vector<8x8xbf16>, vector<8x8xbf16>, vector<8x8xf32> -> vector<8x8xf32>
    %c0_29 = arith.constant 0 : index
    %c8_30 = arith.constant 8 : index
    %57 = vector.load %arg22[%c0_29, %c8_30] : memref<8x32xf32, #tpu.memory_space<vmem>>, vector<8x8xf32>
    tpu.vector_store %arg22[%c0_29, %c8_30], %56 {strides = array<i32>} : memref<8x32xf32, #tpu.memory_space<vmem>>, vector<8x8xf32>,
    %58 = vector.extract_strided_slice %12 {offsets = [0, 16], sizes = [8, 8], strides = [1, 1]} : vector<8x32xbf16> to vector<8x8xbf16>
    %c0_31 = arith.constant 0 : index
    %c16 = arith.constant 16 : index
    %59 = vector.load %arg21[%c0_31, %c16] : memref<8x64xbf16, #tpu.memory_space<vmem>>, vector<8x8xbf16>
    %c0_32 = arith.constant 0 : index
    %c48 = arith.constant 48 : index
    %60 = vector.load %arg21[%c0_32, %c48] : memref<8x64xbf16, #tpu.memory_space<vmem>>, vector<8x8xbf16>
    %cst_33 = arith.constant dense<0.000000e+00> : vector<8x8xf32>
    %61 = tpu.matmul %58, %59, %cst_33 {dimension_numbers = #tpu.dot_dimension_numbers<[1], [1], [0], [0], [0, 0, 1, 0], [], []>} : vector<8x8xbf16>, vector<8x8xbf16>, vector<8x8xf32> -> vector<8x8xf32>
    %62 = vector.broadcast %19 : vector<1x8xf32> to vector<8x8xf32>
    %63 = arith.addf %61, %62 : vector<8x8xf32>
    %cst_34 = arith.constant dense<0xFF800000> : vector<8xf32>
    %64 = vector.multi_reduction <maximumf>, %63, %cst_34 [1] : vector<8x8xf32> to vector<8xf32>
    %65 = vector.shape_cast %64 : vector<8xf32> to vector<8x1xf32>
    %66 = vector.broadcast %65 : vector<8x1xf32> to vector<8x8xf32>
    %67 = arith.subf %63, %66 : vector<8x8xf32>
    %68 = math.exp %67 : vector<8x8xf32>
    %cst_35 = arith.constant dense<0.000000e+00> : vector<8xf32>
    %69 = vector.multi_reduction <add>, %68, %cst_35 [1] : vector<8x8xf32> to vector<8xf32>
    %70 = vector.shape_cast %69 : vector<8xf32> to vector<8x1xf32>
    %71 = tpu.reciprocal %70 {approx = true} : vector<8x1xf32> -> vector<8x1xf32>
    %72 = vector.broadcast %71 : vector<8x1xf32> to vector<8x8xf32>
    %73 = arith.mulf %68, %72 : vector<8x8xf32>
    %74 = arith.truncf %73 : vector<8x8xf32> to vector<8x8xbf16>
    %cst_36 = arith.constant dense<0.000000e+00> : vector<8x8xf32>
    %75 = tpu.matmul %74, %60, %cst_36 {dimension_numbers = #tpu.dot_dimension_numbers<[1], [0], [0], [1], [0, 0, 1, 1], [], []>} : vector<8x8xbf16>, vector<8x8xbf16>, vector<8x8xf32> -> vector<8x8xf32>
    %c0_37 = arith.constant 0 : index
    %c16_38 = arith.constant 16 : index
    %76 = vector.load %arg22[%c0_37, %c16_38] : memref<8x32xf32, #tpu.memory_space<vmem>>, vector<8x8xf32>
    tpu.vector_store %arg22[%c0_37, %c16_38], %75 {strides = array<i32>} : memref<8x32xf32, #tpu.memory_space<vmem>>, vector<8x8xf32>,
    %77 = vector.extract_strided_slice %12 {offsets = [0, 24], sizes = [8, 8], strides = [1, 1]} : vector<8x32xbf16> to vector<8x8xbf16>
    %c0_39 = arith.constant 0 : index
    %c24 = arith.constant 24 : index
    %78 = vector.load %arg21[%c0_39, %c24] : memref<8x64xbf16, #tpu.memory_space<vmem>>, vector<8x8xbf16>
    %c0_40 = arith.constant 0 : index
    %c56 = arith.constant 56 : index
    %79 = vector.load %arg21[%c0_40, %c56] : memref<8x64xbf16, #tpu.memory_space<vmem>>, vector<8x8xbf16>
    %cst_41 = arith.constant dense<0.000000e+00> : vector<8x8xf32>
    %80 = tpu.matmul %77, %78, %cst_41 {dimension_numbers = #tpu.dot_dimension_numbers<[1], [1], [0], [0], [0, 0, 1, 0], [], []>} : vector<8x8xbf16>, vector<8x8xbf16>, vector<8x8xf32> -> vector<8x8xf32>
    %81 = vector.broadcast %19 : vector<1x8xf32> to vector<8x8xf32>
    %82 = arith.addf %80, %81 : vector<8x8xf32>
    %cst_42 = arith.constant dense<0xFF800000> : vector<8xf32>
    %83 = vector.multi_reduction <maximumf>, %82, %cst_42 [1] : vector<8x8xf32> to vector<8xf32>
    %84 = vector.shape_cast %83 : vector<8xf32> to vector<8x1xf32>
    %85 = vector.broadcast %84 : vector<8x1xf32> to vector<8x8xf32>
    %86 = arith.subf %82, %85 : vector<8x8xf32>
    %87 = math.exp %86 : vector<8x8xf32>
    %cst_43 = arith.constant dense<0.000000e+00> : vector<8xf32>
    %88 = vector.multi_reduction <add>, %87, %cst_43 [1] : vector<8x8xf32> to vector<8xf32>
    %89 = vector.shape_cast %88 : vector<8xf32> to vector<8x1xf32>
    %90 = tpu.reciprocal %89 {approx = true} : vector<8x1xf32> -> vector<8x1xf32>
    %91 = vector.broadcast %90 : vector<8x1xf32> to vector<8x8xf32>
    %92 = arith.mulf %87, %91 : vector<8x8xf32>
    %93 = arith.truncf %92 : vector<8x8xf32> to vector<8x8xbf16>
    %cst_44 = arith.constant dense<0.000000e+00> : vector<8x8xf32>
    %94 = tpu.matmul %93, %79, %cst_44 {dimension_numbers = #tpu.dot_dimension_numbers<[1], [0], [0], [1], [0, 0, 1, 1], [], []>} : vector<8x8xbf16>, vector<8x8xbf16>, vector<8x8xf32> -> vector<8x8xf32>
    %c0_45 = arith.constant 0 : index
    %c24_46 = arith.constant 24 : index
    %95 = vector.load %arg22[%c0_45, %c24_46] : memref<8x32xf32, #tpu.memory_space<vmem>>, vector<8x8xf32>
    tpu.vector_store %arg22[%c0_45, %c24_46], %94 {strides = array<i32>} : memref<8x32xf32, #tpu.memory_space<vmem>>, vector<8x8xf32>,
    %c0_47 = arith.constant 0 : index
    %c0_48 = arith.constant 0 : index
    %96 = vector.load %arg22[%c0_47, %c0_48] : memref<8x32xf32, #tpu.memory_space<vmem>>, vector<8x32xf32>
    %97 = arith.truncf %96 : vector<8x32xf32> to vector<8x32xbf16>
    %c0_49 = arith.constant 0 : index
    %c0_50 = arith.constant 0 : index
    %98 = vector.load %arg10[%c0_49, %c0_50] : memref<32x32xbf16, #tpu.memory_space<vmem>>, vector<32x32xbf16>
    %cst_51 = arith.constant dense<0.000000e+00> : vector<8x32xf32>
    %99 = tpu.matmul %97, %98, %cst_51 {dimension_numbers = #tpu.dot_dimension_numbers<[1], [0], [0], [1], [0, 0, 1, 1], [], []>} : vector<8x32xbf16>, vector<32x32xbf16>, vector<8x32xf32> -> vector<8x32xf32>
    %c0_52 = arith.constant 0 : index
    %c0_53 = arith.constant 0 : index
    %100 = vector.load %arg11[%c0_52, %c0_53] : memref<1x32xf32, #tpu.memory_space<vmem>>, vector<1x32xf32>
    %101 = vector.broadcast %100 : vector<1x32xf32> to vector<8x32xf32>
    %102 = arith.addf %99, %101 : vector<8x32xf32>
    %103 = arith.extf %4 : vector<8x32xbf16> to vector<8x32xf32>
    %104 = arith.addf %102, %103 : vector<8x32xf32>
    %cst_54 = arith.constant dense<0.000000e+00> : vector<8xf32>
    %105 = vector.multi_reduction <add>, %104, %cst_54 [1] : vector<8x32xf32> to vector<8xf32>
    %106 = vector.shape_cast %105 : vector<8xf32> to vector<8x1xf32>
    %cst_55 = arith.constant 3.200000e+01 : f32
    %107 = vector.broadcast %cst_55 : f32 to vector<8x1xf32>
    %108 = arith.divf %106, %107 : vector<8x1xf32>
    %109 = vector.broadcast %108 : vector<8x1xf32> to vector<8x32xf32>
    %110 = arith.subf %104, %109 : vector<8x32xf32>
    %111 = arith.mulf %110, %110 : vector<8x32xf32>
    %cst_56 = arith.constant dense<0.000000e+00> : vector<8xf32>
    %112 = vector.multi_reduction <add>, %111, %cst_56 [1] : vector<8x32xf32> to vector<8xf32>
    %113 = vector.shape_cast %112 : vector<8xf32> to vector<8x1xf32>
    %cst_57 = arith.constant 3.200000e+01 : f32
    %114 = vector.broadcast %cst_57 : f32 to vector<8x1xf32>
    %115 = arith.divf %113, %114 : vector<8x1xf32>
    %116 = vector.broadcast %108 : vector<8x1xf32> to vector<8x32xf32>
    %117 = arith.subf %104, %116 : vector<8x32xf32>
    %cst_58 = arith.constant 9.99999974E-6 : f32
    %118 = vector.broadcast %cst_58 : f32 to vector<8x1xf32>
    %119 = arith.addf %115, %118 : vector<8x1xf32>
    %120 = math.rsqrt %119 : vector<8x1xf32>
    %121 = vector.broadcast %120 : vector<8x1xf32> to vector<8x32xf32>
    %122 = arith.mulf %117, %121 : vector<8x32xf32>
    %c0_59 = arith.constant 0 : index
    %c0_60 = arith.constant 0 : index
    %123 = vector.load %arg12[%c0_59, %c0_60] : memref<1x32xf32, #tpu.memory_space<vmem>>, vector<1x32xf32>
    %124 = vector.broadcast %123 : vector<1x32xf32> to vector<8x32xf32>
    %125 = arith.mulf %122, %124 : vector<8x32xf32>
    %c0_61 = arith.constant 0 : index
    %c0_62 = arith.constant 0 : index
    %126 = vector.load %arg13[%c0_61, %c0_62] : memref<1x32xf32, #tpu.memory_space<vmem>>, vector<1x32xf32>
    %127 = vector.broadcast %126 : vector<1x32xf32> to vector<8x32xf32>
    %128 = arith.addf %125, %127 : vector<8x32xf32>
    %c0_63 = arith.constant 0 : index
    %c0_64 = arith.constant 0 : index
    %c0_65 = arith.constant 0 : index
    %129 = vector.load %arg5[%c0_63, %c0_64, %c0_65] : memref<1x8x1xf32, #tpu.memory_space<vmem>>, vector<1x8x1xf32>
    %130 = vector.shape_cast %129 : vector<1x8x1xf32> to vector<8x1xf32>
    %131 = vector.broadcast %130 : vector<8x1xf32> to vector<8x32xf32>
    %132 = arith.mulf %128, %131 : vector<8x32xf32>
    %133 = arith.truncf %132 : vector<8x32xf32> to vector<8x32xbf16>
    %c0_66 = arith.constant 0 : index
    %c0_67 = arith.constant 0 : index
    %134 = vector.load %arg14[%c0_66, %c0_67] : memref<32x64xbf16, #tpu.memory_space<vmem>>, vector<32x64xbf16>
    %cst_68 = arith.constant dense<0.000000e+00> : vector<8x64xf32>
    %135 = tpu.matmul %133, %134, %cst_68 {dimension_numbers = #tpu.dot_dimension_numbers<[1], [0], [0], [1], [0, 0, 1, 1], [], []>} : vector<8x32xbf16>, vector<32x64xbf16>, vector<8x64xf32> -> vector<8x64xf32>
    %c0_69 = arith.constant 0 : index
    %c0_70 = arith.constant 0 : index
    %136 = vector.load %arg15[%c0_69, %c0_70] : memref<1x64xf32, #tpu.memory_space<vmem>>, vector<1x64xf32>
    %137 = vector.broadcast %136 : vector<1x64xf32> to vector<8x64xf32>
    %138 = arith.addf %135, %137 : vector<8x64xf32>
    %cst_71 = arith.constant 0.000000e+00 : f32
    %139 = vector.broadcast %cst_71 : f32 to vector<8x64xf32>
    %140 = arith.maximumf %138, %139 : vector<8x64xf32>
    %141 = arith.truncf %140 : vector<8x64xf32> to vector<8x64xbf16>
    %c0_72 = arith.constant 0 : index
    %c0_73 = arith.constant 0 : index
    %142 = vector.load %arg16[%c0_72, %c0_73] : memref<64x32xbf16, #tpu.memory_space<vmem>>, vector<64x32xbf16>
    %cst_74 = arith.constant dense<0.000000e+00> : vector<8x32xf32>
    %143 = tpu.matmul %141, %142, %cst_74 {dimension_numbers = #tpu.dot_dimension_numbers<[1], [0], [0], [1], [0, 0, 1, 1], [], []>} : vector<8x64xbf16>, vector<64x32xbf16>, vector<8x32xf32> -> vector<8x32xf32>
    %c0_75 = arith.constant 0 : index
    %c0_76 = arith.constant 0 : index
    %144 = vector.load %arg17[%c0_75, %c0_76] : memref<1x32xf32, #tpu.memory_space<vmem>>, vector<1x32xf32>
    %145 = vector.broadcast %144 : vector<1x32xf32> to vector<8x32xf32>
    %146 = arith.addf %143, %145 : vector<8x32xf32>
    %147 = arith.addf %146, %132 : vector<8x32xf32>
    %cst_77 = arith.constant dense<0.000000e+00> : vector<8xf32>
    %148 = vector.multi_reduction <add>, %147, %cst_77 [1] : vector<8x32xf32> to vector<8xf32>
    %149 = vector.shape_cast %148 : vector<8xf32> to vector<8x1xf32>
    %cst_78 = arith.constant 3.200000e+01 : f32
    %150 = vector.broadcast %cst_78 : f32 to vector<8x1xf32>
    %151 = arith.divf %149, %150 : vector<8x1xf32>
    %152 = vector.broadcast %151 : vector<8x1xf32> to vector<8x32xf32>
    %153 = arith.subf %147, %152 : vector<8x32xf32>
    %154 = arith.mulf %153, %153 : vector<8x32xf32>
    %cst_79 = arith.constant dense<0.000000e+00> : vector<8xf32>
    %155 = vector.multi_reduction <add>, %154, %cst_79 [1] : vector<8x32xf32> to vector<8xf32>
    %156 = vector.shape_cast %155 : vector<8xf32> to vector<8x1xf32>
    %cst_80 = arith.constant 3.200000e+01 : f32
    %157 = vector.broadcast %cst_80 : f32 to vector<8x1xf32>
    %158 = arith.divf %156, %157 : vector<8x1xf32>
    %159 = vector.broadcast %151 : vector<8x1xf32> to vector<8x32xf32>
    %160 = arith.subf %147, %159 : vector<8x32xf32>
    %cst_81 = arith.constant 9.99999974E-6 : f32
    %161 = vector.broadcast %cst_81 : f32 to vector<8x1xf32>
    %162 = arith.addf %158, %161 : vector<8x1xf32>
    %163 = math.rsqrt %162 : vector<8x1xf32>
    %164 = vector.broadcast %163 : vector<8x1xf32> to vector<8x32xf32>
    %165 = arith.mulf %160, %164 : vector<8x32xf32>
    %c0_82 = arith.constant 0 : index
    %c0_83 = arith.constant 0 : index
    %166 = vector.load %arg18[%c0_82, %c0_83] : memref<1x32xf32, #tpu.memory_space<vmem>>, vector<1x32xf32>
    %167 = vector.broadcast %166 : vector<1x32xf32> to vector<8x32xf32>
    %168 = arith.mulf %165, %167 : vector<8x32xf32>
    %c0_84 = arith.constant 0 : index
    %c0_85 = arith.constant 0 : index
    %169 = vector.load %arg19[%c0_84, %c0_85] : memref<1x32xf32, #tpu.memory_space<vmem>>, vector<1x32xf32>
    %170 = vector.broadcast %169 : vector<1x32xf32> to vector<8x32xf32>
    %171 = arith.addf %168, %170 : vector<8x32xf32>
    %172 = vector.broadcast %130 : vector<8x1xf32> to vector<8x32xf32>
    %173 = arith.mulf %171, %172 : vector<8x32xf32>
    %c0_86 = arith.constant 0 : index
    %c0_87 = arith.constant 0 : index
    %c0_88 = arith.constant 0 : index
    %174 = vector.load %arg20[%c0_86, %c0_87, %c0_88] : memref<1x8x32xf32, #tpu.memory_space<vmem>>, vector<1x8x32xf32>
    %175 = vector.shape_cast %174 : vector<1x8x32xf32> to vector<8x32xf32>
    %176 = vector.shape_cast %173 : vector<8x32xf32> to vector<1x8x32xf32>
    tpu.vector_store %arg20[%c0_86, %c0_87, %c0_88], %176 {strides = array<i32>} : memref<1x8x32xf32, #tpu.memory_space<vmem>>, vector<1x8x32xf32>,
    return
  }
  func.func @transform_0(%arg0: i32, %arg1: i32) -> (i32, i32, i32) {
    %c0_i32 = arith.constant 0 : i32
    %c0_i32_0 = arith.constant 0 : i32
    return %arg0, %arg1, %c0_i32 : i32, i32, i32
  }
  func.func @transform_1(%arg0: i32, %arg1: i32) -> (i32, i32, i32) {
    %c0_i32 = arith.constant 0 : i32
    %c0_i32_0 = arith.constant 0 : i32
    %c0_i32_1 = arith.constant 0 : i32
    return %arg0, %c0_i32, %c0_i32_0 : i32, i32, i32
  }
  func.func @transform_2(%arg0: i32, %arg1: i32) -> (i32, i32, i32) {
    %c0_i32 = arith.constant 0 : i32
    %c0_i32_0 = arith.constant 0 : i32
    %c0_i32_1 = arith.constant 0 : i32
    return %arg0, %c0_i32, %c0_i32_0 : i32, i32, i32
  }
  func.func @transform_3(%arg0: i32, %arg1: i32) -> (i32, i32, i32) {
    %c0_i32 = arith.constant 0 : i32
    %c0_i32_0 = arith.constant 0 : i32
    return %arg0, %arg1, %c0_i32 : i32, i32, i32
  }
  func.func @transform_4(%arg0: i32, %arg1: i32) -> (i32, i32) {
    %c0_i32 = arith.constant 0 : i32
    %c0_i32_0 = arith.constant 0 : i32
    %c0_i32_1 = arith.constant 0 : i32
    return %c0_i32, %c0_i32_0 : i32, i32
  }
  func.func @transform_5(%arg0: i32, %arg1: i32) -> (i32, i32) {
    %c0_i32 = arith.constant 0 : i32
    %c0_i32_0 = arith.constant 0 : i32
    %c0_i32_1 = arith.constant 0 : i32
    return %c0_i32, %c0_i32_0 : i32, i32
  }
  func.func @transform_6(%arg0: i32, %arg1: i32) -> (i32, i32) {
    %c0_i32 = arith.constant 0 : i32
    %c0_i32_0 = arith.constant 0 : i32
    %c0_i32_1 = arith.constant 0 : i32
    return %c0_i32, %c0_i32_0 : i32, i32
  }
  func.func @transform_7(%arg0: i32, %arg1: i32) -> (i32, i32) {
    %c0_i32 = arith.constant 0 : i32
    %c0_i32_0 = arith.constant 0 : i32
    %c0_i32_1 = arith.constant 0 : i32
    return %c0_i32, %c0_i32_0 : i32, i32
  }
  func.func @transform_8(%arg0: i32, %arg1: i32) -> (i32, i32) {
    %c0_i32 = arith.constant 0 : i32
    %c0_i32_0 = arith.constant 0 : i32
    %c0_i32_1 = arith.constant 0 : i32
    return %c0_i32, %c0_i32_0 : i32, i32
  }
  func.func @transform_9(%arg0: i32, %arg1: i32) -> (i32, i32) {
    %c0_i32 = arith.constant 0 : i32
    %c0_i32_0 = arith.constant 0 : i32
    %c0_i32_1 = arith.constant 0 : i32
    return %c0_i32, %c0_i32_0 : i32, i32
  }
  func.func @transform_10(%arg0: i32, %arg1: i32) -> (i32, i32) {
    %c0_i32 = arith.constant 0 : i32
    %c0_i32_0 = arith.constant 0 : i32
    %c0_i32_1 = arith.constant 0 : i32
    return %c0_i32, %c0_i32_0 : i32, i32
  }
  func.func @transform_11(%arg0: i32, %arg1: i32) -> (i32, i32) {
    %c0_i32 = arith.constant 0 : i32
    %c0_i32_0 = arith.constant 0 : i32
    %c0_i32_1 = arith.constant 0 : i32
    return %c0_i32, %c0_i32_0 : i32, i32
  }
  func.func @transform_12(%arg0: i32, %arg1: i32) -> (i32, i32) {
    %c0_i32 = arith.constant 0 : i32
    %c0_i32_0 = arith.constant 0 : i32
    %c0_i32_1 = arith.constant 0 : i32
    return %c0_i32, %c0_i32_0 : i32, i32
  }
  func.func @transform_13(%arg0: i32, %arg1: i32) -> (i32, i32) {
    %c0_i32 = arith.constant 0 : i32
    %c0_i32_0 = arith.constant 0 : i32
    %c0_i32_1 = arith.constant 0 : i32
    return %c0_i32, %c0_i32_0 : i32, i32
  }
  func.func @transform_14(%arg0: i32, %arg1: i32) -> (i32, i32) {
    %c0_i32 = arith.constant 0 : i32
    %c0_i32_0 = arith.constant 0 : i32
    %c0_i32_1 = arith.constant 0 : i32
    return %c0_i32, %c0_i32_0 : i32, i32
  }
  func.func @transform_15(%arg0: i32, %arg1: i32) -> (i32, i32) {
    %c0_i32 = arith.constant 0 : i32
    %c0_i32_0 = arith.constant 0 : i32
    %c0_i32_1 = arith.constant 0 : i32
    return %c0_i32, %c0_i32_0 : i32, i32
  }
  func.func @transform_16(%arg0: i32, %arg1: i32) -> (i32, i32) {
    %c0_i32 = arith.constant 0 : i32
    %c0_i32_0 = arith.constant 0 : i32
    %c0_i32_1 = arith.constant 0 : i32
    return %c0_i32, %c0_i32_0 : i32, i32
  }
  func.func @transform_17(%arg0: i32, %arg1: i32) -> (i32, i32) {
    %c0_i32 = arith.constant 0 : i32
    %c0_i32_0 = arith.constant 0 : i32
    %c0_i32_1 = arith.constant 0 : i32
    return %c0_i32, %c0_i32_0 : i32, i32
  }
  func.func @transform_18(%arg0: i32, %arg1: i32) -> (i32, i32, i32) {
    %c0_i32 = arith.constant 0 : i32
    %c0_i32_0 = arith.constant 0 : i32
    return %arg0, %arg1, %c0_i32 : i32, i32, i32
  }
}

</mosaic_0001>

<llo_original>
// kernel: tpu_custom_call.1
$region0: #{tpu_custom_call.1}
  #allocation0 [shape = 'u32[]', space=smem, size = 0x4, offset = 0x4, fixed_abs, tag = 'smem constant byte address 0x4 - core index']
  #allocation1 [shape = 'u32[72,128]{1,0:T(1,128)}', space=vmem, size = 0x9000, scoped, tag = 'internal scratch']
  #allocation2 [shape = 'bf16[8,64]{1,0:T(8,128)(2,1)}', space=vmem, size = 0x800, scoped, tag = 'scratch operand']
  #allocation3 [shape = 'f32[8,32]{1,0:T(8,128)}', space=vmem, size = 0x1000, scoped, tag = 'scratch operand']
  %s0 = inlined_call_operand.vmem [shape: bf16[2,8,32], index: 0, kind: input, shape index: {}]
  %s1 = inlined_call_operand.hbm [shape: bf16[2,8,32], index: 1, kind: input, shape index: {}]
  %s2 = inlined_call_operand.vmem [shape: f32[2,1,8], index: 2, kind: input, shape index: {}]
  %s3 = inlined_call_operand.vmem [shape: f32[2,8,1], index: 3, kind: input, shape index: {}]
  %s4 = inlined_call_operand.vmem [shape: bf16[32,32], index: 4, kind: input, shape index: {}]
  %s5 = inlined_call_operand.vmem [shape: f32[1,32], index: 5, kind: input, shape index: {}]
  %s6 = inlined_call_operand.vmem [shape: bf16[32,64], index: 6, kind: input, shape index: {}]
  %s7 = inlined_call_operand.vmem [shape: f32[1,64], index: 7, kind: input, shape index: {}]
  %s8 = inlined_call_operand.vmem [shape: bf16[32,32], index: 8, kind: input, shape index: {}]
  %s9 = inlined_call_operand.vmem [shape: f32[1,32], index: 9, kind: input, shape index: {}]
  %s10 = inlined_call_operand.vmem [shape: f32[1,32], index: 10, kind: input, shape index: {}]
  %s11 = inlined_call_operand.vmem [shape: f32[1,32], index: 11, kind: input, shape index: {}]
  %s12 = inlined_call_operand.hbm [shape: bf16[32,64], index: 12, kind: input, shape index: {}]
  %s13 = inlined_call_operand.hbm [shape: f32[1,64], index: 13, kind: input, shape index: {}]
  %s14 = inlined_call_operand.vmem [shape: bf16[64,32], index: 14, kind: input, shape index: {}]
  %s15 = inlined_call_operand.vmem [shape: f32[1,32], index: 15, kind: input, shape index: {}]
  %s16 = inlined_call_operand.vmem [shape: f32[1,32], index: 16, kind: input, shape index: {}]
  %s17 = inlined_call_operand.vmem [shape: f32[1,32], index: 17, kind: input, shape index: {}]
  %s18 = inlined_call_operand.hbm [shape: f32[2,8,32], index: 18, kind: output, shape index: {}]
  %s19 = sld [smem:[#allocation0]]
  $region121: #{tpu_custom_call.1} parent=0
    _
  %s21 = ssub.s32 1, %s19
  %s22 = scalar_select 0, %s21, %s19
  $region1: #{tpu_custom_call.1} parent=0
    #allocation4 [shape = 'u8[4096]{0}', space=vmem, size = 0x1000, scoped, tag = 'input window, operand 1']
    #allocation5 [shape = 's32[2]{0}', space=sflag, size = 0x8, scoped, tag = 'scoped memory for tpu_custom_call.1']
    #allocation6 [shape = 's32[2]{0}', space=sflag, size = 0x8, scoped, tag = 'scoped memory for tpu_custom_call.1']
    #allocation7 [shape = 'u8[8192]{0}', space=vmem, size = 0x2000, scoped, tag = 'input window, operand 12, single buffered']
    #allocation8 [shape = 's32[1]{0}', space=sflag, size = 0x4, scoped, tag = 'scoped memory for tpu_custom_call.1']
    #allocation9 [shape = 'u8[512]{0}', space=vmem, size = 0x400, scoped, tag = 'input window, operand 13, single buffered']
    #allocation10 [shape = 'u8[8192]{0}', space=vmem, size = 0x2000, scoped, tag = 'output window, operand 0']
    %23 = vsyncpa [#allocation5], 0
    %s24 = scalar_lea.sflag [#allocation5], 1
    %25 = vsyncpa %s24, 0
    %26 = vsyncpa [#allocation8], 0
    %27 = vsyncpa [#allocation6], 0
    %s28 = scalar_lea.sflag [#allocation6], 1
    %29 = vsyncpa %s28, 0
    loop: start=0, step=1, limit=4
    $region2: #{tpu_custom_call.1} parent=1 // loop_pre_header
      _
    $region3: #{tpu_custom_call.1} parent=1 // loop_header
      %s31 = sphi 0, %s35
      %p32 = scmp.ge.s32.totalorder %s31, 4
      %s38 = sphi 0, %s50
      %s39 = sphi 0, %s46
      %s40 = sphi 0, %s38
      %s41 = sphi 0, %s39
      %s42 = sphi 0, %s40
      %s43 = sphi 0, %s41
      %s55 = sphi 0, %s57
      %s58 = sphi 0, %s55
      %s59 = sphi 0, %s58
      %s75 = sphi 0, %s59
      %s81 = sphi 0, %s83
      %s84 = sphi 0, %s81
      %s85 = sphi 0, %s84
      %s101 = sphi 0, %s85
      %s107 = sphi 0, %s109
      %s110 = sphi 0, %s107
      %s111 = sphi 0, %s110
      %s127 = sphi 0, %s111
      %s135 = sphi 0, %s137
      %s138 = sphi 0, %s135
      %s139 = sphi 0, %s138
      %s155 = sphi 0, %s139
      %s159 = sphi 0, %s159
      %s161 = sphi 0, %s159
      %s162 = sphi 0, %s161
      %s176 = sphi 0, %s162
      %s180 = sphi 0, %s180
      %s182 = sphi 0, %s180
      %s183 = sphi 0, %s182
      %s197 = sphi 0, %s183
      %s201 = sphi 0, %s201
      %s203 = sphi 0, %s201
      %s204 = sphi 0, %s203
      %s218 = sphi 0, %s204
      %s222 = sphi 0, %s222
      %s224 = sphi 0, %s222
      %s225 = sphi 0, %s224
      %s239 = sphi 0, %s225
      %s243 = sphi 0, %s243
      %s245 = sphi 0, %s243
      %s246 = sphi 0, %s245
      %s260 = sphi 0, %s246
      %s264 = sphi 0, %s264
      %s266 = sphi 0, %s264
      %s267 = sphi 0, %s266
      %s281 = sphi 0, %s267
      %s285 = sphi 0, %s285
      %s287 = sphi 0, %s285
      %s288 = sphi 0, %s287
      %s302 = sphi 0, %s288
      %s306 = sphi 0, %s306
      %s308 = sphi 0, %s306
      %s309 = sphi 0, %s308
      %s323 = sphi 0, %s309
      %s327 = sphi 0, %s327
      %s329 = sphi 0, %s327
      %s330 = sphi 0, %s329
      %s344 = sphi 0, %s330
      %s348 = sphi 0, %s348
      %s350 = sphi 0, %s348
      %s351 = sphi 0, %s350
      %s365 = sphi 0, %s351
      %s369 = sphi 0, %s369
      %s371 = sphi 0, %s369
      %s372 = sphi 0, %s371
      %s386 = sphi 0, %s372
      %s390 = sphi 0, %s390
      %s392 = sphi 0, %s390
      %s393 = sphi 0, %s392
      %s407 = sphi 0, %s393
      %s411 = sphi 0, %s411
      %s413 = sphi 0, %s411
      %s414 = sphi 0, %s413
      %s428 = sphi 0, %s414
      %s432 = sphi 0, %s432
      %s434 = sphi 0, %s432
      %s435 = sphi 0, %s434
      %s449 = sphi 0, %s435
      %s457 = sphi 0, %s459
      %s460 = sphi 0, %s457
      %s461 = sphi 0, %s460
      %s477 = sphi 0, %s461
    $region4: #{tpu_custom_call.1} parent=1 // loop_header_branch
      %34 = sbr.rel (%p32) target = $region8
    $region5: #{tpu_custom_call.1} parent=1 // loop_body
      %s36 = ssub.s32 %s31, 1
      %s37 = ssub.s32 %s31, 2
      %s44 = sadd.s32 1, %s39
      %p45 = scmp.ge.s32.totalorder %s44, 1
      %s46 = scalar_select %p45, 0, %s44
      %s47 = sadd.s32 1, %s38
      %s48 = scalar_select %p45, %s47, %s38
      %p49 = scmp.ge.s32.totalorder %s48, 2
      %s50 = scalar_select %p49, 0, %s48
      %s51 = ssub.s32 %s38, %s50
      %s52 = ssub.s32 %s39, %s46
      %s53 = sor.u32 %s51, %s52
      %p54 = scmp.eq.s32.totalorder %s53, 0
      %s56 = sadd.s32 %s55, 1
      %s57 = scalar_select %p54, %s55, %s56
      %p60 = pneg %p54
      %p61 = scmp.eq.s32.totalorder %s31, 1
      %p62 = por %p60, %p61
      %p63 = scmp.ne.s32.totalorder %s55, %s58
      %p64 = scmp.eq.s32.totalorder %s31, 0
      %p65 = por %p63, %p64
      %p66 = scmp.ne.s32.totalorder %s55, %s58
      %p67 = scmp.eq.s32.totalorder %s36, 1
      %p68 = por %p66, %p67
      %p69 = scmp.ne.s32.totalorder %s58, %s59
      %p70 = scmp.eq.s32.totalorder %s36, 0
      %p71 = por %p69, %p70
      %p72 = scmp.ne.s32.totalorder %s58, %s59
      %p73 = scmp.eq.s32.totalorder %s37, 1
      %p74 = por %p72, %p73
      %p76 = scmp.ne.s32.totalorder %s59, %s75
      %p77 = scmp.eq.s32.totalorder %s37, 0
      %p78 = por %p76, %p77
      %s79 = ssub.s32 %s38, %s50
      %p80 = scmp.eq.s32.totalorder %s79, 0
      %s82 = sadd.s32 %s81, 1
      %s83 = scalar_select %p80, %s81, %s82
      %p86 = pneg %p80
      %p87 = scmp.eq.s32.totalorder %s31, 1
      %p88 = por %p86, %p87
      %p89 = scmp.ne.s32.totalorder %s81, %s84
      %p90 = scmp.eq.s32.totalorder %s31, 0
      %p91 = por %p89, %p90
      %p92 = scmp.ne.s32.totalorder %s81, %s84
      %p93 = scmp.eq.s32.totalorder %s36, 1
      %p94 = por %p92, %p93
      %p95 = scmp.ne.s32.totalorder %s84, %s85
      %p96 = scmp.eq.s32.totalorder %s36, 0
      %p97 = por %p95, %p96
      %p98 = scmp.ne.s32.totalorder %s84, %s85
      %p99 = scmp.eq.s32.totalorder %s37, 1
      %p100 = por %p98, %p99
      %p102 = scmp.ne.s32.totalorder %s85, %s101
      %p103 = scmp.eq.s32.totalorder %s37, 0
      %p104 = por %p102, %p103
      %s105 = ssub.s32 %s38, %s50
      %p106 = scmp.eq.s32.totalorder %s105, 0
      %s108 = sadd.s32 %s107, 1
      %s109 = scalar_select %p106, %s107, %s108
      %p112 = pneg %p106
      %p113 = scmp.eq.s32.totalorder %s31, 1
      %p114 = por %p112, %p113
      %p115 = scmp.ne.s32.totalorder %s107, %s110
      %p116 = scmp.eq.s32.totalorder %s31, 0
      %p117 = por %p115, %p116
      %p118 = scmp.ne.s32.totalorder %s107, %s110
      %p119 = scmp.eq.s32.totalorder %s36, 1
      %p120 = por %p118, %p119
      %p121 = scmp.ne.s32.totalorder %s110, %s111
      %p122 = scmp.eq.s32.totalorder %s36, 0
      %p123 = por %p121, %p122
      %p124 = scmp.ne.s32.totalorder %s110, %s111
      %p125 = scmp.eq.s32.totalorder %s37, 1
      %p126 = por %p124, %p125
      %p128 = scmp.ne.s32.totalorder %s111, %s127
      %p129 = scmp.eq.s32.totalorder %s37, 0
      %p130 = por %p128, %p129
      %s131 = ssub.s32 %s38, %s50
      %s132 = ssub.s32 %s39, %s46
      %s133 = sor.u32 %s131, %s132
      %p134 = scmp.eq.s32.totalorder %s133, 0
      %s136 = sadd.s32 %s135, 1
      %s137 = scalar_select %p134, %s135, %s136
      %p140 = pneg %p134
      %p141 = scmp.eq.s32.totalorder %s31, 1
      %p142 = por %p140, %p141
      %p143 = scmp.ne.s32.totalorder %s135, %s138
      %p144 = scmp.eq.s32.totalorder %s31, 0
      %p145 = por %p143, %p144
      %p146 = scmp.ne.s32.totalorder %s135, %s138
      %p147 = scmp.eq.s32.totalorder %s36, 1
      %p148 = por %p146, %p147
      %p149 = scmp.ne.s32.totalorder %s138, %s139
      %p150 = scmp.eq.s32.totalorder %s36, 0
      %p151 = por %p149, %p150
      %p152 = scmp.ne.s32.totalorder %s138, %s139
      %p153 = scmp.eq.s32.totalorder %s37, 1
      %p154 = por %p152, %p153
      %p156 = scmp.ne.s32.totalorder %s139, %s155
      %p157 = scmp.eq.s32.totalorder %s37, 0
      %p158 = por %p156, %p157
      %s160 = sadd.s32 %s159, 1
      %p163 = scmp.eq.s32.totalorder %s31, 1
      %p164 = scmp.ne.s32.totalorder %s159, %s161
      %p165 = scmp.eq.s32.totalorder %s31, 0
      %p166 = por %p164, %p165
      %p167 = scmp.ne.s32.totalorder %s159, %s161
      %p168 = scmp.eq.s32.totalorder %s36, 1
      %p169 = por %p167, %p168
      %p170 = scmp.ne.s32.totalorder %s161, %s162
      %p171 = scmp.eq.s32.totalorder %s36, 0
      %p172 = por %p170, %p171
      %p173 = scmp.ne.s32.totalorder %s161, %s162
      %p174 = scmp.eq.s32.totalorder %s37, 1
      %p175 = por %p173, %p174
      %p177 = scmp.ne.s32.totalorder %s162, %s176
      %p178 = scmp.eq.s32.totalorder %s37, 0
      %p179 = por %p177, %p178
      %s181 = sadd.s32 %s180, 1
      %p184 = scmp.eq.s32.totalorder %s31, 1
      %p185 = scmp.ne.s32.totalorder %s180, %s182
      %p186 = scmp.eq.s32.totalorder %s31, 0
      %p187 = por %p185, %p186
      %p188 = scmp.ne.s32.totalorder %s180, %s182
      %p189 = scmp.eq.s32.totalorder %s36, 1
      %p190 = por %p188, %p189
      %p191 = scmp.ne.s32.totalorder %s182, %s183
      %p192 = scmp.eq.s32.totalorder %s36, 0
      %p193 = por %p191, %p192
      %p194 = scmp.ne.s32.totalorder %s182, %s183
      %p195 = scmp.eq.s32.totalorder %s37, 1
      %p196 = por %p194, %p195
      %p198 = scmp.ne.s32.totalorder %s183, %s197
      %p199 = scmp.eq.s32.totalorder %s37, 0
      %p200 = por %p198, %p199
      %s202 = sadd.s32 %s201, 1
      %p205 = scmp.eq.s32.totalorder %s31, 1
      %p206 = scmp.ne.s32.totalorder %s201, %s203
      %p207 = scmp.eq.s32.totalorder %s31, 0
      %p208 = por %p206, %p207
      %p209 = scmp.ne.s32.totalorder %s201, %s203
      %p210 = scmp.eq.s32.totalorder %s36, 1
      %p211 = por %p209, %p210
      %p212 = scmp.ne.s32.totalorder %s203, %s204
      %p213 = scmp.eq.s32.totalorder %s36, 0
      %p214 = por %p212, %p213
      %p215 = scmp.ne.s32.totalorder %s203, %s204
      %p216 = scmp.eq.s32.totalorder %s37, 1
      %p217 = por %p215, %p216
      %p219 = scmp.ne.s32.totalorder %s204, %s218
      %p220 = scmp.eq.s32.totalorder %s37, 0
      %p221 = por %p219, %p220
      %s223 = sadd.s32 %s222, 1
      %p226 = scmp.eq.s32.totalorder %s31, 1
      %p227 = scmp.ne.s32.totalorder %s222, %s224
      %p228 = scmp.eq.s32.totalorder %s31, 0
      %p229 = por %p227, %p228
      %p230 = scmp.ne.s32.totalorder %s222, %s224
      %p231 = scmp.eq.s32.totalorder %s36, 1
      %p232 = por %p230, %p231
      %p233 = scmp.ne.s32.totalorder %s224, %s225
      %p234 = scmp.eq.s32.totalorder %s36, 0
      %p235 = por %p233, %p234
      %p236 = scmp.ne.s32.totalorder %s224, %s225
      %p237 = scmp.eq.s32.totalorder %s37, 1
      %p238 = por %p236, %p237
      %p240 = scmp.ne.s32.totalorder %s225, %s239
      %p241 = scmp.eq.s32.totalorder %s37, 0
      %p242 = por %p240, %p241
      %s244 = sadd.s32 %s243, 1
      %p247 = scmp.eq.s32.totalorder %s31, 1
      %p248 = scmp.ne.s32.totalorder %s243, %s245
      %p249 = scmp.eq.s32.totalorder %s31, 0
      %p250 = por %p248, %p249
      %p251 = scmp.ne.s32.totalorder %s243, %s245
      %p252 = scmp.eq.s32.totalorder %s36, 1
      %p253 = por %p251, %p252
      %p254 = scmp.ne.s32.totalorder %s245, %s246
      %p255 = scmp.eq.s32.totalorder %s36, 0
      %p256 = por %p254, %p255
      %p257 = scmp.ne.s32.totalorder %s245, %s246
      %p258 = scmp.eq.s32.totalorder %s37, 1
      %p259 = por %p257, %p258
      %p261 = scmp.ne.s32.totalorder %s246, %s260
      %p262 = scmp.eq.s32.totalorder %s37, 0
      %p263 = por %p261, %p262
      %s265 = sadd.s32 %s264, 1
      %p268 = scmp.eq.s32.totalorder %s31, 1
      %p269 = scmp.ne.s32.totalorder %s264, %s266
      %p270 = scmp.eq.s32.totalorder %s31, 0
      %p271 = por %p269, %p270
      %p272 = scmp.ne.s32.totalorder %s264, %s266
      %p273 = scmp.eq.s32.totalorder %s36, 1
      %p274 = por %p272, %p273
      %p275 = scmp.ne.s32.totalorder %s266, %s267
      %p276 = scmp.eq.s32.totalorder %s36, 0
      %p277 = por %p275, %p276
      %p278 = scmp.ne.s32.totalorder %s266, %s267
      %p279 = scmp.eq.s32.totalorder %s37, 1
      %p280 = por %p278, %p279
      %p282 = scmp.ne.s32.totalorder %s267, %s281
      %p283 = scmp.eq.s32.totalorder %s37, 0
      %p284 = por %p282, %p283
      %s286 = sadd.s32 %s285, 1
      %p289 = scmp.eq.s32.totalorder %s31, 1
      %p290 = scmp.ne.s32.totalorder %s285, %s287
      %p291 = scmp.eq.s32.totalorder %s31, 0
      %p292 = por %p290, %p291
      %p293 = scmp.ne.s32.totalorder %s285, %s287
      %p294 = scmp.eq.s32.totalorder %s36, 1
      %p295 = por %p293, %p294
      %p296 = scmp.ne.s32.totalorder %s287, %s288
      %p297 = scmp.eq.s32.totalorder %s36, 0
      %p298 = por %p296, %p297
      %p299 = scmp.ne.s32.totalorder %s287, %s288
      %p300 = scmp.eq.s32.totalorder %s37, 1
      %p301 = por %p299, %p300
      %p303 = scmp.ne.s32.totalorder %s288, %s302
      %p304 = scmp.eq.s32.totalorder %s37, 0
      %p305 = por %p303, %p304
      %s307 = sadd.s32 %s306, 1
      %p310 = scmp.eq.s32.totalorder %s31, 1
      %p311 = scmp.ne.s32.totalorder %s306, %s308
      %p312 = scmp.eq.s32.totalorder %s31, 0
      %p313 = por %p311, %p312
      %p314 = scmp.ne.s32.totalorder %s306, %s308
      %p315 = scmp.eq.s32.totalorder %s36, 1
      %p316 = por %p314, %p315
      %p317 = scmp.ne.s32.totalorder %s308, %s309
      %p318 = scmp.eq.s32.totalorder %s36, 0
      %p319 = por %p317, %p318
      %p320 = scmp.ne.s32.totalorder %s308, %s309
      %p321 = scmp.eq.s32.totalorder %s37, 1
      %p322 = por %p320, %p321
      %p324 = scmp.ne.s32.totalorder %s309, %s323
      %p325 = scmp.eq.s32.totalorder %s37, 0
      %p326 = por %p324, %p325
      %s328 = sadd.s32 %s327, 1
      %p331 = scmp.eq.s32.totalorder %s31, 1
      %p332 = scmp.ne.s32.totalorder %s327, %s329
      %p333 = scmp.eq.s32.totalorder %s31, 0
      %p334 = por %p332, %p333
      %p335 = scmp.ne.s32.totalorder %s327, %s329
      %p336 = scmp.eq.s32.totalorder %s36, 1
      %p337 = por %p335, %p336
      %p338 = scmp.ne.s32.totalorder %s329, %s330
      %p339 = scmp.eq.s32.totalorder %s36, 0
      %p340 = por %p338, %p339
      %p341 = scmp.ne.s32.totalorder %s329, %s330
      %p342 = scmp.eq.s32.totalorder %s37, 1
      %p343 = por %p341, %p342
      %p345 = scmp.ne.s32.totalorder %s330, %s344
      %p346 = scmp.eq.s32.totalorder %s37, 0
      %p347 = por %p345, %p346
      %s349 = sadd.s32 %s348, 1
      %p352 = scmp.eq.s32.totalorder %s31, 1
      %p353 = scmp.ne.s32.totalorder %s348, %s350
      %p354 = scmp.eq.s32.totalorder %s31, 0
      %p355 = por %p353, %p354
      %p356 = scmp.ne.s32.totalorder %s348, %s350
      %p357 = scmp.eq.s32.totalorder %s36, 1
      %p358 = por %p356, %p357
      %p359 = scmp.ne.s32.totalorder %s350, %s351
      %p360 = scmp.eq.s32.totalorder %s36, 0
      %p361 = por %p359, %p360
      %p362 = scmp.ne.s32.totalorder %s350, %s351
      %p363 = scmp.eq.s32.totalorder %s37, 1
      %p364 = por %p362, %p363
      %p366 = scmp.ne.s32.totalorder %s351, %s365
      %p367 = scmp.eq.s32.totalorder %s37, 0
      %p368 = por %p366, %p367
      %s370 = sadd.s32 %s369, 1
      %p373 = scmp.eq.s32.totalorder %s31, 1
      %p374 = scmp.ne.s32.totalorder %s369, %s371
      %p375 = scmp.eq.s32.totalorder %s31, 0
      %p376 = por %p374, %p375
      %p377 = scmp.ne.s32.totalorder %s369, %s371
      %p378 = scmp.eq.s32.totalorder %s36, 1
      %p379 = por %p377, %p378
      %p380 = scmp.ne.s32.totalorder %s371, %s372
      %p381 = scmp.eq.s32.totalorder %s36, 0
      %p382 = por %p380, %p381
      %p383 = scmp.ne.s32.totalorder %s371, %s372
      %p384 = scmp.eq.s32.totalorder %s37, 1
      %p385 = por %p383, %p384
      %p387 = scmp.ne.s32.totalorder %s372, %s386
      %p388 = scmp.eq.s32.totalorder %s37, 0
      %p389 = por %p387, %p388
      %s391 = sadd.s32 %s390, 1
      %p394 = scmp.eq.s32.totalorder %s31, 1
      %p395 = scmp.ne.s32.totalorder %s390, %s392
      %p396 = scmp.eq.s32.totalorder %s31, 0
      %p397 = por %p395, %p396
      %p398 = scmp.ne.s32.totalorder %s390, %s392
      %p399 = scmp.eq.s32.totalorder %s36, 1
      %p400 = por %p398, %p399
      %p401 = scmp.ne.s32.totalorder %s392, %s393
      %p402 = scmp.eq.s32.totalorder %s36, 0
      %p403 = por %p401, %p402
      %p404 = scmp.ne.s32.totalorder %s392, %s393
      %p405 = scmp.eq.s32.totalorder %s37, 1
      %p406 = por %p404, %p405
      %p408 = scmp.ne.s32.totalorder %s393, %s407
      %p409 = scmp.eq.s32.totalorder %s37, 0
      %p410 = por %p408, %p409
      %s412 = sadd.s32 %s411, 1
      %p415 = scmp.eq.s32.totalorder %s31, 1
      %p416 = scmp.ne.s32.totalorder %s411, %s413
      %p417 = scmp.eq.s32.totalorder %s31, 0
      %p418 = por %p416, %p417
      %p419 = scmp.ne.s32.totalorder %s411, %s413
      %p420 = scmp.eq.s32.totalorder %s36, 1
      %p421 = por %p419, %p420
      %p422 = scmp.ne.s32.totalorder %s413, %s414
      %p423 = scmp.eq.s32.totalorder %s36, 0
      %p424 = por %p422, %p423
      %p425 = scmp.ne.s32.totalorder %s413, %s414
      %p426 = scmp.eq.s32.totalorder %s37, 1
      %p427 = por %p425, %p426
      %p429 = scmp.ne.s32.totalorder %s414, %s428
      %p430 = scmp.eq.s32.totalorder %s37, 0
      %p431 = por %p429, %p430
      %s433 = sadd.s32 %s432, 1
      %p436 = scmp.eq.s32.totalorder %s31, 1
      %p437 = scmp.ne.s32.totalorder %s432, %s434
      %p438 = scmp.eq.s32.totalorder %s31, 0
      %p439 = por %p437, %p438
      %p440 = scmp.ne.s32.totalorder %s432, %s434
      %p441 = scmp.eq.s32.totalorder %s36, 1
      %p442 = por %p440, %p441
      %p443 = scmp.ne.s32.totalorder %s434, %s435
      %p444 = scmp.eq.s32.totalorder %s36, 0
      %p445 = por %p443, %p444
      %p446 = scmp.ne.s32.totalorder %s434, %s435
      %p447 = scmp.eq.s32.totalorder %s37, 1
      %p448 = por %p446, %p447
      %p450 = scmp.ne.s32.totalorder %s435, %s449
      %p451 = scmp.eq.s32.totalorder %s37, 0
      %p452 = por %p450, %p451
      %s453 = ssub.s32 %s38, %s50
      %s454 = ssub.s32 %s39, %s46
      %s455 = sor.u32 %s453, %s454
      %p456 = scmp.eq.s32.totalorder %s455, 0
      %s458 = sadd.s32 %s457, 1
      %s459 = scalar_select %p456, %s457, %s458
      %p462 = pneg %p456
      %p463 = scmp.eq.s32.totalorder %s31, 1
      %p464 = por %p462, %p463
      %p465 = scmp.ne.s32.totalorder %s457, %s460
      %p466 = scmp.eq.s32.totalorder %s31, 0
      %p467 = por %p465, %p466
      %p468 = scmp.ne.s32.totalorder %s457, %s460
      %p469 = scmp.eq.s32.totalorder %s36, 1
      %p470 = por %p468, %p469
      %p471 = scmp.ne.s32.totalorder %s460, %s461
      %p472 = scmp.eq.s32.totalorder %s36, 0
      %p473 = por %p471, %p472
      %p474 = scmp.ne.s32.totalorder %s460, %s461
      %p475 = scmp.eq.s32.totalorder %s37, 1
      %p476 = por %p474, %p475
      %p478 = scmp.ne.s32.totalorder %s461, %s477
      %p479 = scmp.eq.s32.totalorder %s37, 0
      %p480 = por %p478, %p479
      %p481 = scmp.le.s32.totalorder 1, %s31
      %p482 = scmp.lt.s32.totalorder %s31, 3
      %p483 = pnand %p481, %p482
      %p484 = pneg %p483
      // Predicated region
      $region9: #{tpu_custom_call.1} parent=5 // pred_check
        _
      $region10: #{tpu_custom_call.1} parent=5 // pred_check_branch
        %486 = sbr.rel (%p483) target = $region12
      $region11: #{tpu_custom_call.1} parent=5 // pred_region
        %s487 = ssub.s32 %s31, 1
        // Predicated region
        $region13: #{tpu_custom_call.1} parent=11 // pred_check
          %p488 = pneg %p172
        $region14: #{tpu_custom_call.1} parent=11 // pred_check_branch
          %490 = sbr.rel (%p488) target = $region16
        $region15: #{tpu_custom_call.1} parent=11 // pred_region
          _
        $region16: #{tpu_custom_call.1} parent=11 // pred_fallthru
          _
        // Predicated region
        $region17: #{tpu_custom_call.1} parent=11 // pred_check
          %p491 = pneg %p193
        $region18: #{tpu_custom_call.1} parent=11 // pred_check_branch
          %493 = sbr.rel (%p491) target = $region20
        $region19: #{tpu_custom_call.1} parent=11 // pred_region
          _
        $region20: #{tpu_custom_call.1} parent=11 // pred_fallthru
          _
        // Predicated region
        $region21: #{tpu_custom_call.1} parent=11 // pred_check
          %p494 = pneg %p214
        $region22: #{tpu_custom_call.1} parent=11 // pred_check_branch
          %496 = sbr.rel (%p494) target = $region24
        $region23: #{tpu_custom_call.1} parent=11 // pred_region
          _
        $region24: #{tpu_custom_call.1} parent=11 // pred_fallthru
          _
        // Predicated region
        $region25: #{tpu_custom_call.1} parent=11 // pred_check
          %p497 = pneg %p235
        $region26: #{tpu_custom_call.1} parent=11 // pred_check_branch
          %499 = sbr.rel (%p497) target = $region28
        $region27: #{tpu_custom_call.1} parent=11 // pred_region
          _
        $region28: #{tpu_custom_call.1} parent=11 // pred_fallthru
          _
        // Predicated region
        $region29: #{tpu_custom_call.1} parent=11 // pred_check
          %p500 = pneg %p256
        $region30: #{tpu_custom_call.1} parent=11 // pred_check_branch
          %502 = sbr.rel (%p500) target = $region32
        $region31: #{tpu_custom_call.1} parent=11 // pred_region
          _
        $region32: #{tpu_custom_call.1} parent=11 // pred_fallthru
          _
        // Predicated region
        $region33: #{tpu_custom_call.1} parent=11 // pred_check
          %p503 = pneg %p277
        $region34: #{tpu_custom_call.1} parent=11 // pred_check_branch
          %505 = sbr.rel (%p503) target = $region36
        $region35: #{tpu_custom_call.1} parent=11 // pred_region
          _
        $region36: #{tpu_custom_call.1} parent=11 // pred_fallthru
          _
        // Predicated region
        $region37: #{tpu_custom_call.1} parent=11 // pred_check
          %p506 = pneg %p298
        $region38: #{tpu_custom_call.1} parent=11 // pred_check_branch
          %508 = sbr.rel (%p506) target = $region40
        $region39: #{tpu_custom_call.1} parent=11 // pred_region
          _
        $region40: #{tpu_custom_call.1} parent=11 // pred_fallthru
          _
        // Predicated region
        $region41: #{tpu_custom_call.1} parent=11 // pred_check
          %p509 = pneg %p319
        $region42: #{tpu_custom_call.1} parent=11 // pred_check_branch
          %511 = sbr.rel (%p509) target = $region44
        $region43: #{tpu_custom_call.1} parent=11 // pred_region
          _
        $region44: #{tpu_custom_call.1} parent=11 // pred_fallthru
          _
        // Predicated region
        $region45: #{tpu_custom_call.1} parent=11 // pred_check
          %p512 = pneg %p340
        $region46: #{tpu_custom_call.1} parent=11 // pred_check_branch
          %514 = sbr.rel (%p512) target = $region48
        $region47: #{tpu_custom_call.1} parent=11 // pred_region
          %516 = vsyncadd [#allocation8], 0
          %s517 = sshll.u32 %s12, 4
          %s518 = int_to_ptr.hbm [resolvable:$true] %s517
          %s519 = sshll.u32 [#allocation7], 4
          %s520 = int_to_ptr.vmem [resolvable:$true] %s519
          %525 = dma.hbm_to_vmem [thread:$0]  %s518, 256, %s520, [#allocation8], 64, 64, 4
        $region48: #{tpu_custom_call.1} parent=11 // pred_fallthru
          _
        // Predicated region
        $region49: #{tpu_custom_call.1} parent=11 // pred_check
          %p526 = pneg %p361
        $region50: #{tpu_custom_call.1} parent=11 // pred_check_branch
          %528 = sbr.rel (%p526) target = $region52
        $region51: #{tpu_custom_call.1} parent=11 // pred_region
          %530 = vsyncadd [#allocation8], 0
          %s532 = sshll.u32 %s13, 4
          %s533 = int_to_ptr.hbm [resolvable:$true] %s532
          %s534 = sshll.u32 [#allocation9], 4
          %s535 = int_to_ptr.vmem [resolvable:$true] %s534
          %537 = dma.hbm_to_vmem [thread:$0]  %s533, 16, %s535, [#allocation8]
        $region52: #{tpu_custom_call.1} parent=11 // pred_fallthru
          _
        // Predicated region
        $region53: #{tpu_custom_call.1} parent=11 // pred_check
          %p538 = pneg %p382
        $region54: #{tpu_custom_call.1} parent=11 // pred_check_branch
          %540 = sbr.rel (%p538) target = $region56
        $region55: #{tpu_custom_call.1} parent=11 // pred_region
          _
        $region56: #{tpu_custom_call.1} parent=11 // pred_fallthru
          _
        // Predicated region
        $region57: #{tpu_custom_call.1} parent=11 // pred_check
          %p541 = pneg %p403
        $region58: #{tpu_custom_call.1} parent=11 // pred_check_branch
          %543 = sbr.rel (%p541) target = $region60
        $region59: #{tpu_custom_call.1} parent=11 // pred_region
          _
        $region60: #{tpu_custom_call.1} parent=11 // pred_fallthru
          _
        // Predicated region
        $region61: #{tpu_custom_call.1} parent=11 // pred_check
          %p544 = pneg %p424
        $region62: #{tpu_custom_call.1} parent=11 // pred_check_branch
          %546 = sbr.rel (%p544) target = $region64
        $region63: #{tpu_custom_call.1} parent=11 // pred_region
          _
        $region64: #{tpu_custom_call.1} parent=11 // pred_fallthru
          _
        // Predicated region
        $region65: #{tpu_custom_call.1} parent=11 // pred_check
          %p547 = pneg %p445
        $region66: #{tpu_custom_call.1} parent=11 // pred_check_branch
          %549 = sbr.rel (%p547) target = $region68
        $region67: #{tpu_custom_call.1} parent=11 // pred_region
          _
        $region68: #{tpu_custom_call.1} parent=11 // pred_fallthru
          _
      $region12: #{tpu_custom_call.1} parent=5 // pred_fallthru
        _
      %p550 = scmp.lt.s32.totalorder %s31, 2
      // Predicated region
      $region69: #{tpu_custom_call.1} parent=5 // pred_check
        %p551 = pneg %p550
      $region70: #{tpu_custom_call.1} parent=5 // pred_check_branch
        %553 = sbr.rel (%p551) target = $region72
      $region71: #{tpu_custom_call.1} parent=5 // pred_region
        // Predicated region
        $region73: #{tpu_custom_call.1} parent=71 // pred_check
          %p554 = pneg %p65
        $region74: #{tpu_custom_call.1} parent=71 // pred_check_branch
          %556 = sbr.rel (%p554) target = $region76
        $region75: #{tpu_custom_call.1} parent=71 // pred_region
          %p557 = scmp.lt.s32.totalorder %s38, 1
          %s558 = scalar_select %p557, %s38, 1
          %p559 = scmp.lt.s32.totalorder %s39, 0
          %s560 = scalar_select %p559, %s39, 0
          %s561 = sadd.s32 %s560, %s558
          %s562 = smul.addr %s561, 4
          %s563 = scalar_lea.vmem %s0, %s562
        $region76: #{tpu_custom_call.1} parent=71 // pred_fallthru
          _
        // Predicated region
        $region77: #{tpu_custom_call.1} parent=71 // pred_check
          %p564 = pneg %p91
        $region78: #{tpu_custom_call.1} parent=71 // pred_check_branch
          %566 = sbr.rel (%p564) target = $region80
        $region79: #{tpu_custom_call.1} parent=71 // pred_region
          %s567 = sand.u32 %s81, 1
          %s568 = scalar_lea.sflag [#allocation5], %s567
          %s569 = sand.u32 %s81, 1
          %s570 = smul.addr %s569, 4
          %s571 = scalar_lea.vmem [#allocation4], %s570
          %573 = vsyncadd %s568, 0
          %s574 = smul.addr %s38, 4
          %s575 = scalar_lea.hbm %s1, %s574
          %s577 = sshll.u32 %s575, 4
          %s578 = int_to_ptr.hbm [resolvable:$true] %s577
          %s579 = sshll.u32 %s571, 4
          %s580 = int_to_ptr.vmem [resolvable:$true] %s579
          %582 = dma.hbm_to_vmem [thread:$0]  %s578, 64, %s580, %s568
        $region80: #{tpu_custom_call.1} parent=71 // pred_fallthru
          _
        // Predicated region
        $region81: #{tpu_custom_call.1} parent=71 // pred_check
          %p583 = pneg %p117
        $region82: #{tpu_custom_call.1} parent=71 // pred_check_branch
          %585 = sbr.rel (%p583) target = $region84
        $region83: #{tpu_custom_call.1} parent=71 // pred_region
          %p586 = scmp.lt.s32.totalorder %s38, 1
          %s587 = scalar_select %p586, %s38, 1
          %s588 = scalar_lea.vmem %s2, %s587
        $region84: #{tpu_custom_call.1} parent=71 // pred_fallthru
          _
        // Predicated region
        $region85: #{tpu_custom_call.1} parent=71 // pred_check
          %p589 = pneg %p145
        $region86: #{tpu_custom_call.1} parent=71 // pred_check_branch
          %591 = sbr.rel (%p589) target = $region88
        $region87: #{tpu_custom_call.1} parent=71 // pred_region
          %p592 = scmp.lt.s32.totalorder %s38, 1
          %s593 = scalar_select %p592, %s38, 1
          %p594 = scmp.lt.s32.totalorder %s39, 0
          %s595 = scalar_select %p594, %s39, 0
          %s596 = sadd.s32 %s595, %s593
          %s597 = smul.addr %s596, 8
          %s598 = scalar_lea.vmem %s3, %s597
        $region88: #{tpu_custom_call.1} parent=71 // pred_fallthru
          _
      $region72: #{tpu_custom_call.1} parent=5 // pred_fallthru
        _
      %p599 = scmp.le.s32.totalorder 1, %s31
      %p600 = scmp.lt.s32.totalorder %s31, 3
      %p601 = pnand %p599, %p600
      %p602 = pneg %p601
      // Predicated region
      $region89: #{tpu_custom_call.1} parent=5 // pred_check
        _
      $region90: #{tpu_custom_call.1} parent=5 // pred_check_branch
        %604 = sbr.rel (%p601) target = $region92
      $region91: #{tpu_custom_call.1} parent=5 // pred_region
        %s605 = ssub.s32 %s31, 1
        %s606 = sand.u32 %s84, 1
        %s607 = scalar_lea.sflag [#allocation5], %s606
        %s608 = sand.u32 %s84, 1
        %s609 = smul.addr %s608, 4
        %s610 = scalar_lea.vmem [#allocation4], %s609
        // Predicated region
        $region93: #{tpu_custom_call.1} parent=91 // pred_check
          %p611 = pneg %p97
        $region94: #{tpu_custom_call.1} parent=91 // pred_check_branch
          %613 = sbr.rel (%p611) target = $region96
        $region95: #{tpu_custom_call.1} parent=91 // pred_region
          %615 = dma.done %s607, 64
        $region96: #{tpu_custom_call.1} parent=91 // pred_fallthru
          _
        // Predicated region
        $region97: #{tpu_custom_call.1} parent=91 // pred_check
          %p616 = pneg %p340
        $region98: #{tpu_custom_call.1} parent=91 // pred_check_branch
          %618 = sbr.rel (%p616) target = $region100
        $region99: #{tpu_custom_call.1} parent=91 // pred_region
          %620 = dma.done [#allocation8], 256
        $region100: #{tpu_custom_call.1} parent=91 // pred_fallthru
          _
        // Predicated region
        $region101: #{tpu_custom_call.1} parent=91 // pred_check
          %p621 = pneg %p361
        $region102: #{tpu_custom_call.1} parent=91 // pred_check_branch
          %623 = sbr.rel (%p621) target = $region104
        $region103: #{tpu_custom_call.1} parent=91 // pred_region
          %625 = dma.done [#allocation8], 16
        $region104: #{tpu_custom_call.1} parent=91 // pred_fallthru
          _
        %p626 = scmp.lt.s32.totalorder %s40, 1
        %s627 = scalar_select %p626, %s40, 1
        %p628 = scmp.lt.s32.totalorder %s41, 0
        %s629 = scalar_select %p628, %s41, 0
        %s630 = sadd.s32 %s629, %s627
        %s631 = smul.addr %s630, 4
        %s632 = scalar_lea.vmem %s0, %s631
        %p633 = pneg %p71
        %p634 = pneg %p68
        %s635 = sand.u32 %s84, 1
        %s636 = scalar_lea.sflag [#allocation5], %s635
        %s637 = sand.u32 %s84, 1
        %s638 = smul.addr %s637, 4
        %s639 = scalar_lea.vmem [#allocation4], %s638
        %p640 = pneg %p97
        %p641 = pneg %p94
        %p642 = scmp.lt.s32.totalorder %s40, 1
        %s643 = scalar_select %p642, %s40, 1
        %s644 = scalar_lea.vmem %s2, %s643
        %p645 = pneg %p123
        %p646 = pneg %p120
        %p647 = scmp.lt.s32.totalorder %s40, 1
        %s648 = scalar_select %p647, %s40, 1
        %p649 = scmp.lt.s32.totalorder %s41, 0
        %s650 = scalar_select %p649, %s41, 0
        %s651 = sadd.s32 %s650, %s648
        %s652 = smul.addr %s651, 8
        %s653 = scalar_lea.vmem %s3, %s652
        %p654 = pneg %p151
        %p655 = pneg %p148
        %p656 = pneg %p172
        %p657 = pneg %p169
        %p658 = pneg %p193
        %p659 = pneg %p190
        %p660 = pneg %p214
        %p661 = pneg %p211
        %p662 = pneg %p235
        %p663 = pneg %p232
        %p664 = pneg %p256
        %p665 = pneg %p253
        %p666 = pneg %p277
        %p667 = pneg %p274
        %p668 = pneg %p298
        %p669 = pneg %p295
        %p670 = pneg %p319
        %p671 = pneg %p316
        %p672 = pneg %p340
        %p673 = pneg %p337
        %p674 = pneg %p361
        %p675 = pneg %p358
        %p676 = pneg %p382
        %p677 = pneg %p379
        %p678 = pneg %p403
        %p679 = pneg %p400
        %p680 = pneg %p424
        %p681 = pneg %p421
        %p682 = pneg %p445
        %p683 = pneg %p442
        %p684 = pneg %p473
        %p685 = pneg %p470
        %s686 = sand.u32 %s460, 1
        %s687 = scalar_lea.sflag [#allocation6], %s686
        %s688 = sand.u32 %s460, 1
        %s689 = smul.addr %s688, 8
        %s690 = scalar_lea.vmem [#allocation10], %s689
        %p691 = scmp.lt.s32.totalorder %s40, 1
        %s692 = scalar_select %p691, %s40, 1
        %p693 = scmp.lt.s32.totalorder %s41, 0
        %s694 = scalar_select %p693, %s41, 0
        %s695 = sadd.s32 %s694, %s692
        %s696 = smul.addr %s695, 4
        %s697 = scalar_lea.vmem %s0, %s696
        %p698 = scmp.lt.s32.totalorder %s40, 1
        %s699 = scalar_select %p698, %s40, 1
        %s700 = scalar_lea.vmem %s2, %s699
        %p701 = scmp.lt.s32.totalorder %s40, 1
        %s702 = scalar_select %p701, %s40, 1
        %p703 = scmp.lt.s32.totalorder %s41, 0
        %s704 = scalar_select %p703, %s41, 0
        %s705 = sadd.s32 %s704, %s702
        %s706 = smul.addr %s705, 8
        %s707 = scalar_lea.vmem %s3, %s706
        %p709 = scmp.eq.s32.totalorder %s41, 0
        // Predicated region
        $region105: #{tpu_custom_call.1} parent=91 // pred_check
          %p710 = pneg %p709
        $region106: #{tpu_custom_call.1} parent=91 // pred_check_branch
          %712 = sbr.rel (%p710) target = $region108
        $region107: #{tpu_custom_call.1} parent=91 // pred_region
          %v713 = vld [vmem:[%s610] sm:$0xf]
          %v714 = vld [vmem:[%s6] sm:$0xf]
          %v715 = vld [vmem:[%s6 + $0x4] sm:$0xf]
          %v716 = vld [vmem:[%s6 + $0x8] sm:$0xf]
          %v717 = vld [vmem:[%s6 + $0xc] sm:$0xf]
          %v718 = vld [vmem:[%s7] sm:$0x1]
          %v720 = vperm.slane %v718, 0
          %v726 = vunpack.c.l.b16 %v714
          %v727 = vunpack.c.l.b16 %v715
          %v728 = vunpack.c.l.b16 %v716
          %v729 = vunpack.c.l.b16 %v717
          %v730 = vpack.c.b16 %v727, %v726
          %v731 = vpack.c.b16 %v729, %v728
          %vm734 = vcmask 261120
          %v736 = vsel %vm734, %v713, 0
          %738 = vmatpush.bf16.msra.mxu0 0
          %739 = vmatpush.bf16.msra.mxu0 0
          %740 = vmatpush.bf16.msra.mxu0 0
          %741 = vmatpush.bf16.msra.mxu0 0
          %742 = vmatpush.bf16.msra.mxu0 0
          %743 = vmatpush.bf16.msra.mxu0 0
          %744 = vmatpush.bf16.msra.mxu0 %v731
          %745 = vmatpush.bf16.msra.mxu0 %v730
          %746 = vmatmul.bf16.gmra.mxu0 %v736
          %v747 = vpop.f32.mrf.mxu0
          %v748 = vadd.f32 %v720, %v747
          %v749 = vpop.f32.mrf.mxu0
          %750 = vdwg.mxu0
          %v751 = vpack.c.bf16 %v748, %v748
          %vm752 = vcmask 519168
          %753 = vst.msk [vmem:[#allocation2] sm:$0xf] %vm752, %v751
        $region108: #{tpu_custom_call.1} parent=91 // pred_fallthru
          _
        %v754 = vld [vmem:[%s697] sm:$0xf]
        %v755 = vld [vmem:[%s4] sm:$0xf]
        %v756 = vld [vmem:[%s4 + $0x4] sm:$0xf]
        %v757 = vld [vmem:[%s4 + $0x8] sm:$0xf]
        %v758 = vld [vmem:[%s4 + $0xc] sm:$0xf]
        %v759 = vld [vmem:[%s5] sm:$0x1]
        %v761 = vperm.slane %v759, 0
        %v767 = vunpack.c.l.b16 %v755
        %v768 = vunpack.c.l.b16 %v756
        %v769 = vunpack.c.l.b16 %v757
        %v770 = vunpack.c.l.b16 %v758
        %v771 = vpack.c.b16 %v768, %v767
        %v772 = vpack.c.b16 %v770, %v769
        %vm775 = vcmask 261120
        %v777 = vsel %vm775, %v754, 0
        %779 = vmatpush.bf16.msra.mxu0 0
        %780 = vmatpush.bf16.msra.mxu0 0
        %781 = vmatpush.bf16.msra.mxu0 0
        %782 = vmatpush.bf16.msra.mxu0 0
        %783 = vmatpush.bf16.msra.mxu0 0
        %784 = vmatpush.bf16.msra.mxu0 0
        %785 = vmatpush.bf16.msra.mxu0 %v772
        %786 = vmatpush.bf16.msra.mxu0 %v771
        %787 = vmatmul.bf16.gmra.mxu0 %v777
        %v788 = vpop.f32.mrf.mxu0
        %v789 = vadd.f32 %v761, %v788
        %v790 = vpop.f32.mrf.mxu0
        %791 = vdwg.mxu0
        %v792 = vmul.f32 %v789, 0.35355338
        %v793 = vpack.c.bf16 %v792, %v792
        %v794 = vld [vmem:[%s700] sm:$0x1]
        %vm795 = vcmp.gt.f32.partialorder %v794, 0.0
        %v796 = vsel %vm795, -1e+09, 0.0
        %v797 = vld [vmem:[#allocation2] sm:$0xf]
        %v799 = vperm.slane %v796, 0
        %vm801 = vcmask 64512
        %v803 = vsel %vm801, %v793, 0
        %v806 = vsel %vm801, %v797, 0
        %808 = vmatpush.bf16.xpose.msra.mxu0 0
        %809 = vmatpush.bf16.xpose.msra.mxu0 0
        %810 = vmatpush.bf16.xpose.msra.mxu0 0
        %811 = vmatpush.bf16.xpose.msra.mxu0 0
        %812 = vmatpush.bf16.xpose.msra.mxu0 0
        %813 = vmatpush.bf16.xpose.msra.mxu0 0
        %814 = vmatpush.bf16.xpose.msra.mxu0 0
        %815 = vmatpush.bf16.xpose.msra.mxu0 %v806
        %816 = vmatmul.bf16.gmra.mxu0 %v803
        %v817 = vpop.f32.mrf.mxu0
        %v818 = vadd.f32 %v799, %v817
        %v819 = vpop.f32.mrf.mxu0
        %820 = vdwg.mxu0
        %v821 = vsel %vm801, %v818, -inf
        %822 = vmax.xlane.f32.xlu0 %v821
        %v823 = vpop.xlane.xlu0 %822
        %v824 = vsub.f32 %v818, %v823
        %v825 = vmul.f32 %v824, 1.442695
        %v826 = vpow.pop %v825
        %v827 = vsel %vm801, %v826, 0.0
        %828 = vadd.xlane.f32.xlu0 %v827
        %v829 = vpop.xlane.xlu0 %828
        %v830 = vrcp.pop %v829
        %v831 = vmul.f32 %v826, %v830
        %v832 = vpack.c.bf16 %v831, %v831
        %v834 = vunpack.c.l.b16 %v797
        %v835 = vpack.c.b16 %v834, %v834
        %836 = vrot.lane.b32.xlu0 %v835, 96
        %v837 = vpop.permute.xlu0 %836
        %v839 = vsel %vm801, %v832, 0
        %vm841 = vcmask 1043456
        %v843 = vsel %vm841, %v837, 0
        %845 = vmatpush.bf16.msra.mxu0 0
        %846 = vmatpush.bf16.msra.mxu0 0
        %847 = vmatpush.bf16.msra.mxu0 0
        %848 = vmatpush.bf16.msra.mxu0 0
        %849 = vmatpush.bf16.msra.mxu0 0
        %850 = vmatpush.bf16.msra.mxu0 0
        %851 = vmatpush.bf16.msra.mxu0 0
        %852 = vmatpush.bf16.msra.mxu0 %v843
        %853 = vmatmul.bf16.gmra.mxu0 %v839
        %v854 = vpop.f32.mrf.mxu0
        %v855 = vadd.f32 0.0, %v854
        %v856 = vpop.f32.mrf.mxu0
        %857 = vdwg.mxu0
        %858 = vst.msk [vmem:[#allocation3] sm:$0xff] %vm801, %v855
        %v859 = vld [vmem:[#allocation2] sm:$0xf]
        %v861 = vunpack.c.l.b16 %v793
        %v862 = vpack.c.b16 %v861, %v861
        %863 = vrot.lane.b32.xlu0 %v862, 120
        %v864 = vpop.permute.xlu0 %863
        %v866 = vunpack.c.l.b16 %v859
        %v867 = vpack.c.b16 %v866, %v866
        %868 = vrot.lane.b32.xlu0 %v867, 120
        %v869 = vpop.permute.xlu0 %868
        %v871 = vsel %vm801, %v864, 0
        %v874 = vsel %vm801, %v869, 0
        %876 = vmatpush.bf16.xpose.msra.mxu0 0
        %877 = vmatpush.bf16.xpose.msra.mxu0 0
        %878 = vmatpush.bf16.xpose.msra.mxu0 0
        %879 = vmatpush.bf16.xpose.msra.mxu0 0
        %880 = vmatpush.bf16.xpose.msra.mxu0 0
        %881 = vmatpush.bf16.xpose.msra.mxu0 0
        %882 = vmatpush.bf16.xpose.msra.mxu0 0
        %883 = vmatpush.bf16.xpose.msra.mxu0 %v874
        %884 = vmatmul.bf16.gmra.mxu0 %v871
        %v885 = vpop.f32.mrf.mxu0
        %v886 = vadd.f32 %v799, %v885
        %v887 = vpop.f32.mrf.mxu0
        %888 = vdwg.mxu0
        %v889 = vsel %vm801, %v886, -inf
        %890 = vmax.xlane.f32.xlu0 %v889
        %v891 = vpop.xlane.xlu0 %890
        %v892 = vsub.f32 %v886, %v891
        %v893 = vmul.f32 %v892, 1.442695
        %v894 = vpow.pop %v893
        %v895 = vsel %vm801, %v894, 0.0
        %896 = vadd.xlane.f32.xlu0 %v895
        %v897 = vpop.xlane.xlu0 %896
        %v898 = vrcp.pop %v897
        %v899 = vmul.f32 %v894, %v898
        %v900 = vpack.c.bf16 %v899, %v899
        %901 = vrot.lane.b32.xlu0 %v867, 88
        %v902 = vpop.permute.xlu0 %901
        %v904 = vsel %vm801, %v900, 0
        %v907 = vsel %vm841, %v902, 0
        %909 = vmatpush.bf16.msra.mxu0 0
        %910 = vmatpush.bf16.msra.mxu0 0
        %911 = vmatpush.bf16.msra.mxu0 0
        %912 = vmatpush.bf16.msra.mxu0 0
        %913 = vmatpush.bf16.msra.mxu0 0
        %914 = vmatpush.bf16.msra.mxu0 0
        %915 = vmatpush.bf16.msra.mxu0 0
        %916 = vmatpush.bf16.msra.mxu0 %v907
        %917 = vmatmul.bf16.gmra.mxu0 %v904
        %v918 = vpop.f32.mrf.mxu0
        %v919 = vadd.f32 0.0, %v918
        %v920 = vpop.f32.mrf.mxu0
        %921 = vdwg.mxu0
        %923 = vrot.lane.b32.xlu0 %v919, 8
        %v924 = vpop.permute.xlu0 %923
        %vm926 = vcmask 130112
        %927 = vst.msk [vmem:[#allocation3] sm:$0xff] %vm926, %v924
        %v928 = vld [vmem:[#allocation2] sm:$0xf]
        %929 = vrot.lane.b32.xlu0 %v862, 112
        %v930 = vpop.permute.xlu0 %929
        %v932 = vunpack.c.l.b16 %v928
        %v933 = vpack.c.b16 %v932, %v932
        %934 = vrot.lane.b32.xlu0 %v933, 112
        %v935 = vpop.permute.xlu0 %934
        %v937 = vsel %vm801, %v930, 0
        %v940 = vsel %vm801, %v935, 0
        %942 = vmatpush.bf16.xpose.msra.mxu0 0
        %943 = vmatpush.bf16.xpose.msra.mxu0 0
        %944 = vmatpush.bf16.xpose.msra.mxu0 0
        %945 = vmatpush.bf16.xpose.msra.mxu0 0
        %946 = vmatpush.bf16.xpose.msra.mxu0 0
        %947 = vmatpush.bf16.xpose.msra.mxu0 0
        %948 = vmatpush.bf16.xpose.msra.mxu0 0
        %949 = vmatpush.bf16.xpose.msra.mxu0 %v940
        %950 = vmatmul.bf16.gmra.mxu0 %v937
        %v951 = vpop.f32.mrf.mxu0
        %v952 = vadd.f32 %v799, %v951
        %v953 = vpop.f32.mrf.mxu0
        %954 = vdwg.mxu0
        %v955 = vsel %vm801, %v952, -inf
        %956 = vmax.xlane.f32.xlu0 %v955
        %v957 = vpop.xlane.xlu0 %956
        %v958 = vsub.f32 %v952, %v957
        %v959 = vmul.f32 %v958, 1.442695
        %v960 = vpow.pop %v959
        %v961 = vsel %vm801, %v960, 0.0
        %962 = vadd.xlane.f32.xlu0 %v961
        %v963 = vpop.xlane.xlu0 %962
        %v964 = vrcp.pop %v963
        %v965 = vmul.f32 %v960, %v964
        %v966 = vpack.c.bf16 %v965, %v965
        %967 = vrot.lane.b32.xlu0 %v933, 80
        %v968 = vpop.permute.xlu0 %967
        %v970 = vsel %vm801, %v966, 0
        %v973 = vsel %vm841, %v968, 0
        %975 = vmatpush.bf16.msra.mxu0 0
        %976 = vmatpush.bf16.msra.mxu0 0
        %977 = vmatpush.bf16.msra.mxu0 0
        %978 = vmatpush.bf16.msra.mxu0 0
        %979 = vmatpush.bf16.msra.mxu0 0
        %980 = vmatpush.bf16.msra.mxu0 0
        %981 = vmatpush.bf16.msra.mxu0 0
        %982 = vmatpush.bf16.msra.mxu0 %v973
        %983 = vmatmul.bf16.gmra.mxu0 %v970
        %v984 = vpop.f32.mrf.mxu0
        %v985 = vadd.f32 0.0, %v984
        %v986 = vpop.f32.mrf.mxu0
        %987 = vdwg.mxu0
        %989 = vrot.lane.b32.xlu0 %v985, 16
        %v990 = vpop.permute.xlu0 %989
        %vm992 = vcmask 195712
        %993 = vst.msk [vmem:[#allocation3] sm:$0xff] %vm992, %v990
        %v994 = vld [vmem:[#allocation2] sm:$0xf]
        %995 = vrot.lane.b32.xlu0 %v862, 104
        %v996 = vpop.permute.xlu0 %995
        %v998 = vunpack.c.l.b16 %v994
        %v999 = vpack.c.b16 %v998, %v998
        %1000 = vrot.lane.b32.xlu0 %v999, 104
        %v1001 = vpop.permute.xlu0 %1000
        %v1003 = vsel %vm801, %v996, 0
        %v1006 = vsel %vm801, %v1001, 0
        %1008 = vmatpush.bf16.xpose.msra.mxu0 0
        %1009 = vmatpush.bf16.xpose.msra.mxu0 0
        %1010 = vmatpush.bf16.xpose.msra.mxu0 0
        %1011 = vmatpush.bf16.xpose.msra.mxu0 0
        %1012 = vmatpush.bf16.xpose.msra.mxu0 0
        %1013 = vmatpush.bf16.xpose.msra.mxu0 0
        %1014 = vmatpush.bf16.xpose.msra.mxu0 0
        %1015 = vmatpush.bf16.xpose.msra.mxu0 %v1006
        %1016 = vmatmul.bf16.gmra.mxu0 %v1003
        %v1017 = vpop.f32.mrf.mxu0
        %v1018 = vadd.f32 %v799, %v1017
        %v1019 = vpop.f32.mrf.mxu0
        %1020 = vdwg.mxu0
        %v1021 = vsel %vm801, %v1018, -inf
        %1022 = vmax.xlane.f32.xlu0 %v1021
        %v1023 = vpop.xlane.xlu0 %1022
        %v1024 = vsub.f32 %v1018, %v1023
        %v1025 = vmul.f32 %v1024, 1.442695
        %v1026 = vpow.pop %v1025
        %v1027 = vsel %vm801, %v1026, 0.0
        %1028 = vadd.xlane.f32.xlu0 %v1027
        %v1029 = vpop.xlane.xlu0 %1028
        %v1030 = vrcp.pop %v1029
        %v1031 = vmul.f32 %v1026, %v1030
        %v1032 = vpack.c.bf16 %v1031, %v1031
        %1033 = vrot.lane.b32.xlu0 %v999, 72
        %v1034 = vpop.permute.xlu0 %1033
        %v1036 = vsel %vm801, %v1032, 0
        %v1039 = vsel %vm841, %v1034, 0
        %1041 = vmatpush.bf16.msra.mxu0 0
        %1042 = vmatpush.bf16.msra.mxu0 0
        %1043 = vmatpush.bf16.msra.mxu0 0
        %1044 = vmatpush.bf16.msra.mxu0 0
        %1045 = vmatpush.bf16.msra.mxu0 0
        %1046 = vmatpush.bf16.msra.mxu0 0
        %1047 = vmatpush.bf16.msra.mxu0 0
        %1048 = vmatpush.bf16.msra.mxu0 %v1039
        %1049 = vmatmul.bf16.gmra.mxu0 %v1036
        %v1050 = vpop.f32.mrf.mxu0
        %v1051 = vadd.f32 0.0, %v1050
        %v1052 = vpop.f32.mrf.mxu0
        %1053 = vdwg.mxu0
        %1055 = vrot.lane.b32.xlu0 %v1051, 24
        %v1056 = vpop.permute.xlu0 %1055
        %vm1058 = vcmask 261312
        %1059 = vst.msk [vmem:[#allocation3] sm:$0xff] %vm1058, %v1056
        %v1060 = vld [vmem:[#allocation3] sm:$0xff]
        %v1061 = vpack.c.bf16 %v1060, %v1060
        %v1062 = vld [vmem:[%s8] sm:$0xf]
        %v1063 = vld [vmem:[%s8 + $0x4] sm:$0xf]
        %v1064 = vld [vmem:[%s8 + $0x8] sm:$0xf]
        %v1065 = vld [vmem:[%s8 + $0xc] sm:$0xf]
        %v1066 = vld [vmem:[%s9] sm:$0x1]
        %v1068 = vperm.slane %v1066, 0
        %v1074 = vunpack.c.l.b16 %v1062
        %v1075 = vunpack.c.l.b16 %v1063
        %v1076 = vunpack.c.l.b16 %v1064
        %v1077 = vunpack.c.l.b16 %v1065
        %v1078 = vpack.c.b16 %v1075, %v1074
        %v1079 = vpack.c.b16 %v1077, %v1076
        %v1083 = vsel %vm775, %v1061, 0
        %1085 = vmatpush.bf16.msra.mxu0 0
        %1086 = vmatpush.bf16.msra.mxu0 0
        %1087 = vmatpush.bf16.msra.mxu0 0
        %1088 = vmatpush.bf16.msra.mxu0 0
        %1089 = vmatpush.bf16.msra.mxu0 0
        %1090 = vmatpush.bf16.msra.mxu0 0
        %1091 = vmatpush.bf16.msra.mxu0 %v1079
        %1092 = vmatpush.bf16.msra.mxu0 %v1078
        %1093 = vmatmul.bf16.gmra.mxu0 %v1083
        %v1094 = vpop.f32.mrf.mxu0
        %v1095 = vadd.f32 %v1068, %v1094
        %v1096 = vpop.f32.mrf.mxu0
        %1097 = vdwg.mxu0
        %v1098 = vunpack.c.l.bf16 %v754
        %v1099 = vadd.f32 %v1095, %v1098
        %v1100 = vsel %vm775, %v1099, 0.0
        %1101 = vadd.xlane.f32.xlu0 %v1100
        %v1102 = vpop.xlane.xlu0 %1101
        %v1103 = vrcp.pop 32.0
        %v1104 = vmul.f32 32.0, %v1103
        %v1105 = vsub.f32 1.0, %v1104
        %v1106 = vmul.f32 %v1103, %v1105
        %v1107 = vadd.f32 %v1103, %v1106
        %vm1108 = vweird.f32 %v1103
        %v1109 = vsel %vm1108, %v1103, %v1107
        %v1110 = vmul.f32 %v1102, %v1109
        %v1111 = vsub.f32 %v1099, %v1110
        %v1112 = vmul.f32 %v1111, %v1111
        %v1113 = vsel %vm775, %v1112, 0.0
        %1114 = vadd.xlane.f32.xlu0 %v1113
        %v1115 = vpop.xlane.xlu0 %1114
        %v1116 = vmul.f32 %v1115, %v1109
        %v1117 = vadd.f32 %v1116, 1e-05
        %v1118 = vrsqrt.pop %v1117
        %v1119 = vmul.f32 %v1118, %v1117
        %v1120 = vmul.f32 %v1119, %v1118
        %v1121 = vmul.f32 0.5, %v1120
        %v1122 = vsub.f32 1.5, %v1121
        %v1123 = vmul.f32 %v1118, %v1122
        %vm1124 = vweird.f32 %v1117
        %vm1125 = vweird.f32 %v1118
        %vm1126 = vmor %vm1124, %vm1125
        %v1127 = vsel %vm1126, %v1118, %v1123
        %v1128 = vmul.f32 %v1111, %v1127
        %v1129 = vld [vmem:[%s10] sm:$0x1]
        %v1131 = vperm.slane %v1129, 0
        %v1133 = vmul.f32 %v1128, %v1131
        %v1134 = vld [vmem:[%s11] sm:$0x1]
        %v1136 = vperm.slane %v1134, 0
        %v1138 = vadd.f32 %v1133, %v1136
        %v1139 = vld [vmem:[%s707] sm:$0xff]
        %1141 = vset.pattern.permute.xlu0 0
        %1142 = vperm.xlu0 %1141, %v1139
        %v1143 = vpop.permute.xlu0 %1142
        %v1145 = vmul.f32 %v1138, %v1143
        %v1146 = vpack.c.bf16 %v1145, %v1145
        %v1147 = vld [vmem:[#allocation7] sm:$0xf]
        %v1148 = vld [vmem:[#allocation7 + $0x4] sm:$0xf]
        %v1149 = vld [vmem:[#allocation7 + $0x8] sm:$0xf]
        %v1150 = vld [vmem:[#allocation7 + $0xc] sm:$0xf]
        %v1151 = vld [vmem:[#allocation9] sm:$0x1]
        %v1153 = vperm.slane %v1151, 0
        %v1159 = vunpack.c.l.b16 %v1147
        %v1160 = vunpack.c.l.b16 %v1148
        %v1161 = vunpack.c.l.b16 %v1149
        %v1162 = vunpack.c.l.b16 %v1150
        %v1163 = vpack.c.b16 %v1160, %v1159
        %v1164 = vpack.c.b16 %v1162, %v1161
        %v1168 = vsel %vm775, %v1146, 0
        %1170 = vmatpush.bf16.msra.mxu0 0
        %1171 = vmatpush.bf16.msra.mxu0 0
        %1172 = vmatpush.bf16.msra.mxu0 0
        %1173 = vmatpush.bf16.msra.mxu0 0
        %1174 = vmatpush.bf16.msra.mxu0 0
        %1175 = vmatpush.bf16.msra.mxu0 0
        %1176 = vmatpush.bf16.msra.mxu0 %v1164
        %1177 = vmatpush.bf16.msra.mxu0 %v1163
        %1178 = vmatmul.bf16.gmra.mxu0 %v1168
        %v1179 = vpop.f32.mrf.mxu0
        %v1180 = vadd.f32 %v1153, %v1179
        %v1181 = vpop.f32.mrf.mxu0
        %1182 = vdwg.mxu0
        %v1183 = vmax.f32 %v1180, 0.0
        %v1184 = vpack.c.bf16 %v1183, %v1183
        %v1185 = vld [vmem:[%s14] sm:$0xf]
        %v1186 = vld [vmem:[%s14 + $0x4] sm:$0xf]
        %v1187 = vld [vmem:[%s14 + $0x8] sm:$0xf]
        %v1188 = vld [vmem:[%s14 + $0xc] sm:$0xf]
        %v1189 = vld [vmem:[%s14 + $0x10] sm:$0xf]
        %v1190 = vld [vmem:[%s14 + $0x14] sm:$0xf]
        %v1191 = vld [vmem:[%s14 + $0x18] sm:$0xf]
        %v1192 = vld [vmem:[%s14 + $0x1c] sm:$0xf]
        %v1193 = vld [vmem:[%s15] sm:$0x1]
        %v1195 = vperm.slane %v1193, 0
        %v1205 = vunpack.c.l.b16 %v1185
        %v1206 = vunpack.c.l.b16 %v1186
        %v1207 = vunpack.c.l.b16 %v1187
        %v1208 = vunpack.c.l.b16 %v1188
        %v1209 = vunpack.c.l.b16 %v1189
        %v1210 = vunpack.c.l.b16 %v1190
        %v1211 = vunpack.c.l.b16 %v1191
        %v1212 = vunpack.c.l.b16 %v1192
        %v1213 = vpack.c.b16 %v1206, %v1205
        %v1214 = vpack.c.b16 %v1208, %v1207
        %v1215 = vpack.c.b16 %v1210, %v1209
        %v1216 = vpack.c.b16 %v1212, %v1211
        %vm1221 = vcmask 523264
        %v1223 = vsel %vm1221, %v1184, 0
        %1225 = vmatpush.bf16.msra.mxu0 0
        %1226 = vmatpush.bf16.msra.mxu0 0
        %1227 = vmatpush.bf16.msra.mxu0 0
        %1228 = vmatpush.bf16.msra.mxu0 0
        %1229 = vmatpush.bf16.msra.mxu0 %v1216
        %1230 = vmatpush.bf16.msra.mxu0 %v1215
        %1231 = vmatpush.bf16.msra.mxu0 %v1214
        %1232 = vmatpush.bf16.msra.mxu0 %v1213
        %1233 = vmatmul.bf16.gmra.mxu0 %v1223
        %v1234 = vpop.f32.mrf.mxu0
        %v1235 = vadd.f32 %v1195, %v1234
        %v1236 = vpop.f32.mrf.mxu0
        %1237 = vdwg.mxu0
        %v1238 = vadd.f32 %v1235, %v1145
        %v1239 = vsel %vm775, %v1238, 0.0
        %1240 = vadd.xlane.f32.xlu0 %v1239
        %v1241 = vpop.xlane.xlu0 %1240
        %v1242 = vmul.f32 %v1241, %v1109
        %v1243 = vsub.f32 %v1238, %v1242
        %v1244 = vmul.f32 %v1243, %v1243
        %v1245 = vsel %vm775, %v1244, 0.0
        %1246 = vadd.xlane.f32.xlu0 %v1245
        %v1247 = vpop.xlane.xlu0 %1246
        %v1248 = vmul.f32 %v1247, %v1109
        %v1249 = vadd.f32 %v1248, 1e-05
        %v1250 = vrsqrt.pop %v1249
        %v1251 = vmul.f32 %v1250, %v1249
        %v1252 = vmul.f32 %v1251, %v1250
        %v1253 = vmul.f32 0.5, %v1252
        %v1254 = vsub.f32 1.5, %v1253
        %v1255 = vmul.f32 %v1250, %v1254
        %vm1256 = vweird.f32 %v1249
        %vm1257 = vweird.f32 %v1250
        %vm1258 = vmor %vm1256, %vm1257
        %v1259 = vsel %vm1258, %v1250, %v1255
        %v1260 = vmul.f32 %v1243, %v1259
        %v1261 = vld [vmem:[%s16] sm:$0x1]
        %v1263 = vperm.slane %v1261, 0
        %v1265 = vmul.f32 %v1260, %v1263
        %v1266 = vld [vmem:[%s17] sm:$0x1]
        %v1268 = vperm.slane %v1266, 0
        %v1270 = vadd.f32 %v1265, %v1268
        %v1271 = vmul.f32 %v1270, %v1143
        %1272 = vst.msk [vmem:[%s690] sm:$0xff] %vm775, %v1271
        %s1273 = sand.u32 %s460, 1
        %s1274 = scalar_lea.sflag [#allocation6], %s1273
        %s1275 = sand.u32 %s460, 1
        %s1276 = smul.addr %s1275, 8
        %s1277 = scalar_lea.vmem [#allocation10], %s1276
        // Predicated region
        $region109: #{tpu_custom_call.1} parent=91 // pred_check
          %p1278 = pneg %p470
        $region110: #{tpu_custom_call.1} parent=91 // pred_check_branch
          %1280 = sbr.rel (%p1278) target = $region112
        $region111: #{tpu_custom_call.1} parent=91 // pred_region
          %1282 = vsyncadd %s1274, 0
          %s1283 = sadd.s32 %s41, %s40
          %s1284 = smul.addr %s1283, 8
          %s1285 = scalar_lea.hbm %s18, %s1284
          %s1287 = sshll.u32 %s1277, 4
          %s1288 = int_to_ptr.vmem [resolvable:$true] %s1287
          %s1289 = sshll.u32 %s1285, 4
          %s1290 = int_to_ptr.hbm [resolvable:$true] %s1289
          %1292 = dma.vmem_to_hbm [thread:$0]  %s1288, 128, %s1290, %s1274
        $region112: #{tpu_custom_call.1} parent=91 // pred_fallthru
          _
      $region92: #{tpu_custom_call.1} parent=5 // pred_fallthru
        _
      %p1293 = scmp.le.s32.totalorder 2, %s31
      // Predicated region
      $region113: #{tpu_custom_call.1} parent=5 // pred_check
        %p1294 = pneg %p1293
      $region114: #{tpu_custom_call.1} parent=5 // pred_check_branch
        %1296 = sbr.rel (%p1294) target = $region116
      $region115: #{tpu_custom_call.1} parent=5 // pred_region
        %s1297 = ssub.s32 %s31, 2
        // Predicated region
        $region117: #{tpu_custom_call.1} parent=115 // pred_check
          %p1298 = pneg %p476
        $region118: #{tpu_custom_call.1} parent=115 // pred_check_branch
          %1300 = sbr.rel (%p1298) target = $region120
        $region119: #{tpu_custom_call.1} parent=115 // pred_region
          %s1301 = sand.u32 %s461, 1
          %s1302 = scalar_lea.sflag [#allocation6], %s1301
          %s1303 = sand.u32 %s461, 1
          %s1304 = smul.addr %s1303, 8
          %s1305 = scalar_lea.vmem [#allocation10], %s1304
          %1307 = dma.done %s1302, 128
        $region120: #{tpu_custom_call.1} parent=115 // pred_fallthru
          _
      $region116: #{tpu_custom_call.1} parent=5 // pred_fallthru
        _
    $region6: #{tpu_custom_call.1} parent=1 // loop_footer
      %s35 = sadd.s32 1, %s31
    $region7: #{tpu_custom_call.1} parent=1 // loop_footer_branch
      %30 = sbr.rel target = $region3
    $region8: #{tpu_custom_call.1} parent=1 // loop_exit
      _
    %1308 = vsyncpa [#allocation5], 1
    %s1309 = scalar_lea.sflag [#allocation5], 1
    %1310 = vsyncpa %s1309, 1
    %1311 = vsyncpa [#allocation8], 1
    %1312 = vsyncpa [#allocation6], 1
    %s1313 = scalar_lea.sflag [#allocation6], 1
    %1314 = vsyncpa %s1313, 1

// kernel: tpu_custom_call.1
$region0: #{tpu_custom_call.1}
  #allocation0 [shape = 'u32[]', space=smem, size = 0x4, offset = 0x4, fixed_abs, tag = 'smem constant byte address 0x4 - core index']
  #allocation1 [shape = 'u32[72,128]{1,0:T(1,128)}', space=vmem, size = 0x9000, scoped, tag = 'internal scratch']
  #allocation2 [shape = 'bf16[8,64]{1,0:T(8,128)(2,1)}', space=vmem, size = 0x800, scoped, tag = 'scratch operand']
  #allocation3 [shape = 'f32[8,32]{1,0:T(8,128)}', space=vmem, size = 0x1000, scoped, tag = 'scratch operand']
  %s0 = inlined_call_operand.vmem [shape: bf16[2,8,32], index: 0, kind: input, shape index: {}]
  %s1 = inlined_call_operand.hbm [shape: bf16[2,8,32], index: 1, kind: input, shape index: {}]
  %s2 = inlined_call_operand.vmem [shape: f32[2,1,8], index: 2, kind: input, shape index: {}]
  %s3 = inlined_call_operand.vmem [shape: f32[2,8,1], index: 3, kind: input, shape index: {}]
  %s4 = inlined_call_operand.vmem [shape: bf16[32,32], index: 4, kind: input, shape index: {}]
  %s5 = inlined_call_operand.vmem [shape: f32[1,32], index: 5, kind: input, shape index: {}]
  %s6 = inlined_call_operand.vmem [shape: bf16[32,64], index: 6, kind: input, shape index: {}]
  %s7 = inlined_call_operand.vmem [shape: f32[1,64], index: 7, kind: input, shape index: {}]
  %s8 = inlined_call_operand.vmem [shape: bf16[32,32], index: 8, kind: input, shape index: {}]
  %s9 = inlined_call_operand.vmem [shape: f32[1,32], index: 9, kind: input, shape index: {}]
  %s10 = inlined_call_operand.vmem [shape: f32[1,32], index: 10, kind: input, shape index: {}]
  %s11 = inlined_call_operand.vmem [shape: f32[1,32], index: 11, kind: input, shape index: {}]
  %s12 = inlined_call_operand.hbm [shape: bf16[32,64], index: 12, kind: input, shape index: {}]
  %s13 = inlined_call_operand.hbm [shape: f32[1,64], index: 13, kind: input, shape index: {}]
  %s14 = inlined_call_operand.vmem [shape: bf16[64,32], index: 14, kind: input, shape index: {}]
  %s15 = inlined_call_operand.vmem [shape: f32[1,32], index: 15, kind: input, shape index: {}]
  %s16 = inlined_call_operand.vmem [shape: f32[1,32], index: 16, kind: input, shape index: {}]
  %s17 = inlined_call_operand.vmem [shape: f32[1,32], index: 17, kind: input, shape index: {}]
  %s18 = inlined_call_operand.hbm [shape: f32[2,8,32], index: 18, kind: output, shape index: {}]
  %s19 = sld [smem:[#allocation0]]
  $region121: #{tpu_custom_call.1} parent=0
    _
  %s21 = ssub.s32 1, %s19
  %s22 = scalar_select 0, %s21, %s19
  $region1: #{tpu_custom_call.1} parent=0
    #allocation4 [shape = 'u8[4096]{0}', space=vmem, size = 0x1000, scoped, tag = 'input window, operand 1']
    #allocation5 [shape = 's32[2]{0}', space=sflag, size = 0x8, scoped, tag = 'scoped memory for tpu_custom_call.1']
    #allocation6 [shape = 's32[2]{0}', space=sflag, size = 0x8, scoped, tag = 'scoped memory for tpu_custom_call.1']
    #allocation7 [shape = 'u8[8192]{0}', space=vmem, size = 0x2000, scoped, tag = 'input window, operand 12, single buffered']
    #allocation8 [shape = 's32[1]{0}', space=sflag, size = 0x4, scoped, tag = 'scoped memory for tpu_custom_call.1']
    #allocation9 [shape = 'u8[512]{0}', space=vmem, size = 0x400, scoped, tag = 'input window, operand 13, single buffered']
    #allocation10 [shape = 'u8[8192]{0}', space=vmem, size = 0x2000, scoped, tag = 'output window, operand 0']
    %23 = vsyncpa [#allocation5], 0
    %s24 = scalar_lea.sflag [#allocation5], 1
    %25 = vsyncpa %s24, 0
    %26 = vsyncpa [#allocation8], 0
    %27 = vsyncpa [#allocation6], 0
    %s28 = scalar_lea.sflag [#allocation6], 1
    %29 = vsyncpa %s28, 0
    loop: start=0, step=1, limit=4
    $region2: #{tpu_custom_call.1} parent=1 // loop_pre_header
      _
    $region3: #{tpu_custom_call.1} parent=1 // loop_header
      %s31 = sphi 0, %s35
      %p32 = scmp.ge.s32.totalorder %s31, 4
      %s38 = sphi 0, %s50
      %s39 = sphi 0, %s46
      %s40 = sphi 0, %s38
      %s41 = sphi 0, %s39
      %s42 = sphi 0, %s40
      %s43 = sphi 0, %s41
      %s55 = sphi 0, %s57
      %s58 = sphi 0, %s55
      %s59 = sphi 0, %s58
      %s75 = sphi 0, %s59
      %s81 = sphi 0, %s83
      %s84 = sphi 0, %s81
      %s85 = sphi 0, %s84
      %s101 = sphi 0, %s85
      %s107 = sphi 0, %s109
      %s110 = sphi 0, %s107
      %s111 = sphi 0, %s110
      %s127 = sphi 0, %s111
      %s135 = sphi 0, %s137
      %s138 = sphi 0, %s135
      %s139 = sphi 0, %s138
      %s155 = sphi 0, %s139
      %s159 = sphi 0, %s159
      %s161 = sphi 0, %s159
      %s162 = sphi 0, %s161
      %s176 = sphi 0, %s162
      %s180 = sphi 0, %s180
      %s182 = sphi 0, %s180
      %s183 = sphi 0, %s182
      %s197 = sphi 0, %s183
      %s201 = sphi 0, %s201
      %s203 = sphi 0, %s201
      %s204 = sphi 0, %s203
      %s218 = sphi 0, %s204
      %s222 = sphi 0, %s222
      %s224 = sphi 0, %s222
      %s225 = sphi 0, %s224
      %s239 = sphi 0, %s225
      %s243 = sphi 0, %s243
      %s245 = sphi 0, %s243
      %s246 = sphi 0, %s245
      %s260 = sphi 0, %s246
      %s264 = sphi 0, %s264
      %s266 = sphi 0, %s264
      %s267 = sphi 0, %s266
      %s281 = sphi 0, %s267
      %s285 = sphi 0, %s285
      %s287 = sphi 0, %s285
      %s288 = sphi 0, %s287
      %s302 = sphi 0, %s288
      %s306 = sphi 0, %s306
      %s308 = sphi 0, %s306
      %s309 = sphi 0, %s308
      %s323 = sphi 0, %s309
      %s327 = sphi 0, %s327
      %s329 = sphi 0, %s327
      %s330 = sphi 0, %s329
      %s344 = sphi 0, %s330
      %s348 = sphi 0, %s348
      %s350 = sphi 0, %s348
      %s351 = sphi 0, %s350
      %s365 = sphi 0, %s351
      %s369 = sphi 0, %s369
      %s371 = sphi 0, %s369
      %s372 = sphi 0, %s371
      %s386 = sphi 0, %s372
      %s390 = sphi 0, %s390
      %s392 = sphi 0, %s390
      %s393 = sphi 0, %s392
      %s407 = sphi 0, %s393
      %s411 = sphi 0, %s411
      %s413 = sphi 0, %s411
      %s414 = sphi 0, %s413
      %s428 = sphi 0, %s414
      %s432 = sphi 0, %s432
      %s434 = sphi 0, %s432
      %s435 = sphi 0, %s434
      %s449 = sphi 0, %s435
      %s457 = sphi 0, %s459
      %s460 = sphi 0, %s457
      %s461 = sphi 0, %s460
      %s477 = sphi 0, %s461
    $region4: #{tpu_custom_call.1} parent=1 // loop_header_branch
      %34 = sbr.rel (%p32) target = $region8
    $region5: #{tpu_custom_call.1} parent=1 // loop_body
      %s36 = ssub.s32 %s31, 1
      %s37 = ssub.s32 %s31, 2
      %s44 = sadd.s32 1, %s39
      %p45 = scmp.ge.s32.totalorder %s44, 1
      %s46 = scalar_select %p45, 0, %s44
      %s47 = sadd.s32 1, %s38
      %s48 = scalar_select %p45, %s47, %s38
      %p49 = scmp.ge.s32.totalorder %s48, 2
      %s50 = scalar_select %p49, 0, %s48
      %s51 = ssub.s32 %s38, %s50
      %s52 = ssub.s32 %s39, %s46
      %s53 = sor.u32 %s51, %s52
      %p54 = scmp.eq.s32.totalorder %s53, 0
      %s56 = sadd.s32 %s55, 1
      %s57 = scalar_select %p54, %s55, %s56
      %p60 = pneg %p54
      %p61 = scmp.eq.s32.totalorder %s31, 1
      %p62 = por %p60, %p61
      %p63 = scmp.ne.s32.totalorder %s55, %s58
      %p64 = scmp.eq.s32.totalorder %s31, 0
      %p65 = por %p63, %p64
      %p66 = scmp.ne.s32.totalorder %s55, %s58
      %p67 = scmp.eq.s32.totalorder %s36, 1
      %p68 = por %p66, %p67
      %p69 = scmp.ne.s32.totalorder %s58, %s59
      %p70 = scmp.eq.s32.totalorder %s36, 0
      %p71 = por %p69, %p70
      %p72 = scmp.ne.s32.totalorder %s58, %s59
      %p73 = scmp.eq.s32.totalorder %s37, 1
      %p74 = por %p72, %p73
      %p76 = scmp.ne.s32.totalorder %s59, %s75
      %p77 = scmp.eq.s32.totalorder %s37, 0
      %p78 = por %p76, %p77
      %s79 = ssub.s32 %s38, %s50
      %p80 = scmp.eq.s32.totalorder %s79, 0
      %s82 = sadd.s32 %s81, 1
      %s83 = scalar_select %p80, %s81, %s82
      %p86 = pneg %p80
      %p87 = scmp.eq.s32.totalorder %s31, 1
      %p88 = por %p86, %p87
      %p89 = scmp.ne.s32.totalorder %s81, %s84
      %p90 = scmp.eq.s32.totalorder %s31, 0
      %p91 = por %p89, %p90
      %p92 = scmp.ne.s32.totalorder %s81, %s84
      %p93 = scmp.eq.s32.totalorder %s36, 1
      %p94 = por %p92, %p93
      %p95 = scmp.ne.s32.totalorder %s84, %s85
      %p96 = scmp.eq.s32.totalorder %s36, 0
      %p97 = por %p95, %p96
      %p98 = scmp.ne.s32.totalorder %s84, %s85
      %p99 = scmp.eq.s32.totalorder %s37, 1
      %p100 = por %p98, %p99
      %p102 = scmp.ne.s32.totalorder %s85, %s101
      %p103 = scmp.eq.s32.totalorder %s37, 0
      %p104 = por %p102, %p103
      %s105 = ssub.s32 %s38, %s50
      %p106 = scmp.eq.s32.totalorder %s105, 0
      %s108 = sadd.s32 %s107, 1
      %s109 = scalar_select %p106, %s107, %s108
      %p112 = pneg %p106
      %p113 = scmp.eq.s32.totalorder %s31, 1
      %p114 = por %p112, %p113
      %p115 = scmp.ne.s32.totalorder %s107, %s110
      %p116 = scmp.eq.s32.totalorder %s31, 0
      %p117 = por %p115, %p116
      %p118 = scmp.ne.s32.totalorder %s107, %s110
      %p119 = scmp.eq.s32.totalorder %s36, 1
      %p120 = por %p118, %p119
      %p121 = scmp.ne.s32.totalorder %s110, %s111
      %p122 = scmp.eq.s32.totalorder %s36, 0
      %p123 = por %p121, %p122
      %p124 = scmp.ne.s32.totalorder %s110, %s111
      %p125 = scmp.eq.s32.totalorder %s37, 1
      %p126 = por %p124, %p125
      %p128 = scmp.ne.s32.totalorder %s111, %s127
      %p129 = scmp.eq.s32.totalorder %s37, 0
      %p130 = por %p128, %p129
      %s131 = ssub.s32 %s38, %s50
      %s132 = ssub.s32 %s39, %s46
      %s133 = sor.u32 %s131, %s132
      %p134 = scmp.eq.s32.totalorder %s133, 0
      %s136 = sadd.s32 %s135, 1
      %s137 = scalar_select %p134, %s135, %s136
      %p140 = pneg %p134
      %p141 = scmp.eq.s32.totalorder %s31, 1
      %p142 = por %p140, %p141
      %p143 = scmp.ne.s32.totalorder %s135, %s138
      %p144 = scmp.eq.s32.totalorder %s31, 0
      %p145 = por %p143, %p144
      %p146 = scmp.ne.s32.totalorder %s135, %s138
      %p147 = scmp.eq.s32.totalorder %s36, 1
      %p148 = por %p146, %p147
      %p149 = scmp.ne.s32.totalorder %s138, %s139
      %p150 = scmp.eq.s32.totalorder %s36, 0
      %p151 = por %p149, %p150
      %p152 = scmp.ne.s32.totalorder %s138, %s139
      %p153 = scmp.eq.s32.totalorder %s37, 1
      %p154 = por %p152, %p153
      %p156 = scmp.ne.s32.totalorder %s139, %s155
      %p157 = scmp.eq.s32.totalorder %s37, 0
      %p158 = por %p156, %p157
      %s160 = sadd.s32 %s159, 1
      %p163 = scmp.eq.s32.totalorder %s31, 1
      %p164 = scmp.ne.s32.totalorder %s159, %s161
      %p165 = scmp.eq.s32.totalorder %s31, 0
      %p166 = por %p164, %p165
      %p167 = scmp.ne.s32.totalorder %s159, %s161
      %p168 = scmp.eq.s32.totalorder %s36, 1
      %p169 = por %p167, %p168
      %p170 = scmp.ne.s32.totalorder %s161, %s162
      %p171 = scmp.eq.s32.totalorder %s36, 0
      %p172 = por %p170, %p171
      %p173 = scmp.ne.s32.totalorder %s161, %s162
      %p174 = scmp.eq.s32.totalorder %s37, 1
      %p175 = por %p173, %p174
      %p177 = scmp.ne.s32.totalorder %s162, %s176
      %p178 = scmp.eq.s32.totalorder %s37, 0
      %p179 = por %p177, %p178
      %s181 = sadd.s32 %s180, 1
      %p184 = scmp.eq.s32.totalorder %s31, 1
      %p185 = scmp.ne.s32.totalorder %s180, %s182
      %p186 = scmp.eq.s32.totalorder %s31, 0
      %p187 = por %p185, %p186
      %p188 = scmp.ne.s32.totalorder %s180, %s182
      %p189 = scmp.eq.s32.totalorder %s36, 1
      %p190 = por %p188, %p189
      %p191 = scmp.ne.s32.totalorder %s182, %s183
      %p192 = scmp.eq.s32.totalorder %s36, 0
      %p193 = por %p191, %p192
      %p194 = scmp.ne.s32.totalorder %s182, %s183
      %p195 = scmp.eq.s32.totalorder %s37, 1
      %p196 = por %p194, %p195
      %p198 = scmp.ne.s32.totalorder %s183, %s197
      %p199 = scmp.eq.s32.totalorder %s37, 0
      %p200 = por %p198, %p199
      %s202 = sadd.s32 %s201, 1
      %p205 = scmp.eq.s32.totalorder %s31, 1
      %p206 = scmp.ne.s32.totalorder %s201, %s203
      %p207 = scmp.eq.s32.totalorder %s31, 0
      %p208 = por %p206, %p207
      %p209 = scmp.ne.s32.totalorder %s201, %s203
      %p210 = scmp.eq.s32.totalorder %s36, 1
      %p211 = por %p209, %p210
      %p212 = scmp.ne.s32.totalorder %s203, %s204
      %p213 = scmp.eq.s32.totalorder %s36, 0
      %p214 = por %p212, %p213
      %p215 = scmp.ne.s32.totalorder %s203, %s204
      %p216 = scmp.eq.s32.totalorder %s37, 1
      %p217 = por %p215, %p216
      %p219 = scmp.ne.s32.totalorder %s204, %s218
      %p220 = scmp.eq.s32.totalorder %s37, 0
      %p221 = por %p219, %p220
      %s223 = sadd.s32 %s222, 1
      %p226 = scmp.eq.s32.totalorder %s31, 1
      %p227 = scmp.ne.s32.totalorder %s222, %s224
      %p228 = scmp.eq.s32.totalorder %s31, 0
      %p229 = por %p227, %p228
      %p230 = scmp.ne.s32.totalorder %s222, %s224
      %p231 = scmp.eq.s32.totalorder %s36, 1
      %p232 = por %p230, %p231
      %p233 = scmp.ne.s32.totalorder %s224, %s225
      %p234 = scmp.eq.s32.totalorder %s36, 0
      %p235 = por %p233, %p234
      %p236 = scmp.ne.s32.totalorder %s224, %s225
      %p237 = scmp.eq.s32.totalorder %s37, 1
      %p238 = por %p236, %p237
      %p240 = scmp.ne.s32.totalorder %s225, %s239
      %p241 = scmp.eq.s32.totalorder %s37, 0
      %p242 = por %p240, %p241
      %s244 = sadd.s32 %s243, 1
      %p247 = scmp.eq.s32.totalorder %s31, 1
      %p248 = scmp.ne.s32.totalorder %s243, %s245
      %p249 = scmp.eq.s32.totalorder %s31, 0
      %p250 = por %p248, %p249
      %p251 = scmp.ne.s32.totalorder %s243, %s245
      %p252 = scmp.eq.s32.totalorder %s36, 1
      %p253 = por %p251, %p252
      %p254 = scmp.ne.s32.totalorder %s245, %s246
      %p255 = scmp.eq.s32.totalorder %s36, 0
      %p256 = por %p254, %p255
      %p257 = scmp.ne.s32.totalorder %s245, %s246
      %p258 = scmp.eq.s32.totalorder %s37, 1
      %p259 = por %p257, %p258
      %p261 = scmp.ne.s32.totalorder %s246, %s260
      %p262 = scmp.eq.s32.totalorder %s37, 0
      %p263 = por %p261, %p262
      %s265 = sadd.s32 %s264, 1
      %p268 = scmp.eq.s32.totalorder %s31, 1
      %p269 = scmp.ne.s32.totalorder %s264, %s266
      %p270 = scmp.eq.s32.totalorder %s31, 0
      %p271 = por %p269, %p270
      %p272 = scmp.ne.s32.totalorder %s264, %s266
      %p273 = scmp.eq.s32.totalorder %s36, 1
      %p274 = por %p272, %p273
      %p275 = scmp.ne.s32.totalorder %s266, %s267
      %p276 = scmp.eq.s32.totalorder %s36, 0
      %p277 = por %p275, %p276
      %p278 = scmp.ne.s32.totalorder %s266, %s267
      %p279 = scmp.eq.s32.totalorder %s37, 1
      %p280 = por %p278, %p279
      %p282 = scmp.ne.s32.totalorder %s267, %s281
      %p283 = scmp.eq.s32.totalorder %s37, 0
      %p284 = por %p282, %p283
      %s286 = sadd.s32 %s285, 1
      %p289 = scmp.eq.s32.totalorder %s31, 1
      %p290 = scmp.ne.s32.totalorder %s285, %s287
      %p291 = scmp.eq.s32.totalorder %s31, 0
      %p292 = por %p290, %p291
      %p293 = scmp.ne.s32.totalorder %s285, %s287
      %p294 = scmp.eq.s32.totalorder %s36, 1
      %p295 = por %p293, %p294
      %p296 = scmp.ne.s32.totalorder %s287, %s288
      %p297 = scmp.eq.s32.totalorder %s36, 0
      %p298 = por %p296, %p297
      %p299 = scmp.ne.s32.totalorder %s287, %s288
      %p300 = scmp.eq.s32.totalorder %s37, 1
      %p301 = por %p299, %p300
      %p303 = scmp.ne.s32.totalorder %s288, %s302
      %p304 = scmp.eq.s32.totalorder %s37, 0
      %p305 = por %p303, %p304
      %s307 = sadd.s32 %s306, 1
      %p310 = scmp.eq.s32.totalorder %s31, 1
      %p311 = scmp.ne.s32.totalorder %s306, %s308
      %p312 = scmp.eq.s32.totalorder %s31, 0
      %p313 = por %p311, %p312
      %p314 = scmp.ne.s32.totalorder %s306, %s308
      %p315 = scmp.eq.s32.totalorder %s36, 1
      %p316 = por %p314, %p315
      %p317 = scmp.ne.s32.totalorder %s308, %s309
      %p318 = scmp.eq.s32.totalorder %s36, 0
      %p319 = por %p317, %p318
      %p320 = scmp.ne.s32.totalorder %s308, %s309
      %p321 = scmp.eq.s32.totalorder %s37, 1
      %p322 = por %p320, %p321
      %p324 = scmp.ne.s32.totalorder %s309, %s323
      %p325 = scmp.eq.s32.totalorder %s37, 0
      %p326 = por %p324, %p325
      %s328 = sadd.s32 %s327, 1
      %p331 = scmp.eq.s32.totalorder %s31, 1
      %p332 = scmp.ne.s32.totalorder %s327, %s329
      %p333 = scmp.eq.s32.totalorder %s31, 0
      %p334 = por %p332, %p333
      %p335 = scmp.ne.s32.totalorder %s327, %s329
      %p336 = scmp.eq.s32.totalorder %s36, 1
      %p337 = por %p335, %p336
      %p338 = scmp.ne.s32.totalorder %s329, %s330
      %p339 = scmp.eq.s32.totalorder %s36, 0
      %p340 = por %p338, %p339
      %p341 = scmp.ne.s32.totalorder %s329, %s330
      %p342 = scmp.eq.s32.totalorder %s37, 1
      %p343 = por %p341, %p342
      %p345 = scmp.ne.s32.totalorder %s330, %s344
      %p346 = scmp.eq.s32.totalorder %s37, 0
      %p347 = por %p345, %p346
      %s349 = sadd.s32 %s348, 1
      %p352 = scmp.eq.s32.totalorder %s31, 1
      %p353 = scmp.ne.s32.totalorder %s348, %s350
      %p354 = scmp.eq.s32.totalorder %s31, 0
      %p355 = por %p353, %p354
      %p356 = scmp.ne.s32.totalorder %s348, %s350
      %p357 = scmp.eq.s32.totalorder %s36, 1
      %p358 = por %p356, %p357
      %p359 = scmp.ne.s32.totalorder %s350, %s351
      %p360 = scmp.eq.s32.totalorder %s36, 0
      %p361 = por %p359, %p360
      %p362 = scmp.ne.s32.totalorder %s350, %s351
      %p363 = scmp.eq.s32.totalorder %s37, 1
      %p364 = por %p362, %p363
      %p366 = scmp.ne.s32.totalorder %s351, %s365
      %p367 = scmp.eq.s32.totalorder %s37, 0
      %p368 = por %p366, %p367
      %s370 = sadd.s32 %s369, 1
      %p373 = scmp.eq.s32.totalorder %s31, 1
      %p374 = scmp.ne.s32.totalorder %s369, %s371
      %p375 = scmp.eq.s32.totalorder %s31, 0
      %p376 = por %p374, %p375
      %p377 = scmp.ne.s32.totalorder %s369, %s371
      %p378 = scmp.eq.s32.totalorder %s36, 1
      %p379 = por %p377, %p378
      %p380 = scmp.ne.s32.totalorder %s371, %s372
      %p381 = scmp.eq.s32.totalorder %s36, 0
      %p382 = por %p380, %p381
      %p383 = scmp.ne.s32.totalorder %s371, %s372
      %p384 = scmp.eq.s32.totalorder %s37, 1
      %p385 = por %p383, %p384
      %p387 = scmp.ne.s32.totalorder %s372, %s386
      %p388 = scmp.eq.s32.totalorder %s37, 0
      %p389 = por %p387, %p388
      %s391 = sadd.s32 %s390, 1
      %p394 = scmp.eq.s32.totalorder %s31, 1
      %p395 = scmp.ne.s32.totalorder %s390, %s392
      %p396 = scmp.eq.s32.totalorder %s31, 0
      %p397 = por %p395, %p396
      %p398 = scmp.ne.s32.totalorder %s390, %s392
      %p399 = scmp.eq.s32.totalorder %s36, 1
      %p400 = por %p398, %p399
      %p401 = scmp.ne.s32.totalorder %s392, %s393
      %p402 = scmp.eq.s32.totalorder %s36, 0
      %p403 = por %p401, %p402
      %p404 = scmp.ne.s32.totalorder %s392, %s393
      %p405 = scmp.eq.s32.totalorder %s37, 1
      %p406 = por %p404, %p405
      %p408 = scmp.ne.s32.totalorder %s393, %s407
      %p409 = scmp.eq.s32.totalorder %s37, 0
      %p410 = por %p408, %p409
      %s412 = sadd.s32 %s411, 1
      %p415 = scmp.eq.s32.totalorder %s31, 1
      %p416 = scmp.ne.s32.totalorder %s411, %s413
      %p417 = scmp.eq.s32.totalorder %s31, 0
      %p418 = por %p416, %p417
      %p419 = scmp.ne.s32.totalorder %s411, %s413
      %p420 = scmp.eq.s32.totalorder %s36, 1
      %p421 = por %p419, %p420
      %p422 = scmp.ne.s32.totalorder %s413, %s414
      %p423 = scmp.eq.s32.totalorder %s36, 0
      %p424 = por %p422, %p423
      %p425 = scmp.ne.s32.totalorder %s413, %s414
      %p426 = scmp.eq.s32.totalorder %s37, 1
      %p427 = por %p425, %p426
      %p429 = scmp.ne.s32.totalorder %s414, %s428
      %p430 = scmp.eq.s32.totalorder %s37, 0
      %p431 = por %p429, %p430
      %s433 = sadd.s32 %s432, 1
      %p436 = scmp.eq.s32.totalorder %s31, 1
      %p437 = scmp.ne.s32.totalorder %s432, %s434
      %p438 = scmp.eq.s32.totalorder %s31, 0
      %p439 = por %p437, %p438
      %p440 = scmp.ne.s32.totalorder %s432, %s434
      %p441 = scmp.eq.s32.totalorder %s36, 1
      %p442 = por %p440, %p441
      %p443 = scmp.ne.s32.totalorder %s434, %s435
      %p444 = scmp.eq.s32.totalorder %s36, 0
      %p445 = por %p443, %p444
      %p446 = scmp.ne.s32.totalorder %s434, %s435
      %p447 = scmp.eq.s32.totalorder %s37, 1
      %p448 = por %p446, %p447
      %p450 = scmp.ne.s32.totalorder %s435, %s449
      %p451 = scmp.eq.s32.totalorder %s37, 0
      %p452 = por %p450, %p451
      %s453 = ssub.s32 %s38, %s50
      %s454 = ssub.s32 %s39, %s46
      %s455 = sor.u32 %s453, %s454
      %p456 = scmp.eq.s32.totalorder %s455, 0
      %s458 = sadd.s32 %s457, 1
      %s459 = scalar_select %p456, %s457, %s458
      %p462 = pneg %p456
      %p463 = scmp.eq.s32.totalorder %s31, 1
      %p464 = por %p462, %p463
      %p465 = scmp.ne.s32.totalorder %s457, %s460
      %p466 = scmp.eq.s32.totalorder %s31, 0
      %p467 = por %p465, %p466
      %p468 = scmp.ne.s32.totalorder %s457, %s460
      %p469 = scmp.eq.s32.totalorder %s36, 1
      %p470 = por %p468, %p469
      %p471 = scmp.ne.s32.totalorder %s460, %s461
      %p472 = scmp.eq.s32.totalorder %s36, 0
      %p473 = por %p471, %p472
      %p474 = scmp.ne.s32.totalorder %s460, %s461
      %p475 = scmp.eq.s32.totalorder %s37, 1
      %p476 = por %p474, %p475
      %p478 = scmp.ne.s32.totalorder %s461, %s477
      %p479 = scmp.eq.s32.totalorder %s37, 0
      %p480 = por %p478, %p479
      %p481 = scmp.le.s32.totalorder 1, %s31
      %p482 = scmp.lt.s32.totalorder %s31, 3
      %p483 = pnand %p481, %p482
      %p484 = pneg %p483
      // Predicated region
      $region9: #{tpu_custom_call.1} parent=5 // pred_check
        _
      $region10: #{tpu_custom_call.1} parent=5 // pred_check_branch
        %486 = sbr.rel (%p483) target = $region12
      $region11: #{tpu_custom_call.1} parent=5 // pred_region
        %s487 = ssub.s32 %s31, 1
        // Predicated region
        $region13: #{tpu_custom_call.1} parent=11 // pred_check
          %p488 = pneg %p172
        $region14: #{tpu_custom_call.1} parent=11 // pred_check_branch
          %490 = sbr.rel (%p488) target = $region16
        $region15: #{tpu_custom_call.1} parent=11 // pred_region
          _
        $region16: #{tpu_custom_call.1} parent=11 // pred_fallthru
          _
        // Predicated region
        $region17: #{tpu_custom_call.1} parent=11 // pred_check
          %p491 = pneg %p193
        $region18: #{tpu_custom_call.1} parent=11 // pred_check_branch
          %493 = sbr.rel (%p491) target = $region20
        $region19: #{tpu_custom_call.1} parent=11 // pred_region
          _
        $region20: #{tpu_custom_call.1} parent=11 // pred_fallthru
          _
        // Predicated region
        $region21: #{tpu_custom_call.1} parent=11 // pred_check
          %p494 = pneg %p214
        $region22: #{tpu_custom_call.1} parent=11 // pred_check_branch
          %496 = sbr.rel (%p494) target = $region24
        $region23: #{tpu_custom_call.1} parent=11 // pred_region
          _
        $region24: #{tpu_custom_call.1} parent=11 // pred_fallthru
          _
        // Predicated region
        $region25: #{tpu_custom_call.1} parent=11 // pred_check
          %p497 = pneg %p235
        $region26: #{tpu_custom_call.1} parent=11 // pred_check_branch
          %499 = sbr.rel (%p497) target = $region28
        $region27: #{tpu_custom_call.1} parent=11 // pred_region
          _
        $region28: #{tpu_custom_call.1} parent=11 // pred_fallthru
          _
        // Predicated region
        $region29: #{tpu_custom_call.1} parent=11 // pred_check
          %p500 = pneg %p256
        $region30: #{tpu_custom_call.1} parent=11 // pred_check_branch
          %502 = sbr.rel (%p500) target = $region32
        $region31: #{tpu_custom_call.1} parent=11 // pred_region
          _
        $region32: #{tpu_custom_call.1} parent=11 // pred_fallthru
          _
        // Predicated region
        $region33: #{tpu_custom_call.1} parent=11 // pred_check
          %p503 = pneg %p277
        $region34: #{tpu_custom_call.1} parent=11 // pred_check_branch
          %505 = sbr.rel (%p503) target = $region36
        $region35: #{tpu_custom_call.1} parent=11 // pred_region
          _
        $region36: #{tpu_custom_call.1} parent=11 // pred_fallthru
          _
        // Predicated region
        $region37: #{tpu_custom_call.1} parent=11 // pred_check
          %p506 = pneg %p298
        $region38: #{tpu_custom_call.1} parent=11 // pred_check_branch
          %508 = sbr.rel (%p506) target = $region40
        $region39: #{tpu_custom_call.1} parent=11 // pred_region
          _
        $region40: #{tpu_custom_call.1} parent=11 // pred_fallthru
          _
        // Predicated region
        $region41: #{tpu_custom_call.1} parent=11 // pred_check
          %p509 = pneg %p319
        $region42: #{tpu_custom_call.1} parent=11 // pred_check_branch
          %511 = sbr.rel (%p509) target = $region44
        $region43: #{tpu_custom_call.1} parent=11 // pred_region
          _
        $region44: #{tpu_custom_call.1} parent=11 // pred_fallthru
          _
        // Predicated region
        $region45: #{tpu_custom_call.1} parent=11 // pred_check
          %p512 = pneg %p340
        $region46: #{tpu_custom_call.1} parent=11 // pred_check_branch
          %514 = sbr.rel (%p512) target = $region48
        $region47: #{tpu_custom_call.1} parent=11 // pred_region
          %516 = vsyncadd [#allocation8], 0
          %s517 = sshll.u32 %s12, 4
          %s518 = int_to_ptr.hbm [resolvable:$true] %s517
          %s519 = sshll.u32 [#allocation7], 4
          %s520 = int_to_ptr.vmem [resolvable:$true] %s519
          %525 = dma.hbm_to_vmem [thread:$0]  %s518, 256, %s520, [#allocation8], 64, 64, 4
        $region48: #{tpu_custom_call.1} parent=11 // pred_fallthru
          _
        // Predicated region
        $region49: #{tpu_custom_call.1} parent=11 // pred_check
          %p526 = pneg %p361
        $region50: #{tpu_custom_call.1} parent=11 // pred_check_branch
          %528 = sbr.rel (%p526) target = $region52
        $region51: #{tpu_custom_call.1} parent=11 // pred_region
          %530 = vsyncadd [#allocation8], 0
          %s532 = sshll.u32 %s13, 4
          %s533 = int_to_ptr.hbm [resolvable:$true] %s532
          %s534 = sshll.u32 [#allocation9], 4
          %s535 = int_to_ptr.vmem [resolvable:$true] %s534
          %537 = dma.hbm_to_vmem [thread:$0]  %s533, 16, %s535, [#allocation8]
        $region52: #{tpu_custom_call.1} parent=11 // pred_fallthru
          _
        // Predicated region
        $region53: #{tpu_custom_call.1} parent=11 // pred_check
          %p538 = pneg %p382
        $region54: #{tpu_custom_call.1} parent=11 // pred_check_branch
          %540 = sbr.rel (%p538) target = $region56
        $region55: #{tpu_custom_call.1} parent=11 // pred_region
          _
        $region56: #{tpu_custom_call.1} parent=11 // pred_fallthru
          _
        // Predicated region
        $region57: #{tpu_custom_call.1} parent=11 // pred_check
          %p541 = pneg %p403
        $region58: #{tpu_custom_call.1} parent=11 // pred_check_branch
          %543 = sbr.rel (%p541) target = $region60
        $region59: #{tpu_custom_call.1} parent=11 // pred_region
          _
        $region60: #{tpu_custom_call.1} parent=11 // pred_fallthru
          _
        // Predicated region
        $region61: #{tpu_custom_call.1} parent=11 // pred_check
          %p544 = pneg %p424
        $region62: #{tpu_custom_call.1} parent=11 // pred_check_branch
          %546 = sbr.rel (%p544) target = $region64
        $region63: #{tpu_custom_call.1} parent=11 // pred_region
          _
        $region64: #{tpu_custom_call.1} parent=11 // pred_fallthru
          _
        // Predicated region
        $region65: #{tpu_custom_call.1} parent=11 // pred_check
          %p547 = pneg %p445
        $region66: #{tpu_custom_call.1} parent=11 // pred_check_branch
          %549 = sbr.rel (%p547) target = $region68
        $region67: #{tpu_custom_call.1} parent=11 // pred_region
          _
        $region68: #{tpu_custom_call.1} parent=11 // pred_fallthru
          _
      $region12: #{tpu_custom_call.1} parent=5 // pred_fallthru
        _
      %p550 = scmp.lt.s32.totalorder %s31, 2
      // Predicated region
      $region69: #{tpu_custom_call.1} parent=5 // pred_check
        %p551 = pneg %p550
      $region70: #{tpu_custom_call.1} parent=5 // pred_check_branch
        %553 = sbr.rel (%p551) target = $region72
      $region71: #{tpu_custom_call.1} parent=5 // pred_region
        // Predicated region
        $region73: #{tpu_custom_call.1} parent=71 // pred_check
          %p554 = pneg %p65
        $region74: #{tpu_custom_call.1} parent=71 // pred_check_branch
          %556 = sbr.rel (%p554) target = $region76
        $region75: #{tpu_custom_call.1} parent=71 // pred_region
          %p557 = scmp.lt.s32.totalorder %s38, 1
          %s558 = scalar_select %p557, %s38, 1
          %p559 = scmp.lt.s32.totalorder %s39, 0
          %s560 = scalar_select %p559, %s39, 0
          %s561 = sadd.s32 %s560, %s558
          %s562 = smul.addr %s561, 4
          %s563 = scalar_lea.vmem %s0, %s562
        $region76: #{tpu_custom_call.1} parent=71 // pred_fallthru
          _
        // Predicated region
        $region77: #{tpu_custom_call.1} parent=71 // pred_check
          %p564 = pneg %p91
        $region78: #{tpu_custom_call.1} parent=71 // pred_check_branch
          %566 = sbr.rel (%p564) target = $region80
        $region79: #{tpu_custom_call.1} parent=71 // pred_region
          %s567 = sand.u32 %s81, 1
          %s568 = scalar_lea.sflag [#allocation5], %s567
          %s569 = sand.u32 %s81, 1
          %s570 = smul.addr %s569, 4
          %s571 = scalar_lea.vmem [#allocation4], %s570
          %573 = vsyncadd %s568, 0
          %s574 = smul.addr %s38, 4
          %s575 = scalar_lea.hbm %s1, %s574
          %s577 = sshll.u32 %s575, 4
          %s578 = int_to_ptr.hbm [resolvable:$true] %s577
          %s579 = sshll.u32 %s571, 4
          %s580 = int_to_ptr.vmem [resolvable:$true] %s579
          %582 = dma.hbm_to_vmem [thread:$0]  %s578, 64, %s580, %s568
        $region80: #{tpu_custom_call.1} parent=71 // pred_fallthru
          _
        // Predicated region
        $region81: #{tpu_custom_call.1} parent=71 // pred_check
          %p583 = pneg %p117
        $region82: #{tpu_custom_call.1} parent=71 // pred_check_branch
          %585 = sbr.rel (%p583) target = $region84
        $region83: #{tpu_custom_call.1} parent=71 // pred_region
          %p586 = scmp.lt.s32.totalorder %s38, 1
          %s587 = scalar_select %p586, %s38, 1
          %s588 = scalar_lea.vmem %s2, %s587
        $region84: #{tpu_custom_call.1} parent=71 // pred_fallthru
          _
        // Predicated region
        $region85: #{tpu_custom_call.1} parent=71 // pred_check
          %p589 = pneg %p145
        $region86: #{tpu_custom_call.1} parent=71 // pred_check_branch
          %591 = sbr.rel (%p589) target = $region88
        $region87: #{tpu_custom_call.1} parent=71 // pred_region
          %p592 = scmp.lt.s32.totalorder %s38, 1
          %s593 = scalar_select %p592, %s38, 1
          %p594 = scmp.lt.s32.totalorder %s39, 0
          %s595 = scalar_select %p594, %s39, 0
          %s596 = sadd.s32 %s595, %s593
          %s597 = smul.addr %s596, 8
          %s598 = scalar_lea.vmem %s3, %s597
        $region88: #{tpu_custom_call.1} parent=71 // pred_fallthru
          _
      $region72: #{tpu_custom_call.1} parent=5 // pred_fallthru
        _
      %p599 = scmp.le.s32.totalorder 1, %s31
      %p600 = scmp.lt.s32.totalorder %s31, 3
      %p601 = pnand %p599, %p600
      %p602 = pneg %p601
      // Predicated region
      $region89: #{tpu_custom_call.1} parent=5 // pred_check
        _
      $region90: #{tpu_custom_call.1} parent=5 // pred_check_branch
        %604 = sbr.rel (%p601) target = $region92
      $region91: #{tpu_custom_call.1} parent=5 // pred_region
        %s605 = ssub.s32 %s31, 1
        %s606 = sand.u32 %s84, 1
        %s607 = scalar_lea.sflag [#allocation5], %s606
        %s608 = sand.u32 %s84, 1
        %s609 = smul.addr %s608, 4
        %s610 = scalar_lea.vmem [#allocation4], %s609
        // Predicated region
        $region93: #{tpu_custom_call.1} parent=91 // pred_check
          %p611 = pneg %p97
        $region94: #{tpu_custom_call.1} parent=91 // pred_check_branch
          %613 = sbr.rel (%p611) target = $region96
        $region95: #{tpu_custom_call.1} parent=91 // pred_region
          %615 = dma.done %s607, 64
        $region96: #{tpu_custom_call.1} parent=91 // pred_fallthru
          _
        // Predicated region
        $region97: #{tpu_custom_call.1} parent=91 // pred_check
          %p616 = pneg %p340
        $region98: #{tpu_custom_call.1} parent=91 // pred_check_branch
          %618 = sbr.rel (%p616) target = $region100
        $region99: #{tpu_custom_call.1} parent=91 // pred_region
          %620 = dma.done [#allocation8], 256
        $region100: #{tpu_custom_call.1} parent=91 // pred_fallthru
          _
        // Predicated region
        $region101: #{tpu_custom_call.1} parent=91 // pred_check
          %p621 = pneg %p361
        $region102: #{tpu_custom_call.1} parent=91 // pred_check_branch
          %623 = sbr.rel (%p621) target = $region104
        $region103: #{tpu_custom_call.1} parent=91 // pred_region
          %625 = dma.done [#allocation8], 16
        $region104: #{tpu_custom_call.1} parent=91 // pred_fallthru
          _
        %p626 = scmp.lt.s32.totalorder %s40, 1
        %s627 = scalar_select %p626, %s40, 1
        %p628 = scmp.lt.s32.totalorder %s41, 0
        %s629 = scalar_select %p628, %s41, 0
        %s630 = sadd.s32 %s629, %s627
        %s631 = smul.addr %s630, 4
        %s632 = scalar_lea.vmem %s0, %s631
        %p633 = pneg %p71
        %p634 = pneg %p68
        %s635 = sand.u32 %s84, 1
        %s636 = scalar_lea.sflag [#allocation5], %s635
        %s637 = sand.u32 %s84, 1
        %s638 = smul.addr %s637, 4
        %s639 = scalar_lea.vmem [#allocation4], %s638
        %p640 = pneg %p97
        %p641 = pneg %p94
        %p642 = scmp.lt.s32.totalorder %s40, 1
        %s643 = scalar_select %p642, %s40, 1
        %s644 = scalar_lea.vmem %s2, %s643
        %p645 = pneg %p123
        %p646 = pneg %p120
        %p647 = scmp.lt.s32.totalorder %s40, 1
        %s648 = scalar_select %p647, %s40, 1
        %p649 = scmp.lt.s32.totalorder %s41, 0
        %s650 = scalar_select %p649, %s41, 0
        %s651 = sadd.s32 %s650, %s648
        %s652 = smul.addr %s651, 8
        %s653 = scalar_lea.vmem %s3, %s652
        %p654 = pneg %p151
        %p655 = pneg %p148
        %p656 = pneg %p172
        %p657 = pneg %p169
        %p658 = pneg %p193
        %p659 = pneg %p190
        %p660 = pneg %p214
        %p661 = pneg %p211
        %p662 = pneg %p235
        %p663 = pneg %p232
        %p664 = pneg %p256
        %p665 = pneg %p253
        %p666 = pneg %p277
        %p667 = pneg %p274
        %p668 = pneg %p298
        %p669 = pneg %p295
        %p670 = pneg %p319
        %p671 = pneg %p316
        %p672 = pneg %p340
        %p673 = pneg %p337
        %p674 = pneg %p361
        %p675 = pneg %p358
        %p676 = pneg %p382
        %p677 = pneg %p379
        %p678 = pneg %p403
        %p679 = pneg %p400
        %p680 = pneg %p424
        %p681 = pneg %p421
        %p682 = pneg %p445
        %p683 = pneg %p442
        %p684 = pneg %p473
        %p685 = pneg %p470
        %s686 = sand.u32 %s460, 1
        %s687 = scalar_lea.sflag [#allocation6], %s686
        %s688 = sand.u32 %s460, 1
        %s689 = smul.addr %s688, 8
        %s690 = scalar_lea.vmem [#allocation10], %s689
        %p691 = scmp.lt.s32.totalorder %s40, 1
        %s692 = scalar_select %p691, %s40, 1
        %p693 = scmp.lt.s32.totalorder %s41, 0
        %s694 = scalar_select %p693, %s41, 0
        %s695 = sadd.s32 %s694, %s692
        %s696 = smul.addr %s695, 4
        %s697 = scalar_lea.vmem %s0, %s696
        %p698 = scmp.lt.s32.totalorder %s40, 1
        %s699 = scalar_select %p698, %s40, 1
        %s700 = scalar_lea.vmem %s2, %s699
        %p701 = scmp.lt.s32.totalorder %s40, 1
        %s702 = scalar_select %p701, %s40, 1
        %p703 = scmp.lt.s32.totalorder %s41, 0
        %s704 = scalar_select %p703, %s41, 0
        %s705 = sadd.s32 %s704, %s702
        %s706 = smul.addr %s705, 8
        %s707 = scalar_lea.vmem %s3, %s706
        %p709 = scmp.eq.s32.totalorder %s41, 0
        // Predicated region
        $region105: #{tpu_custom_call.1} parent=91 // pred_check
          %p710 = pneg %p709
        $region106: #{tpu_custom_call.1} parent=91 // pred_check_branch
          %712 = sbr.rel (%p710) target = $region108
        $region107: #{tpu_custom_call.1} parent=91 // pred_region
          %v713 = vld [vmem:[%s610] sm:$0xf]
          %v714 = vld [vmem:[%s6] sm:$0xf]
          %v715 = vld [vmem:[%s6 + $0x4] sm:$0xf]
          %v716 = vld [vmem:[%s6 + $0x8] sm:$0xf]
          %v717 = vld [vmem:[%s6 + $0xc] sm:$0xf]
          %v718 = vld [vmem:[%s7] sm:$0x1]
          %v720 = vperm.slane %v718, 0
          %v726 = vunpack.c.l.b16 %v714
          %v727 = vunpack.c.l.b16 %v715
          %v728 = vunpack.c.l.b16 %v716
          %v729 = vunpack.c.l.b16 %v717
          %v730 = vpack.c.b16 %v727, %v726
          %v731 = vpack.c.b16 %v729, %v728
          %vm734 = vcmask 261120
          %v736 = vsel %vm734, %v713, 0
          %738 = vmatpush.bf16.msra.mxu0 0
          %739 = vmatpush.bf16.msra.mxu0 0
          %740 = vmatpush.bf16.msra.mxu0 0
          %741 = vmatpush.bf16.msra.mxu0 0
          %742 = vmatpush.bf16.msra.mxu0 0
          %743 = vmatpush.bf16.msra.mxu0 0
          %744 = vmatpush.bf16.msra.mxu0 %v731
          %745 = vmatpush.bf16.msra.mxu0 %v730
          %746 = vmatmul.bf16.gmra.mxu0 %v736
          %v747 = vpop.f32.mrf.mxu0
          %v748 = vadd.f32 %v720, %v747
          %v749 = vpop.f32.mrf.mxu0
          %750 = vdwg.mxu0
          %v751 = vpack.c.bf16 %v748, %v748
          %vm752 = vcmask 519168
          %753 = vst.msk [vmem:[#allocation2] sm:$0xf] %vm752, %v751
        $region108: #{tpu_custom_call.1} parent=91 // pred_fallthru
          _
        %v754 = vld [vmem:[%s697] sm:$0xf]
        %v755 = vld [vmem:[%s4] sm:$0xf]
        %v756 = vld [vmem:[%s4 + $0x4] sm:$0xf]
        %v757 = vld [vmem:[%s4 + $0x8] sm:$0xf]
        %v758 = vld [vmem:[%s4 + $0xc] sm:$0xf]
        %v759 = vld [vmem:[%s5] sm:$0x1]
        %v761 = vperm.slane %v759, 0
        %v767 = vunpack.c.l.b16 %v755
        %v768 = vunpack.c.l.b16 %v756
        %v769 = vunpack.c.l.b16 %v757
        %v770 = vunpack.c.l.b16 %v758
        %v771 = vpack.c.b16 %v768, %v767
        %v772 = vpack.c.b16 %v770, %v769
        %vm775 = vcmask 261120
        %v777 = vsel %vm775, %v754, 0
        %779 = vmatpush.bf16.msra.mxu0 0
        %780 = vmatpush.bf16.msra.mxu0 0
        %781 = vmatpush.bf16.msra.mxu0 0
        %782 = vmatpush.bf16.msra.mxu0 0
        %783 = vmatpush.bf16.msra.mxu0 0
        %784 = vmatpush.bf16.msra.mxu0 0
        %785 = vmatpush.bf16.msra.mxu0 %v772
        %786 = vmatpush.bf16.msra.mxu0 %v771
        %787 = vmatmul.bf16.gmra.mxu0 %v777
        %v788 = vpop.f32.mrf.mxu0
        %v789 = vadd.f32 %v761, %v788
        %v790 = vpop.f32.mrf.mxu0
        %791 = vdwg.mxu0
        %v792 = vmul.f32 %v789, 0.35355338
        %v793 = vpack.c.bf16 %v792, %v792
        %v794 = vld [vmem:[%s700] sm:$0x1]
        %vm795 = vcmp.gt.f32.partialorder %v794, 0.0
        %v796 = vsel %vm795, -1e+09, 0.0
        %v797 = vld [vmem:[#allocation2] sm:$0xf]
        %v799 = vperm.slane %v796, 0
        %vm801 = vcmask 64512
        %v803 = vsel %vm801, %v793, 0
        %v806 = vsel %vm801, %v797, 0
        %808 = vmatpush.bf16.xpose.msra.mxu0 0
        %809 = vmatpush.bf16.xpose.msra.mxu0 0
        %810 = vmatpush.bf16.xpose.msra.mxu0 0
        %811 = vmatpush.bf16.xpose.msra.mxu0 0
        %812 = vmatpush.bf16.xpose.msra.mxu0 0
        %813 = vmatpush.bf16.xpose.msra.mxu0 0
        %814 = vmatpush.bf16.xpose.msra.mxu0 0
        %815 = vmatpush.bf16.xpose.msra.mxu0 %v806
        %816 = vmatmul.bf16.gmra.mxu0 %v803
        %v817 = vpop.f32.mrf.mxu0
        %v818 = vadd.f32 %v799, %v817
        %v819 = vpop.f32.mrf.mxu0
        %820 = vdwg.mxu0
        %v821 = vsel %vm801, %v818, -inf
        %822 = vmax.xlane.f32.xlu0 %v821
        %v823 = vpop.xlane.xlu0 %822
        %v824 = vsub.f32 %v818, %v823
        %v825 = vmul.f32 %v824, 1.442695
        %v826 = vpow.pop %v825
        %v827 = vsel %vm801, %v826, 0.0
        %828 = vadd.xlane.f32.xlu0 %v827
        %v829 = vpop.xlane.xlu0 %828
        %v830 = vrcp.pop %v829
        %v831 = vmul.f32 %v826, %v830
        %v832 = vpack.c.bf16 %v831, %v831
        %v834 = vunpack.c.l.b16 %v797
        %v835 = vpack.c.b16 %v834, %v834
        %836 = vrot.lane.b32.xlu0 %v835, 96
        %v837 = vpop.permute.xlu0 %836
        %v839 = vsel %vm801, %v832, 0
        %vm841 = vcmask 1043456
        %v843 = vsel %vm841, %v837, 0
        %845 = vmatpush.bf16.msra.mxu0 0
        %846 = vmatpush.bf16.msra.mxu0 0
        %847 = vmatpush.bf16.msra.mxu0 0
        %848 = vmatpush.bf16.msra.mxu0 0
        %849 = vmatpush.bf16.msra.mxu0 0
        %850 = vmatpush.bf16.msra.mxu0 0
        %851 = vmatpush.bf16.msra.mxu0 0
        %852 = vmatpush.bf16.msra.mxu0 %v843
        %853 = vmatmul.bf16.gmra.mxu0 %v839
        %v854 = vpop.f32.mrf.mxu0
        %v855 = vadd.f32 0.0, %v854
        %v856 = vpop.f32.mrf.mxu0
        %857 = vdwg.mxu0
        %858 = vst.msk [vmem:[#allocation3] sm:$0xff] %vm801, %v855
        %v859 = vld [vmem:[#allocation2] sm:$0xf]
        %v861 = vunpack.c.l.b16 %v793
        %v862 = vpack.c.b16 %v861, %v861
        %863 = vrot.lane.b32.xlu0 %v862, 120
        %v864 = vpop.permute.xlu0 %863
        %v866 = vunpack.c.l.b16 %v859
        %v867 = vpack.c.b16 %v866, %v866
        %868 = vrot.lane.b32.xlu0 %v867, 120
        %v869 = vpop.permute.xlu0 %868
        %v871 = vsel %vm801, %v864, 0
        %v874 = vsel %vm801, %v869, 0
        %876 = vmatpush.bf16.xpose.msra.mxu0 0
        %877 = vmatpush.bf16.xpose.msra.mxu0 0
        %878 = vmatpush.bf16.xpose.msra.mxu0 0
        %879 = vmatpush.bf16.xpose.msra.mxu0 0
        %880 = vmatpush.bf16.xpose.msra.mxu0 0
        %881 = vmatpush.bf16.xpose.msra.mxu0 0
        %882 = vmatpush.bf16.xpose.msra.mxu0 0
        %883 = vmatpush.bf16.xpose.msra.mxu0 %v874
        %884 = vmatmul.bf16.gmra.mxu0 %v871
        %v885 = vpop.f32.mrf.mxu0
        %v886 = vadd.f32 %v799, %v885
        %v887 = vpop.f32.mrf.mxu0
        %888 = vdwg.mxu0
        %v889 = vsel %vm801, %v886, -inf
        %890 = vmax.xlane.f32.xlu0 %v889
        %v891 = vpop.xlane.xlu0 %890
        %v892 = vsub.f32 %v886, %v891
        %v893 = vmul.f32 %v892, 1.442695
        %v894 = vpow.pop %v893
        %v895 = vsel %vm801, %v894, 0.0
        %896 = vadd.xlane.f32.xlu0 %v895
        %v897 = vpop.xlane.xlu0 %896
        %v898 = vrcp.pop %v897
        %v899 = vmul.f32 %v894, %v898
        %v900 = vpack.c.bf16 %v899, %v899
        %901 = vrot.lane.b32.xlu0 %v867, 88
        %v902 = vpop.permute.xlu0 %901
        %v904 = vsel %vm801, %v900, 0
        %v907 = vsel %vm841, %v902, 0
        %909 = vmatpush.bf16.msra.mxu0 0
        %910 = vmatpush.bf16.msra.mxu0 0
        %911 = vmatpush.bf16.msra.mxu0 0
        %912 = vmatpush.bf16.msra.mxu0 0
        %913 = vmatpush.bf16.msra.mxu0 0
        %914 = vmatpush.bf16.msra.mxu0 0
        %915 = vmatpush.bf16.msra.mxu0 0
        %916 = vmatpush.bf16.msra.mxu0 %v907
        %917 = vmatmul.bf16.gmra.mxu0 %v904
        %v918 = vpop.f32.mrf.mxu0
        %v919 = vadd.f32 0.0, %v918
        %v920 = vpop.f32.mrf.mxu0
        %921 = vdwg.mxu0
        %923 = vrot.lane.b32.xlu0 %v919, 8
        %v924 = vpop.permute.xlu0 %923
        %vm926 = vcmask 130112
        %927 = vst.msk [vmem:[#allocation3] sm:$0xff] %vm926, %v924
        %v928 = vld [vmem:[#allocation2] sm:$0xf]
        %929 = vrot.lane.b32.xlu0 %v862, 112
        %v930 = vpop.permute.xlu0 %929
        %v932 = vunpack.c.l.b16 %v928
        %v933 = vpack.c.b16 %v932, %v932
        %934 = vrot.lane.b32.xlu0 %v933, 112
        %v935 = vpop.permute.xlu0 %934
        %v937 = vsel %vm801, %v930, 0
        %v940 = vsel %vm801, %v935, 0
        %942 = vmatpush.bf16.xpose.msra.mxu0 0
        %943 = vmatpush.bf16.xpose.msra.mxu0 0
        %944 = vmatpush.bf16.xpose.msra.mxu0 0
        %945 = vmatpush.bf16.xpose.msra.mxu0 0
        %946 = vmatpush.bf16.xpose.msra.mxu0 0
        %947 = vmatpush.bf16.xpose.msra.mxu0 0
        %948 = vmatpush.bf16.xpose.msra.mxu0 0
        %949 = vmatpush.bf16.xpose.msra.mxu0 %v940
        %950 = vmatmul.bf16.gmra.mxu0 %v937
        %v951 = vpop.f32.mrf.mxu0
        %v952 = vadd.f32 %v799, %v951
        %v953 = vpop.f32.mrf.mxu0
        %954 = vdwg.mxu0
        %v955 = vsel %vm801, %v952, -inf
        %956 = vmax.xlane.f32.xlu0 %v955
        %v957 = vpop.xlane.xlu0 %956
        %v958 = vsub.f32 %v952, %v957
        %v959 = vmul.f32 %v958, 1.442695
        %v960 = vpow.pop %v959
        %v961 = vsel %vm801, %v960, 0.0
        %962 = vadd.xlane.f32.xlu0 %v961
        %v963 = vpop.xlane.xlu0 %962
        %v964 = vrcp.pop %v963
        %v965 = vmul.f32 %v960, %v964
        %v966 = vpack.c.bf16 %v965, %v965
        %967 = vrot.lane.b32.xlu0 %v933, 80
        %v968 = vpop.permute.xlu0 %967
        %v970 = vsel %vm801, %v966, 0
        %v973 = vsel %vm841, %v968, 0
        %975 = vmatpush.bf16.msra.mxu0 0
        %976 = vmatpush.bf16.msra.mxu0 0
        %977 = vmatpush.bf16.msra.mxu0 0
        %978 = vmatpush.bf16.msra.mxu0 0
        %979 = vmatpush.bf16.msra.mxu0 0
        %980 = vmatpush.bf16.msra.mxu0 0
        %981 = vmatpush.bf16.msra.mxu0 0
        %982 = vmatpush.bf16.msra.mxu0 %v973
        %983 = vmatmul.bf16.gmra.mxu0 %v970
        %v984 = vpop.f32.mrf.mxu0
        %v985 = vadd.f32 0.0, %v984
        %v986 = vpop.f32.mrf.mxu0
        %987 = vdwg.mxu0
        %989 = vrot.lane.b32.xlu0 %v985, 16
        %v990 = vpop.permute.xlu0 %989
        %vm992 = vcmask 195712
        %993 = vst.msk [vmem:[#allocation3] sm:$0xff] %vm992, %v990
        %v994 = vld [vmem:[#allocation2] sm:$0xf]
        %995 = vrot.lane.b32.xlu0 %v862, 104
        %v996 = vpop.permute.xlu0 %995
        %v998 = vunpack.c.l.b16 %v994
        %v999 = vpack.c.b16 %v998, %v998
        %1000 = vrot.lane.b32.xlu0 %v999, 104
        %v1001 = vpop.permute.xlu0 %1000
        %v1003 = vsel %vm801, %v996, 0
        %v1006 = vsel %vm801, %v1001, 0
        %1008 = vmatpush.bf16.xpose.msra.mxu0 0
        %1009 = vmatpush.bf16.xpose.msra.mxu0 0
        %1010 = vmatpush.bf16.xpose.msra.mxu0 0
        %1011 = vmatpush.bf16.xpose.msra.mxu0 0
        %1012 = vmatpush.bf16.xpose.msra.mxu0 0
        %1013 = vmatpush.bf16.xpose.msra.mxu0 0
        %1014 = vmatpush.bf16.xpose.msra.mxu0 0
        %1015 = vmatpush.bf16.xpose.msra.mxu0 %v1006
        %1016 = vmatmul.bf16.gmra.mxu0 %v1003
        %v1017 = vpop.f32.mrf.mxu0
        %v1018 = vadd.f32 %v799, %v1017
        %v1019 = vpop.f32.mrf.mxu0
        %1020 = vdwg.mxu0
        %v1021 = vsel %vm801, %v1018, -inf
        %1022 = vmax.xlane.f32.xlu0 %v1021
        %v1023 = vpop.xlane.xlu0 %1022
        %v1024 = vsub.f32 %v1018, %v1023
        %v1025 = vmul.f32 %v1024, 1.442695
        %v1026 = vpow.pop %v1025
        %v1027 = vsel %vm801, %v1026, 0.0
        %1028 = vadd.xlane.f32.xlu0 %v1027
        %v1029 = vpop.xlane.xlu0 %1028
        %v1030 = vrcp.pop %v1029
        %v1031 = vmul.f32 %v1026, %v1030
        %v1032 = vpack.c.bf16 %v1031, %v1031
        %1033 = vrot.lane.b32.xlu0 %v999, 72
        %v1034 = vpop.permute.xlu0 %1033
        %v1036 = vsel %vm801, %v1032, 0
        %v1039 = vsel %vm841, %v1034, 0
        %1041 = vmatpush.bf16.msra.mxu0 0
        %1042 = vmatpush.bf16.msra.mxu0 0
        %1043 = vmatpush.bf16.msra.mxu0 0
        %1044 = vmatpush.bf16.msra.mxu0 0
        %1045 = vmatpush.bf16.msra.mxu0 0
        %1046 = vmatpush.bf16.msra.mxu0 0
        %1047 = vmatpush.bf16.msra.mxu0 0
        %1048 = vmatpush.bf16.msra.mxu0 %v1039
        %1049 = vmatmul.bf16.gmra.mxu0 %v1036
        %v1050 = vpop.f32.mrf.mxu0
        %v1051 = vadd.f32 0.0, %v1050
        %v1052 = vpop.f32.mrf.mxu0
        %1053 = vdwg.mxu0
        %1055 = vrot.lane.b32.xlu0 %v1051, 24
        %v1056 = vpop.permute.xlu0 %1055
        %vm1058 = vcmask 261312
        %1059 = vst.msk [vmem:[#allocation3] sm:$0xff] %vm1058, %v1056
        %v1060 = vld [vmem:[#allocation3] sm:$0xff]
        %v1061 = vpack.c.bf16 %v1060, %v1060
        %v1062 = vld [vmem:[%s8] sm:$0xf]
        %v1063 = vld [vmem:[%s8 + $0x4] sm:$0xf]
        %v1064 = vld [vmem:[%s8 + $0x8] sm:$0xf]
        %v1065 = vld [vmem:[%s8 + $0xc] sm:$0xf]
        %v1066 = vld [vmem:[%s9] sm:$0x1]
        %v1068 = vperm.slane %v1066, 0
        %v1074 = vunpack.c.l.b16 %v1062
        %v1075 = vunpack.c.l.b16 %v1063
        %v1076 = vunpack.c.l.b16 %v1064
        %v1077 = vunpack.c.l.b16 %v1065
        %v1078 = vpack.c.b16 %v1075, %v1074
        %v1079 = vpack.c.b16 %v1077, %v1076
        %v1083 = vsel %vm775, %v1061, 0
        %1085 = vmatpush.bf16.msra.mxu0 0
        %1086 = vmatpush.bf16.msra.mxu0 0
        %1087 = vmatpush.bf16.msra.mxu0 0
        %1088 = vmatpush.bf16.msra.mxu0 0
        %1089 = vmatpush.bf16.msra.mxu0 0
        %1090 = vmatpush.bf16.msra.mxu0 0
        %1091 = vmatpush.bf16.msra.mxu0 %v1079
        %1092 = vmatpush.bf16.msra.mxu0 %v1078
        %1093 = vmatmul.bf16.gmra.mxu0 %v1083
        %v1094 = vpop.f32.mrf.mxu0
        %v1095 = vadd.f32 %v1068, %v1094
        %v1096 = vpop.f32.mrf.mxu0
        %1097 = vdwg.mxu0
        %v1098 = vunpack.c.l.bf16 %v754
        %v1099 = vadd.f32 %v1095, %v1098
        %v1100 = vsel %vm775, %v1099, 0.0
        %1101 = vadd.xlane.f32.xlu0 %v1100
        %v1102 = vpop.xlane.xlu0 %1101
        %v1103 = vrcp.pop 32.0
        %v1104 = vmul.f32 32.0, %v1103
        %v1105 = vsub.f32 1.0, %v1104
        %v1106 = vmul.f32 %v1103, %v1105
        %v1107 = vadd.f32 %v1103, %v1106
        %vm1108 = vweird.f32 %v1103
        %v1109 = vsel %vm1108, %v1103, %v1107
        %v1110 = vmul.f32 %v1102, %v1109
        %v1111 = vsub.f32 %v1099, %v1110
        %v1112 = vmul.f32 %v1111, %v1111
        %v1113 = vsel %vm775, %v1112, 0.0
        %1114 = vadd.xlane.f32.xlu0 %v1113
        %v1115 = vpop.xlane.xlu0 %1114
        %v1116 = vmul.f32 %v1115, %v1109
        %v1117 = vadd.f32 %v1116, 1e-05
        %v1118 = vrsqrt.pop %v1117
        %v1119 = vmul.f32 %v1118, %v1117
        %v1120 = vmul.f32 %v1119, %v1118
        %v1121 = vmul.f32 0.5, %v1120
        %v1122 = vsub.f32 1.5, %v1121
        %v1123 = vmul.f32 %v1118, %v1122
        %vm1124 = vweird.f32 %v1117
        %vm1125 = vweird.f32 %v1118
        %vm1126 = vmor %vm1124, %vm1125
        %v1127 = vsel %vm1126, %v1118, %v1123
        %v1128 = vmul.f32 %v1111, %v1127
        %v1129 = vld [vmem:[%s10] sm:$0x1]
        %v1131 = vperm.slane %v1129, 0
        %v1133 = vmul.f32 %v1128, %v1131
        %v1134 = vld [vmem:[%s11] sm:$0x1]
        %v1136 = vperm.slane %v1134, 0
        %v1138 = vadd.f32 %v1133, %v1136
        %v1139 = vld [vmem:[%s707] sm:$0xff]
        %1141 = vset.pattern.permute.xlu0 0
        %1142 = vperm.xlu0 %1141, %v1139
        %v1143 = vpop.permute.xlu0 %1142
        %v1145 = vmul.f32 %v1138, %v1143
        %v1146 = vpack.c.bf16 %v1145, %v1145
        %v1147 = vld [vmem:[#allocation7] sm:$0xf]
        %v1148 = vld [vmem:[#allocation7 + $0x4] sm:$0xf]
        %v1149 = vld [vmem:[#allocation7 + $0x8] sm:$0xf]
        %v1150 = vld [vmem:[#allocation7 + $0xc] sm:$0xf]
        %v1151 = vld [vmem:[#allocation9] sm:$0x1]
        %v1153 = vperm.slane %v1151, 0
        %v1159 = vunpack.c.l.b16 %v1147
        %v1160 = vunpack.c.l.b16 %v1148
        %v1161 = vunpack.c.l.b16 %v1149
        %v1162 = vunpack.c.l.b16 %v1150
        %v1163 = vpack.c.b16 %v1160, %v1159
        %v1164 = vpack.c.b16 %v1162, %v1161
        %v1168 = vsel %vm775, %v1146, 0
        %1170 = vmatpush.bf16.msra.mxu0 0
        %1171 = vmatpush.bf16.msra.mxu0 0
        %1172 = vmatpush.bf16.msra.mxu0 0
        %1173 = vmatpush.bf16.msra.mxu0 0
        %1174 = vmatpush.bf16.msra.mxu0 0
        %1175 = vmatpush.bf16.msra.mxu0 0
        %1176 = vmatpush.bf16.msra.mxu0 %v1164
        %1177 = vmatpush.bf16.msra.mxu0 %v1163
        %1178 = vmatmul.bf16.gmra.mxu0 %v1168
        %v1179 = vpop.f32.mrf.mxu0
        %v1180 = vadd.f32 %v1153, %v1179
        %v1181 = vpop.f32.mrf.mxu0
        %1182 = vdwg.mxu0
        %v1183 = vmax.f32 %v1180, 0.0
        %v1184 = vpack.c.bf16 %v1183, %v1183
        %v1185 = vld [vmem:[%s14] sm:$0xf]
        %v1186 = vld [vmem:[%s14 + $0x4] sm:$0xf]
        %v1187 = vld [vmem:[%s14 + $0x8] sm:$0xf]
        %v1188 = vld [vmem:[%s14 + $0xc] sm:$0xf]
        %v1189 = vld [vmem:[%s14 + $0x10] sm:$0xf]
        %v1190 = vld [vmem:[%s14 + $0x14] sm:$0xf]
        %v1191 = vld [vmem:[%s14 + $0x18] sm:$0xf]
        %v1192 = vld [vmem:[%s14 + $0x1c] sm:$0xf]
        %v1193 = vld [vmem:[%s15] sm:$0x1]
        %v1195 = vperm.slane %v1193, 0
        %v1205 = vunpack.c.l.b16 %v1185
        %v1206 = vunpack.c.l.b16 %v1186
        %v1207 = vunpack.c.l.b16 %v1187
        %v1208 = vunpack.c.l.b16 %v1188
        %v1209 = vunpack.c.l.b16 %v1189
        %v1210 = vunpack.c.l.b16 %v1190
        %v1211 = vunpack.c.l.b16 %v1191
        %v1212 = vunpack.c.l.b16 %v1192
        %v1213 = vpack.c.b16 %v1206, %v1205
        %v1214 = vpack.c.b16 %v1208, %v1207
        %v1215 = vpack.c.b16 %v1210, %v1209
        %v1216 = vpack.c.b16 %v1212, %v1211
        %vm1221 = vcmask 523264
        %v1223 = vsel %vm1221, %v1184, 0
        %1225 = vmatpush.bf16.msra.mxu0 0
        %1226 = vmatpush.bf16.msra.mxu0 0
        %1227 = vmatpush.bf16.msra.mxu0 0
        %1228 = vmatpush.bf16.msra.mxu0 0
        %1229 = vmatpush.bf16.msra.mxu0 %v1216
        %1230 = vmatpush.bf16.msra.mxu0 %v1215
        %1231 = vmatpush.bf16.msra.mxu0 %v1214
        %1232 = vmatpush.bf16.msra.mxu0 %v1213
        %1233 = vmatmul.bf16.gmra.mxu0 %v1223
        %v1234 = vpop.f32.mrf.mxu0
        %v1235 = vadd.f32 %v1195, %v1234
        %v1236 = vpop.f32.mrf.mxu0
        %1237 = vdwg.mxu0
        %v1238 = vadd.f32 %v1235, %v1145
        %v1239 = vsel %vm775, %v1238, 0.0
        %1240 = vadd.xlane.f32.xlu0 %v1239
        %v1241 = vpop.xlane.xlu0 %1240
        %v1242 = vmul.f32 %v1241, %v1109
        %v1243 = vsub.f32 %v1238, %v1242
        %v1244 = vmul.f32 %v1243, %v1243
        %v1245 = vsel %vm775, %v1244, 0.0
        %1246 = vadd.xlane.f32.xlu0 %v1245
        %v1247 = vpop.xlane.xlu0 %1246
        %v1248 = vmul.f32 %v1247, %v1109
        %v1249 = vadd.f32 %v1248, 1e-05
        %v1250 = vrsqrt.pop %v1249
        %v1251 = vmul.f32 %v1250, %v1249
        %v1252 = vmul.f32 %v1251, %v1250
        %v1253 = vmul.f32 0.5, %v1252
        %v1254 = vsub.f32 1.5, %v1253
        %v1255 = vmul.f32 %v1250, %v1254
        %vm1256 = vweird.f32 %v1249
        %vm1257 = vweird.f32 %v1250
        %vm1258 = vmor %vm1256, %vm1257
        %v1259 = vsel %vm1258, %v1250, %v1255
        %v1260 = vmul.f32 %v1243, %v1259
        %v1261 = vld [vmem:[%s16] sm:$0x1]
        %v1263 = vperm.slane %v1261, 0
        %v1265 = vmul.f32 %v1260, %v1263
        %v1266 = vld [vmem:[%s17] sm:$0x1]
        %v1268 = vperm.slane %v1266, 0
        %v1270 = vadd.f32 %v1265, %v1268
        %v1271 = vmul.f32 %v1270, %v1143
        %1272 = vst.msk [vmem:[%s690] sm:$0xff] %vm775, %v1271
        %s1273 = sand.u32 %s460, 1
        %s1274 = scalar_lea.sflag [#allocation6], %s1273
        %s1275 = sand.u32 %s460, 1
        %s1276 = smul.addr %s1275, 8
        %s1277 = scalar_lea.vmem [#allocation10], %s1276
        // Predicated region
        $region109: #{tpu_custom_call.1} parent=91 // pred_check
          %p1278 = pneg %p470
        $region110: #{tpu_custom_call.1} parent=91 // pred_check_branch
          %1280 = sbr.rel (%p1278) target = $region112
        $region111: #{tpu_custom_call.1} parent=91 // pred_region
          %1282 = vsyncadd %s1274, 0
          %s1283 = sadd.s32 %s41, %s40
          %s1284 = smul.addr %s1283, 8
          %s1285 = scalar_lea.hbm %s18, %s1284
          %s1287 = sshll.u32 %s1277, 4
          %s1288 = int_to_ptr.vmem [resolvable:$true] %s1287
          %s1289 = sshll.u32 %s1285, 4
          %s1290 = int_to_ptr.hbm [resolvable:$true] %s1289
          %1292 = dma.vmem_to_hbm [thread:$0]  %s1288, 128, %s1290, %s1274
        $region112: #{tpu_custom_call.1} parent=91 // pred_fallthru
          _
      $region92: #{tpu_custom_call.1} parent=5 // pred_fallthru
        _
      %p1293 = scmp.le.s32.totalorder 2, %s31
      // Predicated region
      $region113: #{tpu_custom_call.1} parent=5 // pred_check
        %p1294 = pneg %p1293
      $region114: #{tpu_custom_call.1} parent=5 // pred_check_branch
        %1296 = sbr.rel (%p1294) target = $region116
      $region115: #{tpu_custom_call.1} parent=5 // pred_region
        %s1297 = ssub.s32 %s31, 2
        // Predicated region
        $region117: #{tpu_custom_call.1} parent=115 // pred_check
          %p1298 = pneg %p476
        $region118: #{tpu_custom_call.1} parent=115 // pred_check_branch
          %1300 = sbr.rel (%p1298) target = $region120
        $region119: #{tpu_custom_call.1} parent=115 // pred_region
          %s1301 = sand.u32 %s461, 1
          %s1302 = scalar_lea.sflag [#allocation6], %s1301
          %s1303 = sand.u32 %s461, 1
          %s1304 = smul.addr %s1303, 8
          %s1305 = scalar_lea.vmem [#allocation10], %s1304
          %1307 = dma.done %s1302, 128
        $region120: #{tpu_custom_call.1} parent=115 // pred_fallthru
          _
      $region116: #{tpu_custom_call.1} parent=5 // pred_fallthru
        _
    $region6: #{tpu_custom_call.1} parent=1 // loop_footer
      %s35 = sadd.s32 1, %s31
    $region7: #{tpu_custom_call.1} parent=1 // loop_footer_branch
      %30 = sbr.rel target = $region3
    $region8: #{tpu_custom_call.1} parent=1 // loop_exit
      _
    %1308 = vsyncpa [#allocation5], 1
    %s1309 = scalar_lea.sflag [#allocation5], 1
    %1310 = vsyncpa %s1309, 1
    %1311 = vsyncpa [#allocation8], 1
    %1312 = vsyncpa [#allocation6], 1
    %s1313 = scalar_lea.sflag [#allocation6], 1
    %1314 = vsyncpa %s1313, 1

</llo_original>
